<compile_context>
chip_gen: v6e
topology: v6e:2x2x1
jax: 0.10.0
libtpu: 0.0.40
codegen_flags: <defaults>
</compile_context>

<pallas_src>
import math
import functools

import jax
import jax.numpy as jnp
from jax.experimental import pallas as pl
from jax.experimental.pallas import tpu as pltpu

# ----------------------------- configuration --------------------------------
B, S, D = 2, 8, 32          # batch, seq, d_model (small, consistent w/ module)
N_HEAD, D_K, D_V = 4, 8, 8  # n_head * d_k == d_model
D_INNER = 64                # FFN hidden size
N_LAYERS = 2
EPS = 1e-6                  # LayerNorm eps used by the upstream repo
PACK_W = 128                # lane width of the packed weight slab
ROWS_PER_LAYER = 3 * D + D_INNER   # wqkv(32) + wo(32) + w1(32) + w2(64) = 160


# ------------------------------ kernel helpers --------------------------------
def _layer_norm(x, gamma, beta, eps=EPS):
    # Single-pass stats: mean and mean-of-squares are independent lane
    # reductions (dual-issue on the XLU) instead of mean -> centered variance.
    mu = jnp.mean(x, axis=-1, keepdims=True)
    ms = jnp.mean(x * x, axis=-1, keepdims=True)
    var = jnp.maximum(ms - mu * mu, 0.0)
    return (x - mu) * jax.lax.rsqrt(var + eps) * gamma + beta


def _encoder_layer(h, wqkv, wo, g1, b1, w1, w2, g2, b2, act,
                   batch, seq, n_head, d_k, d_v):
    """One post-norm encoder layer on a flattened (batch*seq, d_model) activation."""
    bs, d_model = h.shape

    # ---- fused QKV projection: one (bs, D) @ (D, 3D) MXU issue.
    # The 1/sqrt(d_k) attention scale is pre-folded into the Q columns.
    qkv = jnp.dot(h, wqkv, preferred_element_type=jnp.float32)      # (bs, 3D)

    # ---- stack heads into the leading batch axis: (H*B, S, d).
    # Per-head lane slices are concatenated along rows (each piece is bs=16
    # rows = 2 aligned sublane tiles) and then reshaped by a pure leading-dim
    # split: row = h*bs + b*seq + s  ->  (g=h*B+b, s, d).  No lane<->sublane
    # relayout is required.
    def heads(col0, dh):
        stacked = jnp.concatenate(
            [qkv[:, col0 + i * dh: col0 + (i + 1) * dh] for i in range(n_head)],
            axis=0)                                                  # (H*bs, dh)
        return stacked.reshape(n_head * batch, seq, dh)              # (H*B, S, dh)

    qg = heads(0, d_k)
    kg = heads(d_model, d_k)
    vg = heads(2 * d_model, d_v)

    # ---- ONE score einsum / softmax chain / context einsum for all heads.
    s = jnp.einsum('gqd,gkd->gqk', qg, kg,
                   preferred_element_type=jnp.float32)               # (H*B,S,S)
    s = s - jnp.max(s, axis=-1, keepdims=True)
    p = jnp.exp(s)
    # Exact normalization: pl.reciprocal(approx=True) compounded to 3.7e-3
    # error through two layers; the exact divide is free at this size.
    p = p / jnp.sum(p, axis=-1, keepdims=True)
    ctx = jnp.einsum('gqk,gkd->gqd', p, vg,
                     preferred_element_type=jnp.float32)             # (H*B,S,dv)

    # ---- output projection: each head's context through its d_v-row slice of
    # W_o, accumulated (avoids a lane re-pack that is not a pure reshape).
    ctx2 = ctx.reshape(n_head * bs, d_v)                             # (H*bs, dv)
    attn = jnp.zeros((bs, d_model), jnp.float32)
    for hh in range(n_head):
        attn = attn + jnp.dot(ctx2[hh * bs:(hh + 1) * bs, :],
                              wo[hh * d_v:(hh + 1) * d_v, :],
                              preferred_element_type=jnp.float32)    # (bs, D)

    y = _layer_norm(attn + h, g1, b1)                                # residual + LN

    # ---- position-wise feed-forward.
    h1 = act(jnp.dot(y, w1, preferred_element_type=jnp.float32))     # (bs, d_inner)
    f = jnp.dot(h1, w2, preferred_element_type=jnp.float32)          # (bs, D)
    return _layer_norm(f + y, g2, b2)                                # residual + LN


def encoder_kernel(x_ref, w_ref, ln_ref, o_ref, *,
                   batch, seq, n_head, d_k, d_v, d_model, d_inner, acts):
    """Both encoder layers fused; single invocation, whole problem in VMEM."""
    h = x_ref[...].astype(jnp.float32)                               # (B*S, D)
    ln = ln_ref[...].astype(jnp.float32)                             # (8, D)
    for li, act in enumerate(acts):
        r0 = li * (3 * d_model + d_inner)
        # Static, tile-aligned row slices into the packed weight slab.
        wqkv = w_ref[r0              : r0 + d_model,              0:3 * d_model]
        wo   = w_ref[r0 + d_model    : r0 + 2 * d_model,          0:d_model]
        w1   = w_ref[r0 + 2 * d_model: r0 + 3 * d_model,          0:d_inner]
        w2   = w_ref[r0 + 3 * d_model: r0 + 3 * d_model + d_inner, 0:d_model]
        lr = 4 * li
        g1, b1 = ln[lr + 0:lr + 1, :], ln[lr + 1:lr + 2, :]
        g2, b2 = ln[lr + 2:lr + 3, :], ln[lr + 3:lr + 4, :]
        h = _encoder_layer(h, wqkv, wo, g1, b1, w1, w2, g2, b2, act,
                           batch, seq, n_head, d_k, d_v)
    o_ref[...] = h.astype(o_ref.dtype)


# ------------------------------ wrapper --------------------------------------
def encoder_pallas(x, w_slab, ln_slab):
    """w_slab: (2*ROWS_PER_LAYER, 128) packed weights; ln_slab: (8, D) LN params."""
    b, s, d = x.shape
    x2 = x.reshape(b * s, d)                 # one block, 16 rows per matmul
    acts = tuple([jax.nn.relu] * (N_LAYERS - 1) + [jnp.tanh])
    kern = functools.partial(encoder_kernel, batch=b, seq=s,
                             n_head=N_HEAD, d_k=D_K, d_v=D_V,
                             d_model=d, d_inner=D_INNER, acts=acts)
    vmem = pl.BlockSpec(memory_space=pltpu.MemorySpace.VMEM)
    out2 = pl.pallas_call(
        kern,
        out_shape=jax.ShapeDtypeStruct((b * s, d), x.dtype),
        in_specs=[vmem, vmem, vmem],
        out_specs=vmem,
        # No grid: single invocation; whole working set (<200 KiB) is VMEM
        # resident.  TODO(synk): for a large effective batch on v7x, add a
        # leading "parallel" grid axis over batch to engage the second TC.
    )(x2, w_slab, ln_slab)
    return out2.reshape(b, s, d)


# ------------------------- deterministic parameter init ----------------------
def init_params(key):
    """Raw, module-faithful parameters (one 10-tuple per layer)."""
    layers = []
    for i in range(N_LAYERS):
        ks = jax.random.split(jax.random.fold_in(key, i), 6)
        wq = jax.random.normal(ks[0], (D, N_HEAD * D_K), jnp.float32) / math.sqrt(D)
        wk = jax.random.normal(ks[1], (D, N_HEAD * D_K), jnp.float32) / math.sqrt(D)
        wv = jax.random.normal(ks[2], (D, N_HEAD * D_V), jnp.float32) / math.sqrt(D)
        wo = jax.random.normal(ks[3], (N_HEAD * D_V, D), jnp.float32) / math.sqrt(N_HEAD * D_V)
        w1 = jax.random.normal(ks[4], (D, D_INNER), jnp.float32) / math.sqrt(D)
        w2 = jax.random.normal(ks[5], (D_INNER, D), jnp.float32) / math.sqrt(D_INNER)
        g1 = jnp.ones((1, D), jnp.float32)
        b1 = jnp.zeros((1, D), jnp.float32)
        g2 = jnp.ones((1, D), jnp.float32)
        b2 = jnp.zeros((1, D), jnp.float32)
        layers.append((wq, wk, wv, wo, g1, b1, w1, w2, g2, b2))
    return layers


def pack_params(layer_params):
    """Fuse Q/K/V (with the 1/sqrt(d_k) scale folded into Q), then pack all
    matmul weights of both layers into one (rows, 128) slab and all LayerNorm
    gamma/beta rows into one (4*n_layers, D) slab."""
    w_rows, ln_rows = [], []
    for (wq, wk, wv, wo, g1, b1, w1, w2, g2, b2) in layer_params:
        wqkv = jnp.concatenate([wq / math.sqrt(D_K), wk, wv], axis=1)   # (D, 3D)
        for w in (wqkv, wo, w1, w2):
            w_rows.append(jnp.pad(w, ((0, 0), (0, PACK_W - w.shape[1]))))
        ln_rows.extend([g1, b1, g2, b2])
    w_slab = jnp.concatenate(w_rows, axis=0).astype(jnp.float32)    # (320, 128)
    ln_slab = jnp.concatenate(ln_rows, axis=0).astype(jnp.float32)  # (8, D)
    return w_slab, ln_slab


# ----------------------------- pure-JAX reference ----------------------------
def encoder_ref(x, layer_params):
    out = x
    for i, (wq, wk, wv, wo, g1, b1, w1, w2, g2, b2) in enumerate(layer_params):
        act = jnp.tanh if i == len(layer_params) - 1 else jax.nn.relu
        q = out @ wq
        k = out @ wk
        v = out @ wv
        qh = q.reshape(B, S, N_HEAD, D_K)
        kh = k.reshape(B, S, N_HEAD, D_K)
        vh = v.reshape(B, S, N_HEAD, D_V)
        s = jnp.einsum('bqhd,bkhd->bhqk', qh, kh) / math.sqrt(D_K)
        p = jax.nn.softmax(s, axis=-1)
        a = jnp.einsum('bhqk,bkhd->bqhd', p, vh).reshape(B, S, N_HEAD * D_V)
        a = a @ wo
        y = _layer_norm(a + out, g1[0], b1[0])
        f = act(y @ w1) @ w2
        out = _layer_norm(f + y, g2[0], b2[0])
    return out


# ---------------------------------- main --------------------------------------
if __name__ == "__main__":
    key = jax.random.PRNGKey(0)
    x = jax.random.normal(jax.random.fold_in(key, 123), (B, S, D), jnp.float32)
    layer_params = init_params(key)
    w_slab, ln_slab = pack_params(layer_params)

    out = encoder_pallas(x, w_slab, ln_slab)
    out = jax.block_until_ready(out)

    ref = encoder_ref(x, layer_params)
    assert out.shape == (B, S, D), out.shape
    assert bool(jnp.all(jnp.isfinite(out)))
    # Exact softmax normalization in the kernel -> only reassociation-level
    # differences vs. the reference (~1e-5); 2e-3 gives ample margin.
    max_err = float(jnp.max(jnp.abs(out - ref)))
    assert bool(jnp.allclose(out, ref, rtol=2e-3, atol=2e-3)), max_err

    print("KERNEL_OK")
</pallas_src>

<mosaic_0001>
module attributes {stable_mosaic.version = 11 : i64} {
  func.func @encoder_kernel(%arg0: memref<16x32xf32, #tpu.memory_space<vmem>>, %arg1: memref<320x128xf32, #tpu.memory_space<vmem>>, %arg2: memref<8x32xf32, #tpu.memory_space<vmem>>, %arg3: memref<16x32xf32, #tpu.memory_space<vmem>>) attributes {dimension_semantics = [], scalar_prefetch = 0 : i64, scratch_operands = 0 : i64, tpu.core_type = #tpu.core_type<tc>} {
    %c0 = arith.constant 0 : index
    %c0_0 = arith.constant 0 : index
    %0 = vector.load %arg0[%c0, %c0_0] : memref<16x32xf32, #tpu.memory_space<vmem>>, vector<16x32xf32>
    %c0_1 = arith.constant 0 : index
    %c0_2 = arith.constant 0 : index
    %1 = vector.load %arg2[%c0_1, %c0_2] : memref<8x32xf32, #tpu.memory_space<vmem>>, vector<8x32xf32>
    %c0_3 = arith.constant 0 : index
    %c0_4 = arith.constant 0 : index
    %2 = vector.load %arg1[%c0_3, %c0_4] : memref<320x128xf32, #tpu.memory_space<vmem>>, vector<32x96xf32>
    %c32 = arith.constant 32 : index
    %c0_5 = arith.constant 0 : index
    %3 = vector.load %arg1[%c32, %c0_5] : memref<320x128xf32, #tpu.memory_space<vmem>>, vector<32x32xf32>
    %c64 = arith.constant 64 : index
    %c0_6 = arith.constant 0 : index
    %4 = vector.load %arg1[%c64, %c0_6] : memref<320x128xf32, #tpu.memory_space<vmem>>, vector<32x64xf32>
    %c96 = arith.constant 96 : index
    %c0_7 = arith.constant 0 : index
    %5 = vector.load %arg1[%c96, %c0_7] : memref<320x128xf32, #tpu.memory_space<vmem>>, vector<64x32xf32>
    %6 = vector.extract_strided_slice %1 {offsets = [0, 0], sizes = [1, 32], strides = [1, 1]} : vector<8x32xf32> to vector<1x32xf32>
    %7 = vector.extract_strided_slice %1 {offsets = [1, 0], sizes = [1, 32], strides = [1, 1]} : vector<8x32xf32> to vector<1x32xf32>
    %8 = vector.extract_strided_slice %1 {offsets = [2, 0], sizes = [1, 32], strides = [1, 1]} : vector<8x32xf32> to vector<1x32xf32>
    %9 = vector.extract_strided_slice %1 {offsets = [3, 0], sizes = [1, 32], strides = [1, 1]} : vector<8x32xf32> to vector<1x32xf32>
    %cst = arith.constant dense<0.000000e+00> : vector<16x96xf32>
    %10 = tpu.matmul %0, %2, %cst {dimension_numbers = #tpu.dot_dimension_numbers<[1], [0], [0], [1], [0, 0, 1, 1], [], []>} : vector<16x32xf32>, vector<32x96xf32>, vector<16x96xf32> -> vector<16x96xf32>
    %11 = vector.extract_strided_slice %10 {offsets = [0, 0], sizes = [16, 8], strides = [1, 1]} : vector<16x96xf32> to vector<16x8xf32>
    %12 = vector.extract_strided_slice %10 {offsets = [0, 8], sizes = [16, 8], strides = [1, 1]} : vector<16x96xf32> to vector<16x8xf32>
    %13 = vector.extract_strided_slice %10 {offsets = [0, 16], sizes = [16, 8], strides = [1, 1]} : vector<16x96xf32> to vector<16x8xf32>
    %14 = vector.extract_strided_slice %10 {offsets = [0, 24], sizes = [16, 8], strides = [1, 1]} : vector<16x96xf32> to vector<16x8xf32>
    %15 = tpu.concatenate %11, %12, %13, %14 in 0 : vector<16x8xf32>, vector<16x8xf32>, vector<16x8xf32>, vector<16x8xf32> -> vector<64x8xf32>
    %16 = vector.shape_cast %15 : vector<64x8xf32> to vector<8x8x8xf32>
    %17 = vector.extract_strided_slice %10 {offsets = [0, 32], sizes = [16, 8], strides = [1, 1]} : vector<16x96xf32> to vector<16x8xf32>
    %18 = vector.extract_strided_slice %10 {offsets = [0, 40], sizes = [16, 8], strides = [1, 1]} : vector<16x96xf32> to vector<16x8xf32>
    %19 = vector.extract_strided_slice %10 {offsets = [0, 48], sizes = [16, 8], strides = [1, 1]} : vector<16x96xf32> to vector<16x8xf32>
    %20 = vector.extract_strided_slice %10 {offsets = [0, 56], sizes = [16, 8], strides = [1, 1]} : vector<16x96xf32> to vector<16x8xf32>
    %21 = tpu.concatenate %17, %18, %19, %20 in 0 : vector<16x8xf32>, vector<16x8xf32>, vector<16x8xf32>, vector<16x8xf32> -> vector<64x8xf32>
    %22 = vector.shape_cast %21 : vector<64x8xf32> to vector<8x8x8xf32>
    %23 = vector.extract_strided_slice %10 {offsets = [0, 64], sizes = [16, 8], strides = [1, 1]} : vector<16x96xf32> to vector<16x8xf32>
    %24 = vector.extract_strided_slice %10 {offsets = [0, 72], sizes = [16, 8], strides = [1, 1]} : vector<16x96xf32> to vector<16x8xf32>
    %25 = vector.extract_strided_slice %10 {offsets = [0, 80], sizes = [16, 8], strides = [1, 1]} : vector<16x96xf32> to vector<16x8xf32>
    %26 = vector.extract_strided_slice %10 {offsets = [0, 88], sizes = [16, 8], strides = [1, 1]} : vector<16x96xf32> to vector<16x8xf32>
    %27 = tpu.concatenate %23, %24, %25, %26 in 0 : vector<16x8xf32>, vector<16x8xf32>, vector<16x8xf32>, vector<16x8xf32> -> vector<64x8xf32>
    %28 = vector.shape_cast %27 : vector<64x8xf32> to vector<8x8x8xf32>
    "tpu.trace_start"() <{level = 10 : i32, message = "gqd,gkd->gqk"}> : () -> ()
    %cst_8 = arith.constant dense<0.000000e+00> : vector<8x8x8xf32>
    %29 = tpu.matmul %16, %22, %cst_8 {dimension_numbers = #tpu.dot_dimension_numbers<[2], [2], [1], [1], [0, 0, 0, 1, 1, 1], [0], [0]>} : vector<8x8x8xf32>, vector<8x8x8xf32>, vector<8x8x8xf32> -> vector<8x8x8xf32>
    "tpu.trace_stop"() : () -> ()
    %cst_9 = arith.constant dense<0xFF800000> : vector<8x8xf32>
    %30 = vector.multi_reduction <maximumf>, %29, %cst_9 [2] : vector<8x8x8xf32> to vector<8x8xf32>
    %31 = vector.shape_cast %30 : vector<8x8xf32> to vector<8x8x1xf32>
    %32 = vector.broadcast %31 : vector<8x8x1xf32> to vector<8x8x8xf32>
    %33 = arith.subf %29, %32 : vector<8x8x8xf32>
    %34 = math.exp %33 : vector<8x8x8xf32>
    %cst_10 = arith.constant dense<0.000000e+00> : vector<8x8xf32>
    %35 = vector.multi_reduction <add>, %34, %cst_10 [2] : vector<8x8x8xf32> to vector<8x8xf32>
    %36 = vector.shape_cast %35 : vector<8x8xf32> to vector<8x8x1xf32>
    %37 = vector.broadcast %36 : vector<8x8x1xf32> to vector<8x8x8xf32>
    %38 = arith.divf %34, %37 : vector<8x8x8xf32>
    "tpu.trace_start"() <{level = 10 : i32, message = "gqk,gkd->gqd"}> : () -> ()
    %cst_11 = arith.constant dense<0.000000e+00> : vector<8x8x8xf32>
    %39 = tpu.matmul %38, %28, %cst_11 {dimension_numbers = #tpu.dot_dimension_numbers<[2], [1], [1], [2], [0, 0, 0, 1, 1, 2], [0], [0]>} : vector<8x8x8xf32>, vector<8x8x8xf32>, vector<8x8x8xf32> -> vector<8x8x8xf32>
    "tpu.trace_stop"() : () -> ()
    %40 = vector.shape_cast %39 : vector<8x8x8xf32> to vector<64x8xf32>
    %cst_12 = arith.constant 0.000000e+00 : f32
    %41 = vector.broadcast %cst_12 : f32 to vector<16x32xf32>
    %42 = vector.extract_strided_slice %40 {offsets = [0, 0], sizes = [16, 8], strides = [1, 1]} : vector<64x8xf32> to vector<16x8xf32>
    %43 = vector.extract_strided_slice %3 {offsets = [0, 0], sizes = [8, 32], strides = [1, 1]} : vector<32x32xf32> to vector<8x32xf32>
    %cst_13 = arith.constant dense<0.000000e+00> : vector<16x32xf32>
    %44 = tpu.matmul %42, %43, %cst_13 {dimension_numbers = #tpu.dot_dimension_numbers<[1], [0], [0], [1], [0, 0, 1, 1], [], []>} : vector<16x8xf32>, vector<8x32xf32>, vector<16x32xf32> -> vector<16x32xf32>
    %45 = arith.addf %41, %44 : vector<16x32xf32>
    %46 = vector.extract_strided_slice %40 {offsets = [16, 0], sizes = [16, 8], strides = [1, 1]} : vector<64x8xf32> to vector<16x8xf32>
    %47 = vector.extract_strided_slice %3 {offsets = [8, 0], sizes = [8, 32], strides = [1, 1]} : vector<32x32xf32> to vector<8x32xf32>
    %cst_14 = arith.constant dense<0.000000e+00> : vector<16x32xf32>
    %48 = tpu.matmul %46, %47, %cst_14 {dimension_numbers = #tpu.dot_dimension_numbers<[1], [0], [0], [1], [0, 0, 1, 1], [], []>} : vector<16x8xf32>, vector<8x32xf32>, vector<16x32xf32> -> vector<16x32xf32>
    %49 = arith.addf %45, %48 : vector<16x32xf32>
    %50 = vector.extract_strided_slice %40 {offsets = [32, 0], sizes = [16, 8], strides = [1, 1]} : vector<64x8xf32> to vector<16x8xf32>
    %51 = vector.extract_strided_slice %3 {offsets = [16, 0], sizes = [8, 32], strides = [1, 1]} : vector<32x32xf32> to vector<8x32xf32>
    %cst_15 = arith.constant dense<0.000000e+00> : vector<16x32xf32>
    %52 = tpu.matmul %50, %51, %cst_15 {dimension_numbers = #tpu.dot_dimension_numbers<[1], [0], [0], [1], [0, 0, 1, 1], [], []>} : vector<16x8xf32>, vector<8x32xf32>, vector<16x32xf32> -> vector<16x32xf32>
    %53 = arith.addf %49, %52 : vector<16x32xf32>
    %54 = vector.extract_strided_slice %40 {offsets = [48, 0], sizes = [16, 8], strides = [1, 1]} : vector<64x8xf32> to vector<16x8xf32>
    %55 = vector.extract_strided_slice %3 {offsets = [24, 0], sizes = [8, 32], strides = [1, 1]} : vector<32x32xf32> to vector<8x32xf32>
    %cst_16 = arith.constant dense<0.000000e+00> : vector<16x32xf32>
    %56 = tpu.matmul %54, %55, %cst_16 {dimension_numbers = #tpu.dot_dimension_numbers<[1], [0], [0], [1], [0, 0, 1, 1], [], []>} : vector<16x8xf32>, vector<8x32xf32>, vector<16x32xf32> -> vector<16x32xf32>
    %57 = arith.addf %53, %56 : vector<16x32xf32>
    %58 = arith.addf %57, %0 : vector<16x32xf32>
    %cst_17 = arith.constant dense<0.000000e+00> : vector<16xf32>
    %59 = vector.multi_reduction <add>, %58, %cst_17 [1] : vector<16x32xf32> to vector<16xf32>
    %60 = vector.shape_cast %59 : vector<16xf32> to vector<16x1xf32>
    %cst_18 = arith.constant 3.200000e+01 : f32
    %61 = vector.broadcast %cst_18 : f32 to vector<16x1xf32>
    %62 = arith.divf %60, %61 : vector<16x1xf32>
    %63 = arith.mulf %58, %58 : vector<16x32xf32>
    %cst_19 = arith.constant dense<0.000000e+00> : vector<16xf32>
    %64 = vector.multi_reduction <add>, %63, %cst_19 [1] : vector<16x32xf32> to vector<16xf32>
    %65 = vector.shape_cast %64 : vector<16xf32> to vector<16x1xf32>
    %cst_20 = arith.constant 3.200000e+01 : f32
    %66 = vector.broadcast %cst_20 : f32 to vector<16x1xf32>
    %67 = arith.divf %65, %66 : vector<16x1xf32>
    %68 = arith.mulf %62, %62 : vector<16x1xf32>
    %69 = arith.subf %67, %68 : vector<16x1xf32>
    %cst_21 = arith.constant 0.000000e+00 : f32
    %70 = vector.broadcast %cst_21 : f32 to vector<16x1xf32>
    %71 = arith.maximumf %69, %70 : vector<16x1xf32>
    %72 = vector.broadcast %62 : vector<16x1xf32> to vector<16x32xf32>
    %73 = arith.subf %58, %72 : vector<16x32xf32>
    %cst_22 = arith.constant 9.99999997E-7 : f32
    %74 = vector.broadcast %cst_22 : f32 to vector<16x1xf32>
    %75 = arith.addf %71, %74 : vector<16x1xf32>
    %76 = math.rsqrt %75 : vector<16x1xf32>
    %77 = vector.broadcast %76 : vector<16x1xf32> to vector<16x32xf32>
    %78 = arith.mulf %73, %77 : vector<16x32xf32>
    %79 = vector.broadcast %6 : vector<1x32xf32> to vector<16x32xf32>
    %80 = arith.mulf %78, %79 : vector<16x32xf32>
    %81 = vector.broadcast %7 : vector<1x32xf32> to vector<16x32xf32>
    %82 = arith.addf %80, %81 : vector<16x32xf32>
    %cst_23 = arith.constant dense<0.000000e+00> : vector<16x64xf32>
    %83 = tpu.matmul %82, %4, %cst_23 {dimension_numbers = #tpu.dot_dimension_numbers<[1], [0], [0], [1], [0, 0, 1, 1], [], []>} : vector<16x32xf32>, vector<32x64xf32>, vector<16x64xf32> -> vector<16x64xf32>
    %cst_24 = arith.constant 0.000000e+00 : f32
    %84 = vector.broadcast %cst_24 : f32 to vector<16x64xf32>
    %85 = arith.maximumf %83, %84 : vector<16x64xf32>
    %cst_25 = arith.constant dense<0.000000e+00> : vector<16x32xf32>
    %86 = tpu.matmul %85, %5, %cst_25 {dimension_numbers = #tpu.dot_dimension_numbers<[1], [0], [0], [1], [0, 0, 1, 1], [], []>} : vector<16x64xf32>, vector<64x32xf32>, vector<16x32xf32> -> vector<16x32xf32>
    %87 = arith.addf %86, %82 : vector<16x32xf32>
    %cst_26 = arith.constant dense<0.000000e+00> : vector<16xf32>
    %88 = vector.multi_reduction <add>, %87, %cst_26 [1] : vector<16x32xf32> to vector<16xf32>
    %89 = vector.shape_cast %88 : vector<16xf32> to vector<16x1xf32>
    %cst_27 = arith.constant 3.200000e+01 : f32
    %90 = vector.broadcast %cst_27 : f32 to vector<16x1xf32>
    %91 = arith.divf %89, %90 : vector<16x1xf32>
    %92 = arith.mulf %87, %87 : vector<16x32xf32>
    %cst_28 = arith.constant dense<0.000000e+00> : vector<16xf32>
    %93 = vector.multi_reduction <add>, %92, %cst_28 [1] : vector<16x32xf32> to vector<16xf32>
    %94 = vector.shape_cast %93 : vector<16xf32> to vector<16x1xf32>
    %cst_29 = arith.constant 3.200000e+01 : f32
    %95 = vector.broadcast %cst_29 : f32 to vector<16x1xf32>
    %96 = arith.divf %94, %95 : vector<16x1xf32>
    %97 = arith.mulf %91, %91 : vector<16x1xf32>
    %98 = arith.subf %96, %97 : vector<16x1xf32>
    %cst_30 = arith.constant 0.000000e+00 : f32
    %99 = vector.broadcast %cst_30 : f32 to vector<16x1xf32>
    %100 = arith.maximumf %98, %99 : vector<16x1xf32>
    %101 = vector.broadcast %91 : vector<16x1xf32> to vector<16x32xf32>
    %102 = arith.subf %87, %101 : vector<16x32xf32>
    %cst_31 = arith.constant 9.99999997E-7 : f32
    %103 = vector.broadcast %cst_31 : f32 to vector<16x1xf32>
    %104 = arith.addf %100, %103 : vector<16x1xf32>
    %105 = math.rsqrt %104 : vector<16x1xf32>
    %106 = vector.broadcast %105 : vector<16x1xf32> to vector<16x32xf32>
    %107 = arith.mulf %102, %106 : vector<16x32xf32>
    %108 = vector.broadcast %8 : vector<1x32xf32> to vector<16x32xf32>
    %109 = arith.mulf %107, %108 : vector<16x32xf32>
    %110 = vector.broadcast %9 : vector<1x32xf32> to vector<16x32xf32>
    %111 = arith.addf %109, %110 : vector<16x32xf32>
    %c160 = arith.constant 160 : index
    %c0_32 = arith.constant 0 : index
    %112 = vector.load %arg1[%c160, %c0_32] : memref<320x128xf32, #tpu.memory_space<vmem>>, vector<32x96xf32>
    %c192 = arith.constant 192 : index
    %c0_33 = arith.constant 0 : index
    %113 = vector.load %arg1[%c192, %c0_33] : memref<320x128xf32, #tpu.memory_space<vmem>>, vector<32x32xf32>
    %c224 = arith.constant 224 : index
    %c0_34 = arith.constant 0 : index
    %114 = vector.load %arg1[%c224, %c0_34] : memref<320x128xf32, #tpu.memory_space<vmem>>, vector<32x64xf32>
    %c256 = arith.constant 256 : index
    %c0_35 = arith.constant 0 : index
    %115 = vector.load %arg1[%c256, %c0_35] : memref<320x128xf32, #tpu.memory_space<vmem>>, vector<64x32xf32>
    %116 = vector.extract_strided_slice %1 {offsets = [4, 0], sizes = [1, 32], strides = [1, 1]} : vector<8x32xf32> to vector<1x32xf32>
    %117 = vector.extract_strided_slice %1 {offsets = [5, 0], sizes = [1, 32], strides = [1, 1]} : vector<8x32xf32> to vector<1x32xf32>
    %118 = vector.extract_strided_slice %1 {offsets = [6, 0], sizes = [1, 32], strides = [1, 1]} : vector<8x32xf32> to vector<1x32xf32>
    %119 = vector.extract_strided_slice %1 {offsets = [7, 0], sizes = [1, 32], strides = [1, 1]} : vector<8x32xf32> to vector<1x32xf32>
    %cst_36 = arith.constant dense<0.000000e+00> : vector<16x96xf32>
    %120 = tpu.matmul %111, %112, %cst_36 {dimension_numbers = #tpu.dot_dimension_numbers<[1], [0], [0], [1], [0, 0, 1, 1], [], []>} : vector<16x32xf32>, vector<32x96xf32>, vector<16x96xf32> -> vector<16x96xf32>
    %121 = vector.extract_strided_slice %120 {offsets = [0, 0], sizes = [16, 8], strides = [1, 1]} : vector<16x96xf32> to vector<16x8xf32>
    %122 = vector.extract_strided_slice %120 {offsets = [0, 8], sizes = [16, 8], strides = [1, 1]} : vector<16x96xf32> to vector<16x8xf32>
    %123 = vector.extract_strided_slice %120 {offsets = [0, 16], sizes = [16, 8], strides = [1, 1]} : vector<16x96xf32> to vector<16x8xf32>
    %124 = vector.extract_strided_slice %120 {offsets = [0, 24], sizes = [16, 8], strides = [1, 1]} : vector<16x96xf32> to vector<16x8xf32>
    %125 = tpu.concatenate %121, %122, %123, %124 in 0 : vector<16x8xf32>, vector<16x8xf32>, vector<16x8xf32>, vector<16x8xf32> -> vector<64x8xf32>
    %126 = vector.shape_cast %125 : vector<64x8xf32> to vector<8x8x8xf32>
    %127 = vector.extract_strided_slice %120 {offsets = [0, 32], sizes = [16, 8], strides = [1, 1]} : vector<16x96xf32> to vector<16x8xf32>
    %128 = vector.extract_strided_slice %120 {offsets = [0, 40], sizes = [16, 8], strides = [1, 1]} : vector<16x96xf32> to vector<16x8xf32>
    %129 = vector.extract_strided_slice %120 {offsets = [0, 48], sizes = [16, 8], strides = [1, 1]} : vector<16x96xf32> to vector<16x8xf32>
    %130 = vector.extract_strided_slice %120 {offsets = [0, 56], sizes = [16, 8], strides = [1, 1]} : vector<16x96xf32> to vector<16x8xf32>
    %131 = tpu.concatenate %127, %128, %129, %130 in 0 : vector<16x8xf32>, vector<16x8xf32>, vector<16x8xf32>, vector<16x8xf32> -> vector<64x8xf32>
    %132 = vector.shape_cast %131 : vector<64x8xf32> to vector<8x8x8xf32>
    %133 = vector.extract_strided_slice %120 {offsets = [0, 64], sizes = [16, 8], strides = [1, 1]} : vector<16x96xf32> to vector<16x8xf32>
    %134 = vector.extract_strided_slice %120 {offsets = [0, 72], sizes = [16, 8], strides = [1, 1]} : vector<16x96xf32> to vector<16x8xf32>
    %135 = vector.extract_strided_slice %120 {offsets = [0, 80], sizes = [16, 8], strides = [1, 1]} : vector<16x96xf32> to vector<16x8xf32>
    %136 = vector.extract_strided_slice %120 {offsets = [0, 88], sizes = [16, 8], strides = [1, 1]} : vector<16x96xf32> to vector<16x8xf32>
    %137 = tpu.concatenate %133, %134, %135, %136 in 0 : vector<16x8xf32>, vector<16x8xf32>, vector<16x8xf32>, vector<16x8xf32> -> vector<64x8xf32>
    %138 = vector.shape_cast %137 : vector<64x8xf32> to vector<8x8x8xf32>
    "tpu.trace_start"() <{level = 10 : i32, message = "gqd,gkd->gqk"}> : () -> ()
    %cst_37 = arith.constant dense<0.000000e+00> : vector<8x8x8xf32>
    %139 = tpu.matmul %126, %132, %cst_37 {dimension_numbers = #tpu.dot_dimension_numbers<[2], [2], [1], [1], [0, 0, 0, 1, 1, 1], [0], [0]>} : vector<8x8x8xf32>, vector<8x8x8xf32>, vector<8x8x8xf32> -> vector<8x8x8xf32>
    "tpu.trace_stop"() : () -> ()
    %cst_38 = arith.constant dense<0xFF800000> : vector<8x8xf32>
    %140 = vector.multi_reduction <maximumf>, %139, %cst_38 [2] : vector<8x8x8xf32> to vector<8x8xf32>
    %141 = vector.shape_cast %140 : vector<8x8xf32> to vector<8x8x1xf32>
    %142 = vector.broadcast %141 : vector<8x8x1xf32> to vector<8x8x8xf32>
    %143 = arith.subf %139, %142 : vector<8x8x8xf32>
    %144 = math.exp %143 : vector<8x8x8xf32>
    %cst_39 = arith.constant dense<0.000000e+00> : vector<8x8xf32>
    %145 = vector.multi_reduction <add>, %144, %cst_39 [2] : vector<8x8x8xf32> to vector<8x8xf32>
    %146 = vector.shape_cast %145 : vector<8x8xf32> to vector<8x8x1xf32>
    %147 = vector.broadcast %146 : vector<8x8x1xf32> to vector<8x8x8xf32>
    %148 = arith.divf %144, %147 : vector<8x8x8xf32>
    "tpu.trace_start"() <{level = 10 : i32, message = "gqk,gkd->gqd"}> : () -> ()
    %cst_40 = arith.constant dense<0.000000e+00> : vector<8x8x8xf32>
    %149 = tpu.matmul %148, %138, %cst_40 {dimension_numbers = #tpu.dot_dimension_numbers<[2], [1], [1], [2], [0, 0, 0, 1, 1, 2], [0], [0]>} : vector<8x8x8xf32>, vector<8x8x8xf32>, vector<8x8x8xf32> -> vector<8x8x8xf32>
    "tpu.trace_stop"() : () -> ()
    %150 = vector.shape_cast %149 : vector<8x8x8xf32> to vector<64x8xf32>
    %cst_41 = arith.constant 0.000000e+00 : f32
    %151 = vector.broadcast %cst_41 : f32 to vector<16x32xf32>
    %152 = vector.extract_strided_slice %150 {offsets = [0, 0], sizes = [16, 8], strides = [1, 1]} : vector<64x8xf32> to vector<16x8xf32>
    %153 = vector.extract_strided_slice %113 {offsets = [0, 0], sizes = [8, 32], strides = [1, 1]} : vector<32x32xf32> to vector<8x32xf32>
    %cst_42 = arith.constant dense<0.000000e+00> : vector<16x32xf32>
    %154 = tpu.matmul %152, %153, %cst_42 {dimension_numbers = #tpu.dot_dimension_numbers<[1], [0], [0], [1], [0, 0, 1, 1], [], []>} : vector<16x8xf32>, vector<8x32xf32>, vector<16x32xf32> -> vector<16x32xf32>
    %155 = arith.addf %151, %154 : vector<16x32xf32>
    %156 = vector.extract_strided_slice %150 {offsets = [16, 0], sizes = [16, 8], strides = [1, 1]} : vector<64x8xf32> to vector<16x8xf32>
    %157 = vector.extract_strided_slice %113 {offsets = [8, 0], sizes = [8, 32], strides = [1, 1]} : vector<32x32xf32> to vector<8x32xf32>
    %cst_43 = arith.constant dense<0.000000e+00> : vector<16x32xf32>
    %158 = tpu.matmul %156, %157, %cst_43 {dimension_numbers = #tpu.dot_dimension_numbers<[1], [0], [0], [1], [0, 0, 1, 1], [], []>} : vector<16x8xf32>, vector<8x32xf32>, vector<16x32xf32> -> vector<16x32xf32>
    %159 = arith.addf %155, %158 : vector<16x32xf32>
    %160 = vector.extract_strided_slice %150 {offsets = [32, 0], sizes = [16, 8], strides = [1, 1]} : vector<64x8xf32> to vector<16x8xf32>
    %161 = vector.extract_strided_slice %113 {offsets = [16, 0], sizes = [8, 32], strides = [1, 1]} : vector<32x32xf32> to vector<8x32xf32>
    %cst_44 = arith.constant dense<0.000000e+00> : vector<16x32xf32>
    %162 = tpu.matmul %160, %161, %cst_44 {dimension_numbers = #tpu.dot_dimension_numbers<[1], [0], [0], [1], [0, 0, 1, 1], [], []>} : vector<16x8xf32>, vector<8x32xf32>, vector<16x32xf32> -> vector<16x32xf32>
    %163 = arith.addf %159, %162 : vector<16x32xf32>
    %164 = vector.extract_strided_slice %150 {offsets = [48, 0], sizes = [16, 8], strides = [1, 1]} : vector<64x8xf32> to vector<16x8xf32>
    %165 = vector.extract_strided_slice %113 {offsets = [24, 0], sizes = [8, 32], strides = [1, 1]} : vector<32x32xf32> to vector<8x32xf32>
    %cst_45 = arith.constant dense<0.000000e+00> : vector<16x32xf32>
    %166 = tpu.matmul %164, %165, %cst_45 {dimension_numbers = #tpu.dot_dimension_numbers<[1], [0], [0], [1], [0, 0, 1, 1], [], []>} : vector<16x8xf32>, vector<8x32xf32>, vector<16x32xf32> -> vector<16x32xf32>
    %167 = arith.addf %163, %166 : vector<16x32xf32>
    %168 = arith.addf %167, %111 : vector<16x32xf32>
    %cst_46 = arith.constant dense<0.000000e+00> : vector<16xf32>
    %169 = vector.multi_reduction <add>, %168, %cst_46 [1] : vector<16x32xf32> to vector<16xf32>
    %170 = vector.shape_cast %169 : vector<16xf32> to vector<16x1xf32>
    %cst_47 = arith.constant 3.200000e+01 : f32
    %171 = vector.broadcast %cst_47 : f32 to vector<16x1xf32>
    %172 = arith.divf %170, %171 : vector<16x1xf32>
    %173 = arith.mulf %168, %168 : vector<16x32xf32>
    %cst_48 = arith.constant dense<0.000000e+00> : vector<16xf32>
    %174 = vector.multi_reduction <add>, %173, %cst_48 [1] : vector<16x32xf32> to vector<16xf32>
    %175 = vector.shape_cast %174 : vector<16xf32> to vector<16x1xf32>
    %cst_49 = arith.constant 3.200000e+01 : f32
    %176 = vector.broadcast %cst_49 : f32 to vector<16x1xf32>
    %177 = arith.divf %175, %176 : vector<16x1xf32>
    %178 = arith.mulf %172, %172 : vector<16x1xf32>
    %179 = arith.subf %177, %178 : vector<16x1xf32>
    %cst_50 = arith.constant 0.000000e+00 : f32
    %180 = vector.broadcast %cst_50 : f32 to vector<16x1xf32>
    %181 = arith.maximumf %179, %180 : vector<16x1xf32>
    %182 = vector.broadcast %172 : vector<16x1xf32> to vector<16x32xf32>
    %183 = arith.subf %168, %182 : vector<16x32xf32>
    %cst_51 = arith.constant 9.99999997E-7 : f32
    %184 = vector.broadcast %cst_51 : f32 to vector<16x1xf32>
    %185 = arith.addf %181, %184 : vector<16x1xf32>
    %186 = math.rsqrt %185 : vector<16x1xf32>
    %187 = vector.broadcast %186 : vector<16x1xf32> to vector<16x32xf32>
    %188 = arith.mulf %183, %187 : vector<16x32xf32>
    %189 = vector.broadcast %116 : vector<1x32xf32> to vector<16x32xf32>
    %190 = arith.mulf %188, %189 : vector<16x32xf32>
    %191 = vector.broadcast %117 : vector<1x32xf32> to vector<16x32xf32>
    %192 = arith.addf %190, %191 : vector<16x32xf32>
    %cst_52 = arith.constant dense<0.000000e+00> : vector<16x64xf32>
    %193 = tpu.matmul %192, %114, %cst_52 {dimension_numbers = #tpu.dot_dimension_numbers<[1], [0], [0], [1], [0, 0, 1, 1], [], []>} : vector<16x32xf32>, vector<32x64xf32>, vector<16x64xf32> -> vector<16x64xf32>
    %194 = math.tanh %193 : vector<16x64xf32>
    %cst_53 = arith.constant dense<0.000000e+00> : vector<16x32xf32>
    %195 = tpu.matmul %194, %115, %cst_53 {dimension_numbers = #tpu.dot_dimension_numbers<[1], [0], [0], [1], [0, 0, 1, 1], [], []>} : vector<16x64xf32>, vector<64x32xf32>, vector<16x32xf32> -> vector<16x32xf32>
    %196 = arith.addf %195, %192 : vector<16x32xf32>
    %cst_54 = arith.constant dense<0.000000e+00> : vector<16xf32>
    %197 = vector.multi_reduction <add>, %196, %cst_54 [1] : vector<16x32xf32> to vector<16xf32>
    %198 = vector.shape_cast %197 : vector<16xf32> to vector<16x1xf32>
    %cst_55 = arith.constant 3.200000e+01 : f32
    %199 = vector.broadcast %cst_55 : f32 to vector<16x1xf32>
    %200 = arith.divf %198, %199 : vector<16x1xf32>
    %201 = arith.mulf %196, %196 : vector<16x32xf32>
    %cst_56 = arith.constant dense<0.000000e+00> : vector<16xf32>
    %202 = vector.multi_reduction <add>, %201, %cst_56 [1] : vector<16x32xf32> to vector<16xf32>
    %203 = vector.shape_cast %202 : vector<16xf32> to vector<16x1xf32>
    %cst_57 = arith.constant 3.200000e+01 : f32
    %204 = vector.broadcast %cst_57 : f32 to vector<16x1xf32>
    %205 = arith.divf %203, %204 : vector<16x1xf32>
    %206 = arith.mulf %200, %200 : vector<16x1xf32>
    %207 = arith.subf %205, %206 : vector<16x1xf32>
    %cst_58 = arith.constant 0.000000e+00 : f32
    %208 = vector.broadcast %cst_58 : f32 to vector<16x1xf32>
    %209 = arith.maximumf %207, %208 : vector<16x1xf32>
    %210 = vector.broadcast %200 : vector<16x1xf32> to vector<16x32xf32>
    %211 = arith.subf %196, %210 : vector<16x32xf32>
    %cst_59 = arith.constant 9.99999997E-7 : f32
    %212 = vector.broadcast %cst_59 : f32 to vector<16x1xf32>
    %213 = arith.addf %209, %212 : vector<16x1xf32>
    %214 = math.rsqrt %213 : vector<16x1xf32>
    %215 = vector.broadcast %214 : vector<16x1xf32> to vector<16x32xf32>
    %216 = arith.mulf %211, %215 : vector<16x32xf32>
    %217 = vector.broadcast %118 : vector<1x32xf32> to vector<16x32xf32>
    %218 = arith.mulf %216, %217 : vector<16x32xf32>
    %219 = vector.broadcast %119 : vector<1x32xf32> to vector<16x32xf32>
    %220 = arith.addf %218, %219 : vector<16x32xf32>
    %c0_60 = arith.constant 0 : index
    %c0_61 = arith.constant 0 : index
    %221 = vector.load %arg3[%c0_60, %c0_61] : memref<16x32xf32, #tpu.memory_space<vmem>>, vector<16x32xf32>
    tpu.vector_store %arg3[%c0_60, %c0_61], %220 {strides = array<i32>} : memref<16x32xf32, #tpu.memory_space<vmem>>, vector<16x32xf32>,
    return
  }
}

</mosaic_0001>

<llo_original>
// kernel: tpu_custom_call.1
$region0: #{tpu_custom_call.1}
  #allocation0 [shape = 'u32[]', space=smem, size = 0x4, offset = 0x4, fixed_abs, tag = 'smem constant byte address 0x4 - core index']
  #allocation1 [shape = 'u32[144,128]{1,0:T(1,128)}', space=vmem, size = 0x12000, scoped, tag = 'internal scratch']
  %s0 = inlined_call_operand.hbm [shape: f32[16,32], index: 0, kind: input, shape index: {}]
  %s1 = inlined_call_operand.hbm [shape: f32[320,128], index: 1, kind: input, shape index: {}]
  %s2 = inlined_call_operand.hbm [shape: f32[8,32], index: 2, kind: input, shape index: {}]
  %s3 = inlined_call_operand.hbm [shape: f32[16,32], index: 3, kind: output, shape index: {}]
  %s4 = sld [smem:[#allocation0]]
  $region34: #{tpu_custom_call.1} parent=0
    _
  %s6 = ssub.s32 1, %s4
  %s7 = scalar_select 0, %s6, %s4
  $region1: #{tpu_custom_call.1} parent=0
    #allocation2 [shape = 'u8[8192]{0}', space=vmem, size = 0x2000, scoped, tag = 'input window, operand 0, single buffered']
    #allocation3 [shape = 's32[1]{0}', space=sflag, size = 0x4, scoped, tag = 'scoped memory for tpu_custom_call.1']
    #allocation4 [shape = 's32[1]{0}', space=sflag, size = 0x4, scoped, tag = 'scoped memory for tpu_custom_call.1']
    #allocation5 [shape = 'u8[163840]{0}', space=vmem, size = 0x28000, scoped, tag = 'input window, operand 1, single buffered']
    #allocation6 [shape = 's32[1]{0}', space=sflag, size = 0x4, scoped, tag = 'scoped memory for tpu_custom_call.1']
    #allocation7 [shape = 'u8[4096]{0}', space=vmem, size = 0x1000, scoped, tag = 'input window, operand 2, single buffered']
    #allocation8 [shape = 'u8[8192]{0}', space=vmem, size = 0x2000, scoped, tag = 'output window, operand 0, single buffered']
    %8 = vsyncpa [#allocation3], 0
    %9 = vsyncpa [#allocation6], 0
    %10 = vsyncpa [#allocation4], 0
    // Predicated region
    $region2: #{tpu_custom_call.1} parent=1 // pred_check
      _
    $region3: #{tpu_custom_call.1} parent=1 // pred_check_branch
      %12 = sbr.rel (0) target = $region5
    $region4: #{tpu_custom_call.1} parent=1 // pred_region
      %s14 = ssub.s32 256, 256
      %15 = vsyncadd [#allocation3], %s14
      %s16 = sshll.u32 [#allocation2], 4
      %s17 = int_to_ptr.vmem [resolvable:$true] %s16
      %22 = dma.hbm_to_vmem [thread:$0]  %s0, 256, %s17, [#allocation3], 128, 128, 8
    $region5: #{tpu_custom_call.1} parent=1 // pred_fallthru
      _
    // Predicated region
    $region6: #{tpu_custom_call.1} parent=1 // pred_check
      _
    $region7: #{tpu_custom_call.1} parent=1 // pred_check_branch
      %24 = sbr.rel (0) target = $region9
    $region8: #{tpu_custom_call.1} parent=1 // pred_region
      %s26 = ssub.s32 5120, 5120
      %27 = vsyncadd [#allocation6], %s26
      %s28 = sshll.u32 [#allocation5], 4
      %s29 = int_to_ptr.vmem [resolvable:$true] %s28
      %34 = dma.hbm_to_vmem [thread:$0]  %s1, 5120, %s29, [#allocation6], 128, 128, 8
    $region9: #{tpu_custom_call.1} parent=1 // pred_fallthru
      _
    // Predicated region
    $region10: #{tpu_custom_call.1} parent=1 // pred_check
      _
    $region11: #{tpu_custom_call.1} parent=1 // pred_check_branch
      %36 = sbr.rel (0) target = $region13
    $region12: #{tpu_custom_call.1} parent=1 // pred_region
      %s38 = ssub.s32 128, 128
      %39 = vsyncadd [#allocation6], %s38
      %s41 = sshll.u32 [#allocation7], 4
      %s42 = int_to_ptr.vmem [resolvable:$true] %s41
      %44 = dma.hbm_to_vmem [thread:$0]  %s2, 128, %s42, [#allocation6]
    $region13: #{tpu_custom_call.1} parent=1 // pred_fallthru
      _
    // Predicated region
    $region14: #{tpu_custom_call.1} parent=1 // pred_check
      _
    $region15: #{tpu_custom_call.1} parent=1 // pred_check_branch
      %46 = sbr.rel (0) target = $region17
    $region16: #{tpu_custom_call.1} parent=1 // pred_region
      %47 = dma.done [#allocation3], 256
    $region17: #{tpu_custom_call.1} parent=1 // pred_fallthru
      _
    // Predicated region
    $region18: #{tpu_custom_call.1} parent=1 // pred_check
      _
    $region19: #{tpu_custom_call.1} parent=1 // pred_check_branch
      %49 = sbr.rel (0) target = $region21
    $region20: #{tpu_custom_call.1} parent=1 // pred_region
      %50 = dma.done [#allocation6], 5120
    $region21: #{tpu_custom_call.1} parent=1 // pred_fallthru
      _
    // Predicated region
    $region22: #{tpu_custom_call.1} parent=1 // pred_check
      _
    $region23: #{tpu_custom_call.1} parent=1 // pred_check_branch
      %52 = sbr.rel (0) target = $region25
    $region24: #{tpu_custom_call.1} parent=1 // pred_region
      %53 = dma.done [#allocation6], 128
    $region25: #{tpu_custom_call.1} parent=1 // pred_fallthru
      _
    %v54 = vld [vmem:[#allocation2] sm:$0xff]
    %v55 = vld [vmem:[#allocation2 + $0x8] sm:$0xff]
    %v56 = vld [vmem:[#allocation7] sm:$0xff]
    %v57 = vld [vmem:[#allocation5] sm:$0xff]
    %v58 = vld [vmem:[#allocation5 + $0x8] sm:$0xff]
    %v59 = vld [vmem:[#allocation5 + $0x10] sm:$0xff]
    %v60 = vld [vmem:[#allocation5 + $0x18] sm:$0xff]
    %v61 = vld [vmem:[#allocation5 + $0x20] sm:$0xff]
    %v62 = vld [vmem:[#allocation5 + $0x28] sm:$0xff]
    %v63 = vld [vmem:[#allocation5 + $0x30] sm:$0xff]
    %v64 = vld [vmem:[#allocation5 + $0x38] sm:$0xff]
    %v65 = vld [vmem:[#allocation5 + $0x40] sm:$0xff]
    %v66 = vld [vmem:[#allocation5 + $0x48] sm:$0xff]
    %v67 = vld [vmem:[#allocation5 + $0x50] sm:$0xff]
    %v68 = vld [vmem:[#allocation5 + $0x58] sm:$0xff]
    %v69 = vld [vmem:[#allocation5 + $0x60] sm:$0xff]
    %v70 = vld [vmem:[#allocation5 + $0x68] sm:$0xff]
    %v71 = vld [vmem:[#allocation5 + $0x70] sm:$0xff]
    %v72 = vld [vmem:[#allocation5 + $0x78] sm:$0xff]
    %v73 = vld [vmem:[#allocation5 + $0x80] sm:$0xff]
    %v74 = vld [vmem:[#allocation5 + $0x88] sm:$0xff]
    %v75 = vld [vmem:[#allocation5 + $0x90] sm:$0xff]
    %v76 = vld [vmem:[#allocation5 + $0x98] sm:$0xff]
    %vm77 = vcmask 261120
    %v79 = vsel %vm77, %v54, 0
    %v82 = vsel %vm77, %v55, 0
    %84 = vmatprep.subr.mxu0 0.0
    %85 = vmatpush1.msra.mxu0 0.0
    %86 = vmatprep.subr.mxu0 0.0
    %87 = vmatpush1.msra.mxu0 0.0
    %88 = vmatprep.subr.mxu0 0.0
    %89 = vmatpush1.msra.mxu0 0.0
    %90 = vmatprep.subr.mxu0 0.0
    %91 = vmatpush1.msra.mxu0 0.0
    %92 = vmatprep.subr.mxu0 0.0
    %93 = vmatpush1.msra.mxu0 0.0
    %94 = vmatprep.subr.mxu0 0.0
    %95 = vmatpush1.msra.mxu0 0.0
    %96 = vmatprep.subr.mxu0 0.0
    %97 = vmatpush1.msra.mxu0 0.0
    %98 = vmatprep.subr.mxu0 0.0
    %99 = vmatpush1.msra.mxu0 0.0
    %100 = vmatprep.subr.mxu0 0.0
    %101 = vmatpush1.msra.mxu0 0.0
    %102 = vmatprep.subr.mxu0 0.0
    %103 = vmatpush1.msra.mxu0 0.0
    %104 = vmatprep.subr.mxu0 0.0
    %105 = vmatpush1.msra.mxu0 0.0
    %106 = vmatprep.subr.mxu0 0.0
    %107 = vmatpush1.msra.mxu0 0.0
    %108 = vmatprep.subr.mxu0 0.0
    %109 = vmatpush1.msra.mxu0 %v60
    %110 = vmatprep.subr.mxu0 0.0
    %111 = vmatpush1.msra.mxu0 %v59
    %112 = vmatprep.subr.mxu0 0.0
    %113 = vmatpush1.msra.mxu0 %v58
    %114 = vmatprep.subr.mxu0 0.0
    %115 = vmatpush1.msra.mxu0 %v57
    %116 = vmatprep.subr.mxu0 0.0
    %117 = vmatpush2.msra.mxu0 0.0
    %118 = vmatprep.subr.mxu0 0.0
    %119 = vmatpush2.msra.mxu0 0.0
    %120 = vmatprep.subr.mxu0 0.0
    %121 = vmatpush2.msra.mxu0 0.0
    %122 = vmatprep.subr.mxu0 0.0
    %123 = vmatpush2.msra.mxu0 0.0
    %124 = vmatprep.subr.mxu0 0.0
    %125 = vmatpush2.msra.mxu0 0.0
    %126 = vmatprep.subr.mxu0 0.0
    %127 = vmatpush2.msra.mxu0 0.0
    %128 = vmatprep.subr.mxu0 0.0
    %129 = vmatpush2.msra.mxu0 0.0
    %130 = vmatprep.subr.mxu0 0.0
    %131 = vmatpush2.msra.mxu0 0.0
    %132 = vmatprep.subr.mxu0 0.0
    %133 = vmatpush2.msra.mxu0 0.0
    %134 = vmatprep.subr.mxu0 0.0
    %135 = vmatpush2.msra.mxu0 0.0
    %136 = vmatprep.subr.mxu0 0.0
    %137 = vmatpush2.msra.mxu0 0.0
    %138 = vmatprep.subr.mxu0 0.0
    %139 = vmatpush2.msra.mxu0 0.0
    %140 = vmatprep.subr.mxu0 0.0
    %141 = vmatpush2.msra.mxu0 0.0
    %142 = vmatprep.subr.mxu0 0.0
    %143 = vmatpush2.msra.mxu0 0.0
    %144 = vmatprep.subr.mxu0 0.0
    %145 = vmatpush2.msra.mxu0 0.0
    %146 = vmatprep.subr.mxu0 0.0
    %147 = vmatpush2.msra.mxu0 0.0
    %148 = vmatprep.mubr.f32.mxu0 0.0
    %149 = vmatmul.mubr.f32.gmra.mxu0 %v79
    %v150 = vpop.f32.mrf.mxu0
    %v151 = vadd.f32 0.0, %v150
    %v152 = vpop.f32.mrf.mxu0
    %153 = vmatprep.mubr.f32.mxu0 0.0
    %154 = vmatmul.mubr.f32.gmra.mxu0 %v82
    %v155 = vpop.f32.mrf.mxu0
    %v156 = vadd.f32 0.0, %v155
    %v157 = vpop.f32.mrf.mxu0
    %158 = vdwg.mxu0
    %161 = vrot.lane.b32.xlu0 %v151, 120
    %v162 = vpop.permute.xlu0 %161
    %163 = vrot.lane.b32.xlu0 %v156, 120
    %v164 = vpop.permute.xlu0 %163
    %165 = vrot.lane.b32.xlu0 %v151, 112
    %v166 = vpop.permute.xlu0 %165
    %167 = vrot.lane.b32.xlu0 %v156, 112
    %v168 = vpop.permute.xlu0 %167
    %169 = vrot.lane.b32.xlu0 %v151, 104
    %v170 = vpop.permute.xlu0 %169
    %171 = vrot.lane.b32.xlu0 %v156, 104
    %v172 = vpop.permute.xlu0 %171
    %173 = vrot.lane.b32.xlu0 %v151, 96
    %v174 = vpop.permute.xlu0 %173
    %vm175 = vcmask 64512
    %v176 = vsel %vm175, %v151, 0
    %v178 = vsel %vm175, %v174, 0
    %180 = vmatprep.subr.mxu0 0.0
    %181 = vmatpush1.xpose.msra.mxu0 0.0
    %182 = vmatprep.subr.mxu0 0.0
    %183 = vmatpush1.xpose.msra.mxu0 0.0
    %184 = vmatprep.subr.mxu0 0.0
    %185 = vmatpush1.xpose.msra.mxu0 0.0
    %186 = vmatprep.subr.mxu0 0.0
    %187 = vmatpush1.xpose.msra.mxu0 0.0
    %188 = vmatprep.subr.mxu0 0.0
    %189 = vmatpush1.xpose.msra.mxu0 0.0
    %190 = vmatprep.subr.mxu0 0.0
    %191 = vmatpush1.xpose.msra.mxu0 0.0
    %192 = vmatprep.subr.mxu0 0.0
    %193 = vmatpush1.xpose.msra.mxu0 0.0
    %194 = vmatprep.subr.mxu0 0.0
    %195 = vmatpush1.xpose.msra.mxu0 0.0
    %196 = vmatprep.subr.mxu0 0.0
    %197 = vmatpush1.xpose.msra.mxu0 0.0
    %198 = vmatprep.subr.mxu0 0.0
    %199 = vmatpush1.xpose.msra.mxu0 0.0
    %200 = vmatprep.subr.mxu0 0.0
    %201 = vmatpush1.xpose.msra.mxu0 0.0
    %202 = vmatprep.subr.mxu0 0.0
    %203 = vmatpush1.xpose.msra.mxu0 0.0
    %204 = vmatprep.subr.mxu0 0.0
    %205 = vmatpush1.xpose.msra.mxu0 0.0
    %206 = vmatprep.subr.mxu0 0.0
    %207 = vmatpush1.xpose.msra.mxu0 0.0
    %208 = vmatprep.subr.mxu0 0.0
    %209 = vmatpush1.xpose.msra.mxu0 0.0
    %210 = vmatprep.subr.mxu0 0.0
    %211 = vmatpush1.xpose.msra.mxu0 %v178
    %212 = vmatprep.subr.mxu0 0.0
    %213 = vmatpush2.xpose.msra.mxu0 0.0
    %214 = vmatprep.subr.mxu0 0.0
    %215 = vmatpush2.xpose.msra.mxu0 0.0
    %216 = vmatprep.subr.mxu0 0.0
    %217 = vmatpush2.xpose.msra.mxu0 0.0
    %218 = vmatprep.subr.mxu0 0.0
    %219 = vmatpush2.xpose.msra.mxu0 0.0
    %220 = vmatprep.subr.mxu0 0.0
    %221 = vmatpush2.xpose.msra.mxu0 0.0
    %222 = vmatprep.subr.mxu0 0.0
    %223 = vmatpush2.xpose.msra.mxu0 0.0
    %224 = vmatprep.subr.mxu0 0.0
    %225 = vmatpush2.xpose.msra.mxu0 0.0
    %226 = vmatprep.subr.mxu0 0.0
    %227 = vmatpush2.xpose.msra.mxu0 0.0
    %228 = vmatprep.subr.mxu0 0.0
    %229 = vmatpush2.xpose.msra.mxu0 0.0
    %230 = vmatprep.subr.mxu0 0.0
    %231 = vmatpush2.xpose.msra.mxu0 0.0
    %232 = vmatprep.subr.mxu0 0.0
    %233 = vmatpush2.xpose.msra.mxu0 0.0
    %234 = vmatprep.subr.mxu0 0.0
    %235 = vmatpush2.xpose.msra.mxu0 0.0
    %236 = vmatprep.subr.mxu0 0.0
    %237 = vmatpush2.xpose.msra.mxu0 0.0
    %238 = vmatprep.subr.mxu0 0.0
    %239 = vmatpush2.xpose.msra.mxu0 0.0
    %240 = vmatprep.subr.mxu0 0.0
    %241 = vmatpush2.xpose.msra.mxu0 0.0
    %242 = vmatprep.subr.mxu0 0.0
    %243 = vmatpush2.xpose.msra.mxu0 0.0
    %244 = vmatprep.mubr.f32.mxu0 0.0
    %245 = vmatmul.mubr.f32.gmra.mxu0 %v176
    %v246 = vpop.f32.mrf.mxu0
    %v247 = vadd.f32 0.0, %v246
    %v248 = vpop.f32.mrf.mxu0
    %249 = vdwg.mxu0
    %250 = vrot.lane.b32.xlu0 %v156, 96
    %v251 = vpop.permute.xlu0 %250
    %v252 = vsel %vm175, %v156, 0
    %v254 = vsel %vm175, %v251, 0
    %256 = vmatprep.subr.mxu0 0.0
    %257 = vmatpush1.xpose.msra.mxu0 0.0
    %258 = vmatprep.subr.mxu0 0.0
    %259 = vmatpush1.xpose.msra.mxu0 0.0
    %260 = vmatprep.subr.mxu0 0.0
    %261 = vmatpush1.xpose.msra.mxu0 0.0
    %262 = vmatprep.subr.mxu0 0.0
    %263 = vmatpush1.xpose.msra.mxu0 0.0
    %264 = vmatprep.subr.mxu0 0.0
    %265 = vmatpush1.xpose.msra.mxu0 0.0
    %266 = vmatprep.subr.mxu0 0.0
    %267 = vmatpush1.xpose.msra.mxu0 0.0
    %268 = vmatprep.subr.mxu0 0.0
    %269 = vmatpush1.xpose.msra.mxu0 0.0
    %270 = vmatprep.subr.mxu0 0.0
    %271 = vmatpush1.xpose.msra.mxu0 0.0
    %272 = vmatprep.subr.mxu0 0.0
    %273 = vmatpush1.xpose.msra.mxu0 0.0
    %274 = vmatprep.subr.mxu0 0.0
    %275 = vmatpush1.xpose.msra.mxu0 0.0
    %276 = vmatprep.subr.mxu0 0.0
    %277 = vmatpush1.xpose.msra.mxu0 0.0
    %278 = vmatprep.subr.mxu0 0.0
    %279 = vmatpush1.xpose.msra.mxu0 0.0
    %280 = vmatprep.subr.mxu0 0.0
    %281 = vmatpush1.xpose.msra.mxu0 0.0
    %282 = vmatprep.subr.mxu0 0.0
    %283 = vmatpush1.xpose.msra.mxu0 0.0
    %284 = vmatprep.subr.mxu0 0.0
    %285 = vmatpush1.xpose.msra.mxu0 0.0
    %286 = vmatprep.subr.mxu0 0.0
    %287 = vmatpush1.xpose.msra.mxu0 %v254
    %288 = vmatprep.subr.mxu0 0.0
    %289 = vmatpush2.xpose.msra.mxu0 0.0
    %290 = vmatprep.subr.mxu0 0.0
    %291 = vmatpush2.xpose.msra.mxu0 0.0
    %292 = vmatprep.subr.mxu0 0.0
    %293 = vmatpush2.xpose.msra.mxu0 0.0
    %294 = vmatprep.subr.mxu0 0.0
    %295 = vmatpush2.xpose.msra.mxu0 0.0
    %296 = vmatprep.subr.mxu0 0.0
    %297 = vmatpush2.xpose.msra.mxu0 0.0
    %298 = vmatprep.subr.mxu0 0.0
    %299 = vmatpush2.xpose.msra.mxu0 0.0
    %300 = vmatprep.subr.mxu0 0.0
    %301 = vmatpush2.xpose.msra.mxu0 0.0
    %302 = vmatprep.subr.mxu0 0.0
    %303 = vmatpush2.xpose.msra.mxu0 0.0
    %304 = vmatprep.subr.mxu0 0.0
    %305 = vmatpush2.xpose.msra.mxu0 0.0
    %306 = vmatprep.subr.mxu0 0.0
    %307 = vmatpush2.xpose.msra.mxu0 0.0
    %308 = vmatprep.subr.mxu0 0.0
    %309 = vmatpush2.xpose.msra.mxu0 0.0
    %310 = vmatprep.subr.mxu0 0.0
    %311 = vmatpush2.xpose.msra.mxu0 0.0
    %312 = vmatprep.subr.mxu0 0.0
    %313 = vmatpush2.xpose.msra.mxu0 0.0
    %314 = vmatprep.subr.mxu0 0.0
    %315 = vmatpush2.xpose.msra.mxu0 0.0
    %316 = vmatprep.subr.mxu0 0.0
    %317 = vmatpush2.xpose.msra.mxu0 0.0
    %318 = vmatprep.subr.mxu0 0.0
    %319 = vmatpush2.xpose.msra.mxu0 0.0
    %320 = vmatprep.mubr.f32.mxu0 0.0
    %321 = vmatmul.mubr.f32.gmra.mxu0 %v252
    %v322 = vpop.f32.mrf.mxu0
    %v323 = vadd.f32 0.0, %v322
    %v324 = vpop.f32.mrf.mxu0
    %325 = vdwg.mxu0
    %326 = vrot.lane.b32.xlu0 %v162, 96
    %v327 = vpop.permute.xlu0 %326
    %v328 = vsel %vm175, %v162, 0
    %v330 = vsel %vm175, %v327, 0
    %332 = vmatprep.subr.mxu0 0.0
    %333 = vmatpush1.xpose.msra.mxu0 0.0
    %334 = vmatprep.subr.mxu0 0.0
    %335 = vmatpush1.xpose.msra.mxu0 0.0
    %336 = vmatprep.subr.mxu0 0.0
    %337 = vmatpush1.xpose.msra.mxu0 0.0
    %338 = vmatprep.subr.mxu0 0.0
    %339 = vmatpush1.xpose.msra.mxu0 0.0
    %340 = vmatprep.subr.mxu0 0.0
    %341 = vmatpush1.xpose.msra.mxu0 0.0
    %342 = vmatprep.subr.mxu0 0.0
    %343 = vmatpush1.xpose.msra.mxu0 0.0
    %344 = vmatprep.subr.mxu0 0.0
    %345 = vmatpush1.xpose.msra.mxu0 0.0
    %346 = vmatprep.subr.mxu0 0.0
    %347 = vmatpush1.xpose.msra.mxu0 0.0
    %348 = vmatprep.subr.mxu0 0.0
    %349 = vmatpush1.xpose.msra.mxu0 0.0
    %350 = vmatprep.subr.mxu0 0.0
    %351 = vmatpush1.xpose.msra.mxu0 0.0
    %352 = vmatprep.subr.mxu0 0.0
    %353 = vmatpush1.xpose.msra.mxu0 0.0
    %354 = vmatprep.subr.mxu0 0.0
    %355 = vmatpush1.xpose.msra.mxu0 0.0
    %356 = vmatprep.subr.mxu0 0.0
    %357 = vmatpush1.xpose.msra.mxu0 0.0
    %358 = vmatprep.subr.mxu0 0.0
    %359 = vmatpush1.xpose.msra.mxu0 0.0
    %360 = vmatprep.subr.mxu0 0.0
    %361 = vmatpush1.xpose.msra.mxu0 0.0
    %362 = vmatprep.subr.mxu0 0.0
    %363 = vmatpush1.xpose.msra.mxu0 %v330
    %364 = vmatprep.subr.mxu0 0.0
    %365 = vmatpush2.xpose.msra.mxu0 0.0
    %366 = vmatprep.subr.mxu0 0.0
    %367 = vmatpush2.xpose.msra.mxu0 0.0
    %368 = vmatprep.subr.mxu0 0.0
    %369 = vmatpush2.xpose.msra.mxu0 0.0
    %370 = vmatprep.subr.mxu0 0.0
    %371 = vmatpush2.xpose.msra.mxu0 0.0
    %372 = vmatprep.subr.mxu0 0.0
    %373 = vmatpush2.xpose.msra.mxu0 0.0
    %374 = vmatprep.subr.mxu0 0.0
    %375 = vmatpush2.xpose.msra.mxu0 0.0
    %376 = vmatprep.subr.mxu0 0.0
    %377 = vmatpush2.xpose.msra.mxu0 0.0
    %378 = vmatprep.subr.mxu0 0.0
    %379 = vmatpush2.xpose.msra.mxu0 0.0
    %380 = vmatprep.subr.mxu0 0.0
    %381 = vmatpush2.xpose.msra.mxu0 0.0
    %382 = vmatprep.subr.mxu0 0.0
    %383 = vmatpush2.xpose.msra.mxu0 0.0
    %384 = vmatprep.subr.mxu0 0.0
    %385 = vmatpush2.xpose.msra.mxu0 0.0
    %386 = vmatprep.subr.mxu0 0.0
    %387 = vmatpush2.xpose.msra.mxu0 0.0
    %388 = vmatprep.subr.mxu0 0.0
    %389 = vmatpush2.xpose.msra.mxu0 0.0
    %390 = vmatprep.subr.mxu0 0.0
    %391 = vmatpush2.xpose.msra.mxu0 0.0
    %392 = vmatprep.subr.mxu0 0.0
    %393 = vmatpush2.xpose.msra.mxu0 0.0
    %394 = vmatprep.subr.mxu0 0.0
    %395 = vmatpush2.xpose.msra.mxu0 0.0
    %396 = vmatprep.mubr.f32.mxu0 0.0
    %397 = vmatmul.mubr.f32.gmra.mxu0 %v328
    %v398 = vpop.f32.mrf.mxu0
    %v399 = vadd.f32 0.0, %v398
    %v400 = vpop.f32.mrf.mxu0
    %401 = vdwg.mxu0
    %402 = vrot.lane.b32.xlu0 %v164, 96
    %v403 = vpop.permute.xlu0 %402
    %v404 = vsel %vm175, %v164, 0
    %v406 = vsel %vm175, %v403, 0
    %408 = vmatprep.subr.mxu0 0.0
    %409 = vmatpush1.xpose.msra.mxu0 0.0
    %410 = vmatprep.subr.mxu0 0.0
    %411 = vmatpush1.xpose.msra.mxu0 0.0
    %412 = vmatprep.subr.mxu0 0.0
    %413 = vmatpush1.xpose.msra.mxu0 0.0
    %414 = vmatprep.subr.mxu0 0.0
    %415 = vmatpush1.xpose.msra.mxu0 0.0
    %416 = vmatprep.subr.mxu0 0.0
    %417 = vmatpush1.xpose.msra.mxu0 0.0
    %418 = vmatprep.subr.mxu0 0.0
    %419 = vmatpush1.xpose.msra.mxu0 0.0
    %420 = vmatprep.subr.mxu0 0.0
    %421 = vmatpush1.xpose.msra.mxu0 0.0
    %422 = vmatprep.subr.mxu0 0.0
    %423 = vmatpush1.xpose.msra.mxu0 0.0
    %424 = vmatprep.subr.mxu0 0.0
    %425 = vmatpush1.xpose.msra.mxu0 0.0
    %426 = vmatprep.subr.mxu0 0.0
    %427 = vmatpush1.xpose.msra.mxu0 0.0
    %428 = vmatprep.subr.mxu0 0.0
    %429 = vmatpush1.xpose.msra.mxu0 0.0
    %430 = vmatprep.subr.mxu0 0.0
    %431 = vmatpush1.xpose.msra.mxu0 0.0
    %432 = vmatprep.subr.mxu0 0.0
    %433 = vmatpush1.xpose.msra.mxu0 0.0
    %434 = vmatprep.subr.mxu0 0.0
    %435 = vmatpush1.xpose.msra.mxu0 0.0
    %436 = vmatprep.subr.mxu0 0.0
    %437 = vmatpush1.xpose.msra.mxu0 0.0
    %438 = vmatprep.subr.mxu0 0.0
    %439 = vmatpush1.xpose.msra.mxu0 %v406
    %440 = vmatprep.subr.mxu0 0.0
    %441 = vmatpush2.xpose.msra.mxu0 0.0
    %442 = vmatprep.subr.mxu0 0.0
    %443 = vmatpush2.xpose.msra.mxu0 0.0
    %444 = vmatprep.subr.mxu0 0.0
    %445 = vmatpush2.xpose.msra.mxu0 0.0
    %446 = vmatprep.subr.mxu0 0.0
    %447 = vmatpush2.xpose.msra.mxu0 0.0
    %448 = vmatprep.subr.mxu0 0.0
    %449 = vmatpush2.xpose.msra.mxu0 0.0
    %450 = vmatprep.subr.mxu0 0.0
    %451 = vmatpush2.xpose.msra.mxu0 0.0
    %452 = vmatprep.subr.mxu0 0.0
    %453 = vmatpush2.xpose.msra.mxu0 0.0
    %454 = vmatprep.subr.mxu0 0.0
    %455 = vmatpush2.xpose.msra.mxu0 0.0
    %456 = vmatprep.subr.mxu0 0.0
    %457 = vmatpush2.xpose.msra.mxu0 0.0
    %458 = vmatprep.subr.mxu0 0.0
    %459 = vmatpush2.xpose.msra.mxu0 0.0
    %460 = vmatprep.subr.mxu0 0.0
    %461 = vmatpush2.xpose.msra.mxu0 0.0
    %462 = vmatprep.subr.mxu0 0.0
    %463 = vmatpush2.xpose.msra.mxu0 0.0
    %464 = vmatprep.subr.mxu0 0.0
    %465 = vmatpush2.xpose.msra.mxu0 0.0
    %466 = vmatprep.subr.mxu0 0.0
    %467 = vmatpush2.xpose.msra.mxu0 0.0
    %468 = vmatprep.subr.mxu0 0.0
    %469 = vmatpush2.xpose.msra.mxu0 0.0
    %470 = vmatprep.subr.mxu0 0.0
    %471 = vmatpush2.xpose.msra.mxu0 0.0
    %472 = vmatprep.mubr.f32.mxu0 0.0
    %473 = vmatmul.mubr.f32.gmra.mxu0 %v404
    %v474 = vpop.f32.mrf.mxu0
    %v475 = vadd.f32 0.0, %v474
    %v476 = vpop.f32.mrf.mxu0
    %477 = vdwg.mxu0
    %478 = vrot.lane.b32.xlu0 %v166, 96
    %v479 = vpop.permute.xlu0 %478
    %v480 = vsel %vm175, %v166, 0
    %v482 = vsel %vm175, %v479, 0
    %484 = vmatprep.subr.mxu0 0.0
    %485 = vmatpush1.xpose.msra.mxu0 0.0
    %486 = vmatprep.subr.mxu0 0.0
    %487 = vmatpush1.xpose.msra.mxu0 0.0
    %488 = vmatprep.subr.mxu0 0.0
    %489 = vmatpush1.xpose.msra.mxu0 0.0
    %490 = vmatprep.subr.mxu0 0.0
    %491 = vmatpush1.xpose.msra.mxu0 0.0
    %492 = vmatprep.subr.mxu0 0.0
    %493 = vmatpush1.xpose.msra.mxu0 0.0
    %494 = vmatprep.subr.mxu0 0.0
    %495 = vmatpush1.xpose.msra.mxu0 0.0
    %496 = vmatprep.subr.mxu0 0.0
    %497 = vmatpush1.xpose.msra.mxu0 0.0
    %498 = vmatprep.subr.mxu0 0.0
    %499 = vmatpush1.xpose.msra.mxu0 0.0
    %500 = vmatprep.subr.mxu0 0.0
    %501 = vmatpush1.xpose.msra.mxu0 0.0
    %502 = vmatprep.subr.mxu0 0.0
    %503 = vmatpush1.xpose.msra.mxu0 0.0
    %504 = vmatprep.subr.mxu0 0.0
    %505 = vmatpush1.xpose.msra.mxu0 0.0
    %506 = vmatprep.subr.mxu0 0.0
    %507 = vmatpush1.xpose.msra.mxu0 0.0
    %508 = vmatprep.subr.mxu0 0.0
    %509 = vmatpush1.xpose.msra.mxu0 0.0
    %510 = vmatprep.subr.mxu0 0.0
    %511 = vmatpush1.xpose.msra.mxu0 0.0
    %512 = vmatprep.subr.mxu0 0.0
    %513 = vmatpush1.xpose.msra.mxu0 0.0
    %514 = vmatprep.subr.mxu0 0.0
    %515 = vmatpush1.xpose.msra.mxu0 %v482
    %516 = vmatprep.subr.mxu0 0.0
    %517 = vmatpush2.xpose.msra.mxu0 0.0
    %518 = vmatprep.subr.mxu0 0.0
    %519 = vmatpush2.xpose.msra.mxu0 0.0
    %520 = vmatprep.subr.mxu0 0.0
    %521 = vmatpush2.xpose.msra.mxu0 0.0
    %522 = vmatprep.subr.mxu0 0.0
    %523 = vmatpush2.xpose.msra.mxu0 0.0
    %524 = vmatprep.subr.mxu0 0.0
    %525 = vmatpush2.xpose.msra.mxu0 0.0
    %526 = vmatprep.subr.mxu0 0.0
    %527 = vmatpush2.xpose.msra.mxu0 0.0
    %528 = vmatprep.subr.mxu0 0.0
    %529 = vmatpush2.xpose.msra.mxu0 0.0
    %530 = vmatprep.subr.mxu0 0.0
    %531 = vmatpush2.xpose.msra.mxu0 0.0
    %532 = vmatprep.subr.mxu0 0.0
    %533 = vmatpush2.xpose.msra.mxu0 0.0
    %534 = vmatprep.subr.mxu0 0.0
    %535 = vmatpush2.xpose.msra.mxu0 0.0
    %536 = vmatprep.subr.mxu0 0.0
    %537 = vmatpush2.xpose.msra.mxu0 0.0
    %538 = vmatprep.subr.mxu0 0.0
    %539 = vmatpush2.xpose.msra.mxu0 0.0
    %540 = vmatprep.subr.mxu0 0.0
    %541 = vmatpush2.xpose.msra.mxu0 0.0
    %542 = vmatprep.subr.mxu0 0.0
    %543 = vmatpush2.xpose.msra.mxu0 0.0
    %544 = vmatprep.subr.mxu0 0.0
    %545 = vmatpush2.xpose.msra.mxu0 0.0
    %546 = vmatprep.subr.mxu0 0.0
    %547 = vmatpush2.xpose.msra.mxu0 0.0
    %548 = vmatprep.mubr.f32.mxu0 0.0
    %549 = vmatmul.mubr.f32.gmra.mxu0 %v480
    %v550 = vpop.f32.mrf.mxu0
    %v551 = vadd.f32 0.0, %v550
    %v552 = vpop.f32.mrf.mxu0
    %553 = vdwg.mxu0
    %554 = vrot.lane.b32.xlu0 %v168, 96
    %v555 = vpop.permute.xlu0 %554
    %v556 = vsel %vm175, %v168, 0
    %v558 = vsel %vm175, %v555, 0
    %560 = vmatprep.subr.mxu0 0.0
    %561 = vmatpush1.xpose.msra.mxu0 0.0
    %562 = vmatprep.subr.mxu0 0.0
    %563 = vmatpush1.xpose.msra.mxu0 0.0
    %564 = vmatprep.subr.mxu0 0.0
    %565 = vmatpush1.xpose.msra.mxu0 0.0
    %566 = vmatprep.subr.mxu0 0.0
    %567 = vmatpush1.xpose.msra.mxu0 0.0
    %568 = vmatprep.subr.mxu0 0.0
    %569 = vmatpush1.xpose.msra.mxu0 0.0
    %570 = vmatprep.subr.mxu0 0.0
    %571 = vmatpush1.xpose.msra.mxu0 0.0
    %572 = vmatprep.subr.mxu0 0.0
    %573 = vmatpush1.xpose.msra.mxu0 0.0
    %574 = vmatprep.subr.mxu0 0.0
    %575 = vmatpush1.xpose.msra.mxu0 0.0
    %576 = vmatprep.subr.mxu0 0.0
    %577 = vmatpush1.xpose.msra.mxu0 0.0
    %578 = vmatprep.subr.mxu0 0.0
    %579 = vmatpush1.xpose.msra.mxu0 0.0
    %580 = vmatprep.subr.mxu0 0.0
    %581 = vmatpush1.xpose.msra.mxu0 0.0
    %582 = vmatprep.subr.mxu0 0.0
    %583 = vmatpush1.xpose.msra.mxu0 0.0
    %584 = vmatprep.subr.mxu0 0.0
    %585 = vmatpush1.xpose.msra.mxu0 0.0
    %586 = vmatprep.subr.mxu0 0.0
    %587 = vmatpush1.xpose.msra.mxu0 0.0
    %588 = vmatprep.subr.mxu0 0.0
    %589 = vmatpush1.xpose.msra.mxu0 0.0
    %590 = vmatprep.subr.mxu0 0.0
    %591 = vmatpush1.xpose.msra.mxu0 %v558
    %592 = vmatprep.subr.mxu0 0.0
    %593 = vmatpush2.xpose.msra.mxu0 0.0
    %594 = vmatprep.subr.mxu0 0.0
    %595 = vmatpush2.xpose.msra.mxu0 0.0
    %596 = vmatprep.subr.mxu0 0.0
    %597 = vmatpush2.xpose.msra.mxu0 0.0
    %598 = vmatprep.subr.mxu0 0.0
    %599 = vmatpush2.xpose.msra.mxu0 0.0
    %600 = vmatprep.subr.mxu0 0.0
    %601 = vmatpush2.xpose.msra.mxu0 0.0
    %602 = vmatprep.subr.mxu0 0.0
    %603 = vmatpush2.xpose.msra.mxu0 0.0
    %604 = vmatprep.subr.mxu0 0.0
    %605 = vmatpush2.xpose.msra.mxu0 0.0
    %606 = vmatprep.subr.mxu0 0.0
    %607 = vmatpush2.xpose.msra.mxu0 0.0
    %608 = vmatprep.subr.mxu0 0.0
    %609 = vmatpush2.xpose.msra.mxu0 0.0
    %610 = vmatprep.subr.mxu0 0.0
    %611 = vmatpush2.xpose.msra.mxu0 0.0
    %612 = vmatprep.subr.mxu0 0.0
    %613 = vmatpush2.xpose.msra.mxu0 0.0
    %614 = vmatprep.subr.mxu0 0.0
    %615 = vmatpush2.xpose.msra.mxu0 0.0
    %616 = vmatprep.subr.mxu0 0.0
    %617 = vmatpush2.xpose.msra.mxu0 0.0
    %618 = vmatprep.subr.mxu0 0.0
    %619 = vmatpush2.xpose.msra.mxu0 0.0
    %620 = vmatprep.subr.mxu0 0.0
    %621 = vmatpush2.xpose.msra.mxu0 0.0
    %622 = vmatprep.subr.mxu0 0.0
    %623 = vmatpush2.xpose.msra.mxu0 0.0
    %624 = vmatprep.mubr.f32.mxu0 0.0
    %625 = vmatmul.mubr.f32.gmra.mxu0 %v556
    %v626 = vpop.f32.mrf.mxu0
    %v627 = vadd.f32 0.0, %v626
    %v628 = vpop.f32.mrf.mxu0
    %629 = vdwg.mxu0
    %630 = vrot.lane.b32.xlu0 %v170, 96
    %v631 = vpop.permute.xlu0 %630
    %v632 = vsel %vm175, %v170, 0
    %v634 = vsel %vm175, %v631, 0
    %636 = vmatprep.subr.mxu0 0.0
    %637 = vmatpush1.xpose.msra.mxu0 0.0
    %638 = vmatprep.subr.mxu0 0.0
    %639 = vmatpush1.xpose.msra.mxu0 0.0
    %640 = vmatprep.subr.mxu0 0.0
    %641 = vmatpush1.xpose.msra.mxu0 0.0
    %642 = vmatprep.subr.mxu0 0.0
    %643 = vmatpush1.xpose.msra.mxu0 0.0
    %644 = vmatprep.subr.mxu0 0.0
    %645 = vmatpush1.xpose.msra.mxu0 0.0
    %646 = vmatprep.subr.mxu0 0.0
    %647 = vmatpush1.xpose.msra.mxu0 0.0
    %648 = vmatprep.subr.mxu0 0.0
    %649 = vmatpush1.xpose.msra.mxu0 0.0
    %650 = vmatprep.subr.mxu0 0.0
    %651 = vmatpush1.xpose.msra.mxu0 0.0
    %652 = vmatprep.subr.mxu0 0.0
    %653 = vmatpush1.xpose.msra.mxu0 0.0
    %654 = vmatprep.subr.mxu0 0.0
    %655 = vmatpush1.xpose.msra.mxu0 0.0
    %656 = vmatprep.subr.mxu0 0.0
    %657 = vmatpush1.xpose.msra.mxu0 0.0
    %658 = vmatprep.subr.mxu0 0.0
    %659 = vmatpush1.xpose.msra.mxu0 0.0
    %660 = vmatprep.subr.mxu0 0.0
    %661 = vmatpush1.xpose.msra.mxu0 0.0
    %662 = vmatprep.subr.mxu0 0.0
    %663 = vmatpush1.xpose.msra.mxu0 0.0
    %664 = vmatprep.subr.mxu0 0.0
    %665 = vmatpush1.xpose.msra.mxu0 0.0
    %666 = vmatprep.subr.mxu0 0.0
    %667 = vmatpush1.xpose.msra.mxu0 %v634
    %668 = vmatprep.subr.mxu0 0.0
    %669 = vmatpush2.xpose.msra.mxu0 0.0
    %670 = vmatprep.subr.mxu0 0.0
    %671 = vmatpush2.xpose.msra.mxu0 0.0
    %672 = vmatprep.subr.mxu0 0.0
    %673 = vmatpush2.xpose.msra.mxu0 0.0
    %674 = vmatprep.subr.mxu0 0.0
    %675 = vmatpush2.xpose.msra.mxu0 0.0
    %676 = vmatprep.subr.mxu0 0.0
    %677 = vmatpush2.xpose.msra.mxu0 0.0
    %678 = vmatprep.subr.mxu0 0.0
    %679 = vmatpush2.xpose.msra.mxu0 0.0
    %680 = vmatprep.subr.mxu0 0.0
    %681 = vmatpush2.xpose.msra.mxu0 0.0
    %682 = vmatprep.subr.mxu0 0.0
    %683 = vmatpush2.xpose.msra.mxu0 0.0
    %684 = vmatprep.subr.mxu0 0.0
    %685 = vmatpush2.xpose.msra.mxu0 0.0
    %686 = vmatprep.subr.mxu0 0.0
    %687 = vmatpush2.xpose.msra.mxu0 0.0
    %688 = vmatprep.subr.mxu0 0.0
    %689 = vmatpush2.xpose.msra.mxu0 0.0
    %690 = vmatprep.subr.mxu0 0.0
    %691 = vmatpush2.xpose.msra.mxu0 0.0
    %692 = vmatprep.subr.mxu0 0.0
    %693 = vmatpush2.xpose.msra.mxu0 0.0
    %694 = vmatprep.subr.mxu0 0.0
    %695 = vmatpush2.xpose.msra.mxu0 0.0
    %696 = vmatprep.subr.mxu0 0.0
    %697 = vmatpush2.xpose.msra.mxu0 0.0
    %698 = vmatprep.subr.mxu0 0.0
    %699 = vmatpush2.xpose.msra.mxu0 0.0
    %700 = vmatprep.mubr.f32.mxu0 0.0
    %701 = vmatmul.mubr.f32.gmra.mxu0 %v632
    %v702 = vpop.f32.mrf.mxu0
    %v703 = vadd.f32 0.0, %v702
    %v704 = vpop.f32.mrf.mxu0
    %705 = vdwg.mxu0
    %706 = vrot.lane.b32.xlu0 %v172, 96
    %v707 = vpop.permute.xlu0 %706
    %v708 = vsel %vm175, %v172, 0
    %v710 = vsel %vm175, %v707, 0
    %712 = vmatprep.subr.mxu0 0.0
    %713 = vmatpush1.xpose.msra.mxu0 0.0
    %714 = vmatprep.subr.mxu0 0.0
    %715 = vmatpush1.xpose.msra.mxu0 0.0
    %716 = vmatprep.subr.mxu0 0.0
    %717 = vmatpush1.xpose.msra.mxu0 0.0
    %718 = vmatprep.subr.mxu0 0.0
    %719 = vmatpush1.xpose.msra.mxu0 0.0
    %720 = vmatprep.subr.mxu0 0.0
    %721 = vmatpush1.xpose.msra.mxu0 0.0
    %722 = vmatprep.subr.mxu0 0.0
    %723 = vmatpush1.xpose.msra.mxu0 0.0
    %724 = vmatprep.subr.mxu0 0.0
    %725 = vmatpush1.xpose.msra.mxu0 0.0
    %726 = vmatprep.subr.mxu0 0.0
    %727 = vmatpush1.xpose.msra.mxu0 0.0
    %728 = vmatprep.subr.mxu0 0.0
    %729 = vmatpush1.xpose.msra.mxu0 0.0
    %730 = vmatprep.subr.mxu0 0.0
    %731 = vmatpush1.xpose.msra.mxu0 0.0
    %732 = vmatprep.subr.mxu0 0.0
    %733 = vmatpush1.xpose.msra.mxu0 0.0
    %734 = vmatprep.subr.mxu0 0.0
    %735 = vmatpush1.xpose.msra.mxu0 0.0
    %736 = vmatprep.subr.mxu0 0.0
    %737 = vmatpush1.xpose.msra.mxu0 0.0
    %738 = vmatprep.subr.mxu0 0.0
    %739 = vmatpush1.xpose.msra.mxu0 0.0
    %740 = vmatprep.subr.mxu0 0.0
    %741 = vmatpush1.xpose.msra.mxu0 0.0
    %742 = vmatprep.subr.mxu0 0.0
    %743 = vmatpush1.xpose.msra.mxu0 %v710
    %744 = vmatprep.subr.mxu0 0.0
    %745 = vmatpush2.xpose.msra.mxu0 0.0
    %746 = vmatprep.subr.mxu0 0.0
    %747 = vmatpush2.xpose.msra.mxu0 0.0
    %748 = vmatprep.subr.mxu0 0.0
    %749 = vmatpush2.xpose.msra.mxu0 0.0
    %750 = vmatprep.subr.mxu0 0.0
    %751 = vmatpush2.xpose.msra.mxu0 0.0
    %752 = vmatprep.subr.mxu0 0.0
    %753 = vmatpush2.xpose.msra.mxu0 0.0
    %754 = vmatprep.subr.mxu0 0.0
    %755 = vmatpush2.xpose.msra.mxu0 0.0
    %756 = vmatprep.subr.mxu0 0.0
    %757 = vmatpush2.xpose.msra.mxu0 0.0
    %758 = vmatprep.subr.mxu0 0.0
    %759 = vmatpush2.xpose.msra.mxu0 0.0
    %760 = vmatprep.subr.mxu0 0.0
    %761 = vmatpush2.xpose.msra.mxu0 0.0
    %762 = vmatprep.subr.mxu0 0.0
    %763 = vmatpush2.xpose.msra.mxu0 0.0
    %764 = vmatprep.subr.mxu0 0.0
    %765 = vmatpush2.xpose.msra.mxu0 0.0
    %766 = vmatprep.subr.mxu0 0.0
    %767 = vmatpush2.xpose.msra.mxu0 0.0
    %768 = vmatprep.subr.mxu0 0.0
    %769 = vmatpush2.xpose.msra.mxu0 0.0
    %770 = vmatprep.subr.mxu0 0.0
    %771 = vmatpush2.xpose.msra.mxu0 0.0
    %772 = vmatprep.subr.mxu0 0.0
    %773 = vmatpush2.xpose.msra.mxu0 0.0
    %774 = vmatprep.subr.mxu0 0.0
    %775 = vmatpush2.xpose.msra.mxu0 0.0
    %776 = vmatprep.mubr.f32.mxu0 0.0
    %777 = vmatmul.mubr.f32.gmra.mxu0 %v708
    %v778 = vpop.f32.mrf.mxu0
    %v779 = vadd.f32 0.0, %v778
    %v780 = vpop.f32.mrf.mxu0
    %781 = vdwg.mxu0
    %v782 = vsel %vm175, %v247, -inf
    %783 = vmax.xlane.f32.xlu0 %v782
    %v784 = vpop.xlane.xlu0 %783
    %v785 = vsel %vm175, %v323, -inf
    %786 = vmax.xlane.f32.xlu0 %v785
    %v787 = vpop.xlane.xlu0 %786
    %v788 = vsel %vm175, %v399, -inf
    %789 = vmax.xlane.f32.xlu0 %v788
    %v790 = vpop.xlane.xlu0 %789
    %v791 = vsel %vm175, %v475, -inf
    %792 = vmax.xlane.f32.xlu0 %v791
    %v793 = vpop.xlane.xlu0 %792
    %v794 = vsel %vm175, %v551, -inf
    %795 = vmax.xlane.f32.xlu0 %v794
    %v796 = vpop.xlane.xlu0 %795
    %v797 = vsel %vm175, %v627, -inf
    %798 = vmax.xlane.f32.xlu0 %v797
    %v799 = vpop.xlane.xlu0 %798
    %v800 = vsel %vm175, %v703, -inf
    %801 = vmax.xlane.f32.xlu0 %v800
    %v802 = vpop.xlane.xlu0 %801
    %v803 = vsel %vm175, %v779, -inf
    %804 = vmax.xlane.f32.xlu0 %v803
    %v805 = vpop.xlane.xlu0 %804
    %v806 = vsub.f32 %v247, %v784
    %v807 = vsub.f32 %v323, %v787
    %v808 = vsub.f32 %v399, %v790
    %v809 = vsub.f32 %v475, %v793
    %v810 = vsub.f32 %v551, %v796
    %v811 = vsub.f32 %v627, %v799
    %v812 = vsub.f32 %v703, %v802
    %v813 = vsub.f32 %v779, %v805
    %v814 = vmul.f32 %v806, 1.442695
    %v815 = vpow.pop %v814
    %v816 = vmul.f32 %v807, 1.442695
    %v817 = vpow.pop %v816
    %v818 = vmul.f32 %v808, 1.442695
    %v819 = vpow.pop %v818
    %v820 = vmul.f32 %v809, 1.442695
    %v821 = vpow.pop %v820
    %v822 = vmul.f32 %v810, 1.442695
    %v823 = vpow.pop %v822
    %v824 = vmul.f32 %v811, 1.442695
    %v825 = vpow.pop %v824
    %v826 = vmul.f32 %v812, 1.442695
    %v827 = vpow.pop %v826
    %v828 = vmul.f32 %v813, 1.442695
    %v829 = vpow.pop %v828
    %v830 = vsel %vm175, %v815, 0.0
    %831 = vadd.xlane.f32.xlu0 %v830
    %v832 = vpop.xlane.xlu0 %831
    %v833 = vsel %vm175, %v817, 0.0
    %834 = vadd.xlane.f32.xlu0 %v833
    %v835 = vpop.xlane.xlu0 %834
    %v836 = vsel %vm175, %v819, 0.0
    %837 = vadd.xlane.f32.xlu0 %v836
    %v838 = vpop.xlane.xlu0 %837
    %v839 = vsel %vm175, %v821, 0.0
    %840 = vadd.xlane.f32.xlu0 %v839
    %v841 = vpop.xlane.xlu0 %840
    %v842 = vsel %vm175, %v823, 0.0
    %843 = vadd.xlane.f32.xlu0 %v842
    %v844 = vpop.xlane.xlu0 %843
    %v845 = vsel %vm175, %v825, 0.0
    %846 = vadd.xlane.f32.xlu0 %v845
    %v847 = vpop.xlane.xlu0 %846
    %v848 = vsel %vm175, %v827, 0.0
    %849 = vadd.xlane.f32.xlu0 %v848
    %v850 = vpop.xlane.xlu0 %849
    %v851 = vsel %vm175, %v829, 0.0
    %852 = vadd.xlane.f32.xlu0 %v851
    %v853 = vpop.xlane.xlu0 %852
    %v854 = vrcp.pop %v832
    %v855 = vmul.f32 %v815, %v854
    %v856 = vrcp.pop %v835
    %v857 = vmul.f32 %v817, %v856
    %v858 = vrcp.pop %v838
    %v859 = vmul.f32 %v819, %v858
    %v860 = vrcp.pop %v841
    %v861 = vmul.f32 %v821, %v860
    %v862 = vrcp.pop %v844
    %v863 = vmul.f32 %v823, %v862
    %v864 = vrcp.pop %v847
    %v865 = vmul.f32 %v825, %v864
    %v866 = vrcp.pop %v850
    %v867 = vmul.f32 %v827, %v866
    %v868 = vrcp.pop %v853
    %v869 = vmul.f32 %v829, %v868
    %870 = vrot.lane.b32.xlu0 %v151, 64
    %v871 = vpop.permute.xlu0 %870
    %v874 = vsel %vm175, %v855, 0
    %876 = vmatprep.subr.mxu0 0.0
    %877 = vmatpush1.msra.mxu0 0.0
    %878 = vmatprep.subr.mxu0 0.0
    %879 = vmatpush1.msra.mxu0 0.0
    %880 = vmatprep.subr.mxu0 0.0
    %881 = vmatpush1.msra.mxu0 0.0
    %882 = vmatprep.subr.mxu0 0.0
    %883 = vmatpush1.msra.mxu0 0.0
    %884 = vmatprep.subr.mxu0 0.0
    %885 = vmatpush1.msra.mxu0 0.0
    %886 = vmatprep.subr.mxu0 0.0
    %887 = vmatpush1.msra.mxu0 0.0
    %888 = vmatprep.subr.mxu0 0.0
    %889 = vmatpush1.msra.mxu0 0.0
    %890 = vmatprep.subr.mxu0 0.0
    %891 = vmatpush1.msra.mxu0 0.0
    %892 = vmatprep.subr.mxu0 0.0
    %893 = vmatpush1.msra.mxu0 0.0
    %894 = vmatprep.subr.mxu0 0.0
    %895 = vmatpush1.msra.mxu0 0.0
    %896 = vmatprep.subr.mxu0 0.0
    %897 = vmatpush1.msra.mxu0 0.0
    %898 = vmatprep.subr.mxu0 0.0
    %899 = vmatpush1.msra.mxu0 0.0
    %900 = vmatprep.subr.mxu0 0.0
    %901 = vmatpush1.msra.mxu0 0.0
    %902 = vmatprep.subr.mxu0 0.0
    %903 = vmatpush1.msra.mxu0 0.0
    %904 = vmatprep.subr.mxu0 0.0
    %905 = vmatpush1.msra.mxu0 0.0
    %906 = vmatprep.subr.mxu0 0.0
    %907 = vmatpush1.msra.mxu0 %v871
    %908 = vmatprep.subr.mxu0 0.0
    %909 = vmatpush2.msra.mxu0 0.0
    %910 = vmatprep.subr.mxu0 0.0
    %911 = vmatpush2.msra.mxu0 0.0
    %912 = vmatprep.subr.mxu0 0.0
    %913 = vmatpush2.msra.mxu0 0.0
    %914 = vmatprep.subr.mxu0 0.0
    %915 = vmatpush2.msra.mxu0 0.0
    %916 = vmatprep.subr.mxu0 0.0
    %917 = vmatpush2.msra.mxu0 0.0
    %918 = vmatprep.subr.mxu0 0.0
    %919 = vmatpush2.msra.mxu0 0.0
    %920 = vmatprep.subr.mxu0 0.0
    %921 = vmatpush2.msra.mxu0 0.0
    %922 = vmatprep.subr.mxu0 0.0
    %923 = vmatpush2.msra.mxu0 0.0
    %924 = vmatprep.subr.mxu0 0.0
    %925 = vmatpush2.msra.mxu0 0.0
    %926 = vmatprep.subr.mxu0 0.0
    %927 = vmatpush2.msra.mxu0 0.0
    %928 = vmatprep.subr.mxu0 0.0
    %929 = vmatpush2.msra.mxu0 0.0
    %930 = vmatprep.subr.mxu0 0.0
    %931 = vmatpush2.msra.mxu0 0.0
    %932 = vmatprep.subr.mxu0 0.0
    %933 = vmatpush2.msra.mxu0 0.0
    %934 = vmatprep.subr.mxu0 0.0
    %935 = vmatpush2.msra.mxu0 0.0
    %936 = vmatprep.subr.mxu0 0.0
    %937 = vmatpush2.msra.mxu0 0.0
    %938 = vmatprep.subr.mxu0 0.0
    %939 = vmatpush2.msra.mxu0 0.0
    %940 = vmatprep.mubr.f32.mxu0 0.0
    %941 = vmatmul.mubr.f32.gmra.mxu0 %v874
    %v942 = vpop.f32.mrf.mxu0
    %v943 = vadd.f32 0.0, %v942
    %v944 = vpop.f32.mrf.mxu0
    %945 = vdwg.mxu0
    %946 = vrot.lane.b32.xlu0 %v156, 64
    %v947 = vpop.permute.xlu0 %946
    %v950 = vsel %vm175, %v857, 0
    %952 = vmatprep.subr.mxu0 0.0
    %953 = vmatpush1.msra.mxu0 0.0
    %954 = vmatprep.subr.mxu0 0.0
    %955 = vmatpush1.msra.mxu0 0.0
    %956 = vmatprep.subr.mxu0 0.0
    %957 = vmatpush1.msra.mxu0 0.0
    %958 = vmatprep.subr.mxu0 0.0
    %959 = vmatpush1.msra.mxu0 0.0
    %960 = vmatprep.subr.mxu0 0.0
    %961 = vmatpush1.msra.mxu0 0.0
    %962 = vmatprep.subr.mxu0 0.0
    %963 = vmatpush1.msra.mxu0 0.0
    %964 = vmatprep.subr.mxu0 0.0
    %965 = vmatpush1.msra.mxu0 0.0
    %966 = vmatprep.subr.mxu0 0.0
    %967 = vmatpush1.msra.mxu0 0.0
    %968 = vmatprep.subr.mxu0 0.0
    %969 = vmatpush1.msra.mxu0 0.0
    %970 = vmatprep.subr.mxu0 0.0
    %971 = vmatpush1.msra.mxu0 0.0
    %972 = vmatprep.subr.mxu0 0.0
    %973 = vmatpush1.msra.mxu0 0.0
    %974 = vmatprep.subr.mxu0 0.0
    %975 = vmatpush1.msra.mxu0 0.0
    %976 = vmatprep.subr.mxu0 0.0
    %977 = vmatpush1.msra.mxu0 0.0
    %978 = vmatprep.subr.mxu0 0.0
    %979 = vmatpush1.msra.mxu0 0.0
    %980 = vmatprep.subr.mxu0 0.0
    %981 = vmatpush1.msra.mxu0 0.0
    %982 = vmatprep.subr.mxu0 0.0
    %983 = vmatpush1.msra.mxu0 %v947
    %984 = vmatprep.subr.mxu0 0.0
    %985 = vmatpush2.msra.mxu0 0.0
    %986 = vmatprep.subr.mxu0 0.0
    %987 = vmatpush2.msra.mxu0 0.0
    %988 = vmatprep.subr.mxu0 0.0
    %989 = vmatpush2.msra.mxu0 0.0
    %990 = vmatprep.subr.mxu0 0.0
    %991 = vmatpush2.msra.mxu0 0.0
    %992 = vmatprep.subr.mxu0 0.0
    %993 = vmatpush2.msra.mxu0 0.0
    %994 = vmatprep.subr.mxu0 0.0
    %995 = vmatpush2.msra.mxu0 0.0
    %996 = vmatprep.subr.mxu0 0.0
    %997 = vmatpush2.msra.mxu0 0.0
    %998 = vmatprep.subr.mxu0 0.0
    %999 = vmatpush2.msra.mxu0 0.0
    %1000 = vmatprep.subr.mxu0 0.0
    %1001 = vmatpush2.msra.mxu0 0.0
    %1002 = vmatprep.subr.mxu0 0.0
    %1003 = vmatpush2.msra.mxu0 0.0
    %1004 = vmatprep.subr.mxu0 0.0
    %1005 = vmatpush2.msra.mxu0 0.0
    %1006 = vmatprep.subr.mxu0 0.0
    %1007 = vmatpush2.msra.mxu0 0.0
    %1008 = vmatprep.subr.mxu0 0.0
    %1009 = vmatpush2.msra.mxu0 0.0
    %1010 = vmatprep.subr.mxu0 0.0
    %1011 = vmatpush2.msra.mxu0 0.0
    %1012 = vmatprep.subr.mxu0 0.0
    %1013 = vmatpush2.msra.mxu0 0.0
    %1014 = vmatprep.subr.mxu0 0.0
    %1015 = vmatpush2.msra.mxu0 0.0
    %1016 = vmatprep.mubr.f32.mxu0 0.0
    %1017 = vmatmul.mubr.f32.gmra.mxu0 %v950
    %v1018 = vpop.f32.mrf.mxu0
    %v1019 = vadd.f32 0.0, %v1018
    %v1020 = vpop.f32.mrf.mxu0
    %1021 = vdwg.mxu0
    %1022 = vrot.lane.b32.xlu0 %v162, 64
    %v1023 = vpop.permute.xlu0 %1022
    %v1026 = vsel %vm175, %v859, 0
    %1028 = vmatprep.subr.mxu0 0.0
    %1029 = vmatpush1.msra.mxu0 0.0
    %1030 = vmatprep.subr.mxu0 0.0
    %1031 = vmatpush1.msra.mxu0 0.0
    %1032 = vmatprep.subr.mxu0 0.0
    %1033 = vmatpush1.msra.mxu0 0.0
    %1034 = vmatprep.subr.mxu0 0.0
    %1035 = vmatpush1.msra.mxu0 0.0
    %1036 = vmatprep.subr.mxu0 0.0
    %1037 = vmatpush1.msra.mxu0 0.0
    %1038 = vmatprep.subr.mxu0 0.0
    %1039 = vmatpush1.msra.mxu0 0.0
    %1040 = vmatprep.subr.mxu0 0.0
    %1041 = vmatpush1.msra.mxu0 0.0
    %1042 = vmatprep.subr.mxu0 0.0
    %1043 = vmatpush1.msra.mxu0 0.0
    %1044 = vmatprep.subr.mxu0 0.0
    %1045 = vmatpush1.msra.mxu0 0.0
    %1046 = vmatprep.subr.mxu0 0.0
    %1047 = vmatpush1.msra.mxu0 0.0
    %1048 = vmatprep.subr.mxu0 0.0
    %1049 = vmatpush1.msra.mxu0 0.0
    %1050 = vmatprep.subr.mxu0 0.0
    %1051 = vmatpush1.msra.mxu0 0.0
    %1052 = vmatprep.subr.mxu0 0.0
    %1053 = vmatpush1.msra.mxu0 0.0
    %1054 = vmatprep.subr.mxu0 0.0
    %1055 = vmatpush1.msra.mxu0 0.0
    %1056 = vmatprep.subr.mxu0 0.0
    %1057 = vmatpush1.msra.mxu0 0.0
    %1058 = vmatprep.subr.mxu0 0.0
    %1059 = vmatpush1.msra.mxu0 %v1023
    %1060 = vmatprep.subr.mxu0 0.0
    %1061 = vmatpush2.msra.mxu0 0.0
    %1062 = vmatprep.subr.mxu0 0.0
    %1063 = vmatpush2.msra.mxu0 0.0
    %1064 = vmatprep.subr.mxu0 0.0
    %1065 = vmatpush2.msra.mxu0 0.0
    %1066 = vmatprep.subr.mxu0 0.0
    %1067 = vmatpush2.msra.mxu0 0.0
    %1068 = vmatprep.subr.mxu0 0.0
    %1069 = vmatpush2.msra.mxu0 0.0
    %1070 = vmatprep.subr.mxu0 0.0
    %1071 = vmatpush2.msra.mxu0 0.0
    %1072 = vmatprep.subr.mxu0 0.0
    %1073 = vmatpush2.msra.mxu0 0.0
    %1074 = vmatprep.subr.mxu0 0.0
    %1075 = vmatpush2.msra.mxu0 0.0
    %1076 = vmatprep.subr.mxu0 0.0
    %1077 = vmatpush2.msra.mxu0 0.0
    %1078 = vmatprep.subr.mxu0 0.0
    %1079 = vmatpush2.msra.mxu0 0.0
    %1080 = vmatprep.subr.mxu0 0.0
    %1081 = vmatpush2.msra.mxu0 0.0
    %1082 = vmatprep.subr.mxu0 0.0
    %1083 = vmatpush2.msra.mxu0 0.0
    %1084 = vmatprep.subr.mxu0 0.0
    %1085 = vmatpush2.msra.mxu0 0.0
    %1086 = vmatprep.subr.mxu0 0.0
    %1087 = vmatpush2.msra.mxu0 0.0
    %1088 = vmatprep.subr.mxu0 0.0
    %1089 = vmatpush2.msra.mxu0 0.0
    %1090 = vmatprep.subr.mxu0 0.0
    %1091 = vmatpush2.msra.mxu0 0.0
    %1092 = vmatprep.mubr.f32.mxu0 0.0
    %1093 = vmatmul.mubr.f32.gmra.mxu0 %v1026
    %v1094 = vpop.f32.mrf.mxu0
    %v1095 = vadd.f32 0.0, %v1094
    %v1096 = vpop.f32.mrf.mxu0
    %1097 = vdwg.mxu0
    %1098 = vrot.lane.b32.xlu0 %v164, 64
    %v1099 = vpop.permute.xlu0 %1098
    %v1102 = vsel %vm175, %v861, 0
    %1104 = vmatprep.subr.mxu0 0.0
    %1105 = vmatpush1.msra.mxu0 0.0
    %1106 = vmatprep.subr.mxu0 0.0
    %1107 = vmatpush1.msra.mxu0 0.0
    %1108 = vmatprep.subr.mxu0 0.0
    %1109 = vmatpush1.msra.mxu0 0.0
    %1110 = vmatprep.subr.mxu0 0.0
    %1111 = vmatpush1.msra.mxu0 0.0
    %1112 = vmatprep.subr.mxu0 0.0
    %1113 = vmatpush1.msra.mxu0 0.0
    %1114 = vmatprep.subr.mxu0 0.0
    %1115 = vmatpush1.msra.mxu0 0.0
    %1116 = vmatprep.subr.mxu0 0.0
    %1117 = vmatpush1.msra.mxu0 0.0
    %1118 = vmatprep.subr.mxu0 0.0
    %1119 = vmatpush1.msra.mxu0 0.0
    %1120 = vmatprep.subr.mxu0 0.0
    %1121 = vmatpush1.msra.mxu0 0.0
    %1122 = vmatprep.subr.mxu0 0.0
    %1123 = vmatpush1.msra.mxu0 0.0
    %1124 = vmatprep.subr.mxu0 0.0
    %1125 = vmatpush1.msra.mxu0 0.0
    %1126 = vmatprep.subr.mxu0 0.0
    %1127 = vmatpush1.msra.mxu0 0.0
    %1128 = vmatprep.subr.mxu0 0.0
    %1129 = vmatpush1.msra.mxu0 0.0
    %1130 = vmatprep.subr.mxu0 0.0
    %1131 = vmatpush1.msra.mxu0 0.0
    %1132 = vmatprep.subr.mxu0 0.0
    %1133 = vmatpush1.msra.mxu0 0.0
    %1134 = vmatprep.subr.mxu0 0.0
    %1135 = vmatpush1.msra.mxu0 %v1099
    %1136 = vmatprep.subr.mxu0 0.0
    %1137 = vmatpush2.msra.mxu0 0.0
    %1138 = vmatprep.subr.mxu0 0.0
    %1139 = vmatpush2.msra.mxu0 0.0
    %1140 = vmatprep.subr.mxu0 0.0
    %1141 = vmatpush2.msra.mxu0 0.0
    %1142 = vmatprep.subr.mxu0 0.0
    %1143 = vmatpush2.msra.mxu0 0.0
    %1144 = vmatprep.subr.mxu0 0.0
    %1145 = vmatpush2.msra.mxu0 0.0
    %1146 = vmatprep.subr.mxu0 0.0
    %1147 = vmatpush2.msra.mxu0 0.0
    %1148 = vmatprep.subr.mxu0 0.0
    %1149 = vmatpush2.msra.mxu0 0.0
    %1150 = vmatprep.subr.mxu0 0.0
    %1151 = vmatpush2.msra.mxu0 0.0
    %1152 = vmatprep.subr.mxu0 0.0
    %1153 = vmatpush2.msra.mxu0 0.0
    %1154 = vmatprep.subr.mxu0 0.0
    %1155 = vmatpush2.msra.mxu0 0.0
    %1156 = vmatprep.subr.mxu0 0.0
    %1157 = vmatpush2.msra.mxu0 0.0
    %1158 = vmatprep.subr.mxu0 0.0
    %1159 = vmatpush2.msra.mxu0 0.0
    %1160 = vmatprep.subr.mxu0 0.0
    %1161 = vmatpush2.msra.mxu0 0.0
    %1162 = vmatprep.subr.mxu0 0.0
    %1163 = vmatpush2.msra.mxu0 0.0
    %1164 = vmatprep.subr.mxu0 0.0
    %1165 = vmatpush2.msra.mxu0 0.0
    %1166 = vmatprep.subr.mxu0 0.0
    %1167 = vmatpush2.msra.mxu0 0.0
    %1168 = vmatprep.mubr.f32.mxu0 0.0
    %1169 = vmatmul.mubr.f32.gmra.mxu0 %v1102
    %v1170 = vpop.f32.mrf.mxu0
    %v1171 = vadd.f32 0.0, %v1170
    %v1172 = vpop.f32.mrf.mxu0
    %1173 = vdwg.mxu0
    %1174 = vrot.lane.b32.xlu0 %v166, 64
    %v1175 = vpop.permute.xlu0 %1174
    %v1178 = vsel %vm175, %v863, 0
    %1180 = vmatprep.subr.mxu0 0.0
    %1181 = vmatpush1.msra.mxu0 0.0
    %1182 = vmatprep.subr.mxu0 0.0
    %1183 = vmatpush1.msra.mxu0 0.0
    %1184 = vmatprep.subr.mxu0 0.0
    %1185 = vmatpush1.msra.mxu0 0.0
    %1186 = vmatprep.subr.mxu0 0.0
    %1187 = vmatpush1.msra.mxu0 0.0
    %1188 = vmatprep.subr.mxu0 0.0
    %1189 = vmatpush1.msra.mxu0 0.0
    %1190 = vmatprep.subr.mxu0 0.0
    %1191 = vmatpush1.msra.mxu0 0.0
    %1192 = vmatprep.subr.mxu0 0.0
    %1193 = vmatpush1.msra.mxu0 0.0
    %1194 = vmatprep.subr.mxu0 0.0
    %1195 = vmatpush1.msra.mxu0 0.0
    %1196 = vmatprep.subr.mxu0 0.0
    %1197 = vmatpush1.msra.mxu0 0.0
    %1198 = vmatprep.subr.mxu0 0.0
    %1199 = vmatpush1.msra.mxu0 0.0
    %1200 = vmatprep.subr.mxu0 0.0
    %1201 = vmatpush1.msra.mxu0 0.0
    %1202 = vmatprep.subr.mxu0 0.0
    %1203 = vmatpush1.msra.mxu0 0.0
    %1204 = vmatprep.subr.mxu0 0.0
    %1205 = vmatpush1.msra.mxu0 0.0
    %1206 = vmatprep.subr.mxu0 0.0
    %1207 = vmatpush1.msra.mxu0 0.0
    %1208 = vmatprep.subr.mxu0 0.0
    %1209 = vmatpush1.msra.mxu0 0.0
    %1210 = vmatprep.subr.mxu0 0.0
    %1211 = vmatpush1.msra.mxu0 %v1175
    %1212 = vmatprep.subr.mxu0 0.0
    %1213 = vmatpush2.msra.mxu0 0.0
    %1214 = vmatprep.subr.mxu0 0.0
    %1215 = vmatpush2.msra.mxu0 0.0
    %1216 = vmatprep.subr.mxu0 0.0
    %1217 = vmatpush2.msra.mxu0 0.0
    %1218 = vmatprep.subr.mxu0 0.0
    %1219 = vmatpush2.msra.mxu0 0.0
    %1220 = vmatprep.subr.mxu0 0.0
    %1221 = vmatpush2.msra.mxu0 0.0
    %1222 = vmatprep.subr.mxu0 0.0
    %1223 = vmatpush2.msra.mxu0 0.0
    %1224 = vmatprep.subr.mxu0 0.0
    %1225 = vmatpush2.msra.mxu0 0.0
    %1226 = vmatprep.subr.mxu0 0.0
    %1227 = vmatpush2.msra.mxu0 0.0
    %1228 = vmatprep.subr.mxu0 0.0
    %1229 = vmatpush2.msra.mxu0 0.0
    %1230 = vmatprep.subr.mxu0 0.0
    %1231 = vmatpush2.msra.mxu0 0.0
    %1232 = vmatprep.subr.mxu0 0.0
    %1233 = vmatpush2.msra.mxu0 0.0
    %1234 = vmatprep.subr.mxu0 0.0
    %1235 = vmatpush2.msra.mxu0 0.0
    %1236 = vmatprep.subr.mxu0 0.0
    %1237 = vmatpush2.msra.mxu0 0.0
    %1238 = vmatprep.subr.mxu0 0.0
    %1239 = vmatpush2.msra.mxu0 0.0
    %1240 = vmatprep.subr.mxu0 0.0
    %1241 = vmatpush2.msra.mxu0 0.0
    %1242 = vmatprep.subr.mxu0 0.0
    %1243 = vmatpush2.msra.mxu0 0.0
    %1244 = vmatprep.mubr.f32.mxu0 0.0
    %1245 = vmatmul.mubr.f32.gmra.mxu0 %v1178
    %v1246 = vpop.f32.mrf.mxu0
    %v1247 = vadd.f32 0.0, %v1246
    %v1248 = vpop.f32.mrf.mxu0
    %1249 = vdwg.mxu0
    %1250 = vrot.lane.b32.xlu0 %v168, 64
    %v1251 = vpop.permute.xlu0 %1250
    %v1254 = vsel %vm175, %v865, 0
    %1256 = vmatprep.subr.mxu0 0.0
    %1257 = vmatpush1.msra.mxu0 0.0
    %1258 = vmatprep.subr.mxu0 0.0
    %1259 = vmatpush1.msra.mxu0 0.0
    %1260 = vmatprep.subr.mxu0 0.0
    %1261 = vmatpush1.msra.mxu0 0.0
    %1262 = vmatprep.subr.mxu0 0.0
    %1263 = vmatpush1.msra.mxu0 0.0
    %1264 = vmatprep.subr.mxu0 0.0
    %1265 = vmatpush1.msra.mxu0 0.0
    %1266 = vmatprep.subr.mxu0 0.0
    %1267 = vmatpush1.msra.mxu0 0.0
    %1268 = vmatprep.subr.mxu0 0.0
    %1269 = vmatpush1.msra.mxu0 0.0
    %1270 = vmatprep.subr.mxu0 0.0
    %1271 = vmatpush1.msra.mxu0 0.0
    %1272 = vmatprep.subr.mxu0 0.0
    %1273 = vmatpush1.msra.mxu0 0.0
    %1274 = vmatprep.subr.mxu0 0.0
    %1275 = vmatpush1.msra.mxu0 0.0
    %1276 = vmatprep.subr.mxu0 0.0
    %1277 = vmatpush1.msra.mxu0 0.0
    %1278 = vmatprep.subr.mxu0 0.0
    %1279 = vmatpush1.msra.mxu0 0.0
    %1280 = vmatprep.subr.mxu0 0.0
    %1281 = vmatpush1.msra.mxu0 0.0
    %1282 = vmatprep.subr.mxu0 0.0
    %1283 = vmatpush1.msra.mxu0 0.0
    %1284 = vmatprep.subr.mxu0 0.0
    %1285 = vmatpush1.msra.mxu0 0.0
    %1286 = vmatprep.subr.mxu0 0.0
    %1287 = vmatpush1.msra.mxu0 %v1251
    %1288 = vmatprep.subr.mxu0 0.0
    %1289 = vmatpush2.msra.mxu0 0.0
    %1290 = vmatprep.subr.mxu0 0.0
    %1291 = vmatpush2.msra.mxu0 0.0
    %1292 = vmatprep.subr.mxu0 0.0
    %1293 = vmatpush2.msra.mxu0 0.0
    %1294 = vmatprep.subr.mxu0 0.0
    %1295 = vmatpush2.msra.mxu0 0.0
    %1296 = vmatprep.subr.mxu0 0.0
    %1297 = vmatpush2.msra.mxu0 0.0
    %1298 = vmatprep.subr.mxu0 0.0
    %1299 = vmatpush2.msra.mxu0 0.0
    %1300 = vmatprep.subr.mxu0 0.0
    %1301 = vmatpush2.msra.mxu0 0.0
    %1302 = vmatprep.subr.mxu0 0.0
    %1303 = vmatpush2.msra.mxu0 0.0
    %1304 = vmatprep.subr.mxu0 0.0
    %1305 = vmatpush2.msra.mxu0 0.0
    %1306 = vmatprep.subr.mxu0 0.0
    %1307 = vmatpush2.msra.mxu0 0.0
    %1308 = vmatprep.subr.mxu0 0.0
    %1309 = vmatpush2.msra.mxu0 0.0
    %1310 = vmatprep.subr.mxu0 0.0
    %1311 = vmatpush2.msra.mxu0 0.0
    %1312 = vmatprep.subr.mxu0 0.0
    %1313 = vmatpush2.msra.mxu0 0.0
    %1314 = vmatprep.subr.mxu0 0.0
    %1315 = vmatpush2.msra.mxu0 0.0
    %1316 = vmatprep.subr.mxu0 0.0
    %1317 = vmatpush2.msra.mxu0 0.0
    %1318 = vmatprep.subr.mxu0 0.0
    %1319 = vmatpush2.msra.mxu0 0.0
    %1320 = vmatprep.mubr.f32.mxu0 0.0
    %1321 = vmatmul.mubr.f32.gmra.mxu0 %v1254
    %v1322 = vpop.f32.mrf.mxu0
    %v1323 = vadd.f32 0.0, %v1322
    %v1324 = vpop.f32.mrf.mxu0
    %1325 = vdwg.mxu0
    %1326 = vrot.lane.b32.xlu0 %v170, 64
    %v1327 = vpop.permute.xlu0 %1326
    %v1330 = vsel %vm175, %v867, 0
    %1332 = vmatprep.subr.mxu0 0.0
    %1333 = vmatpush1.msra.mxu0 0.0
    %1334 = vmatprep.subr.mxu0 0.0
    %1335 = vmatpush1.msra.mxu0 0.0
    %1336 = vmatprep.subr.mxu0 0.0
    %1337 = vmatpush1.msra.mxu0 0.0
    %1338 = vmatprep.subr.mxu0 0.0
    %1339 = vmatpush1.msra.mxu0 0.0
    %1340 = vmatprep.subr.mxu0 0.0
    %1341 = vmatpush1.msra.mxu0 0.0
    %1342 = vmatprep.subr.mxu0 0.0
    %1343 = vmatpush1.msra.mxu0 0.0
    %1344 = vmatprep.subr.mxu0 0.0
    %1345 = vmatpush1.msra.mxu0 0.0
    %1346 = vmatprep.subr.mxu0 0.0
    %1347 = vmatpush1.msra.mxu0 0.0
    %1348 = vmatprep.subr.mxu0 0.0
    %1349 = vmatpush1.msra.mxu0 0.0
    %1350 = vmatprep.subr.mxu0 0.0
    %1351 = vmatpush1.msra.mxu0 0.0
    %1352 = vmatprep.subr.mxu0 0.0
    %1353 = vmatpush1.msra.mxu0 0.0
    %1354 = vmatprep.subr.mxu0 0.0
    %1355 = vmatpush1.msra.mxu0 0.0
    %1356 = vmatprep.subr.mxu0 0.0
    %1357 = vmatpush1.msra.mxu0 0.0
    %1358 = vmatprep.subr.mxu0 0.0
    %1359 = vmatpush1.msra.mxu0 0.0
    %1360 = vmatprep.subr.mxu0 0.0
    %1361 = vmatpush1.msra.mxu0 0.0
    %1362 = vmatprep.subr.mxu0 0.0
    %1363 = vmatpush1.msra.mxu0 %v1327
    %1364 = vmatprep.subr.mxu0 0.0
    %1365 = vmatpush2.msra.mxu0 0.0
    %1366 = vmatprep.subr.mxu0 0.0
    %1367 = vmatpush2.msra.mxu0 0.0
    %1368 = vmatprep.subr.mxu0 0.0
    %1369 = vmatpush2.msra.mxu0 0.0
    %1370 = vmatprep.subr.mxu0 0.0
    %1371 = vmatpush2.msra.mxu0 0.0
    %1372 = vmatprep.subr.mxu0 0.0
    %1373 = vmatpush2.msra.mxu0 0.0
    %1374 = vmatprep.subr.mxu0 0.0
    %1375 = vmatpush2.msra.mxu0 0.0
    %1376 = vmatprep.subr.mxu0 0.0
    %1377 = vmatpush2.msra.mxu0 0.0
    %1378 = vmatprep.subr.mxu0 0.0
    %1379 = vmatpush2.msra.mxu0 0.0
    %1380 = vmatprep.subr.mxu0 0.0
    %1381 = vmatpush2.msra.mxu0 0.0
    %1382 = vmatprep.subr.mxu0 0.0
    %1383 = vmatpush2.msra.mxu0 0.0
    %1384 = vmatprep.subr.mxu0 0.0
    %1385 = vmatpush2.msra.mxu0 0.0
    %1386 = vmatprep.subr.mxu0 0.0
    %1387 = vmatpush2.msra.mxu0 0.0
    %1388 = vmatprep.subr.mxu0 0.0
    %1389 = vmatpush2.msra.mxu0 0.0
    %1390 = vmatprep.subr.mxu0 0.0
    %1391 = vmatpush2.msra.mxu0 0.0
    %1392 = vmatprep.subr.mxu0 0.0
    %1393 = vmatpush2.msra.mxu0 0.0
    %1394 = vmatprep.subr.mxu0 0.0
    %1395 = vmatpush2.msra.mxu0 0.0
    %1396 = vmatprep.mubr.f32.mxu0 0.0
    %1397 = vmatmul.mubr.f32.gmra.mxu0 %v1330
    %v1398 = vpop.f32.mrf.mxu0
    %v1399 = vadd.f32 0.0, %v1398
    %v1400 = vpop.f32.mrf.mxu0
    %1401 = vdwg.mxu0
    %1402 = vrot.lane.b32.xlu0 %v172, 64
    %v1403 = vpop.permute.xlu0 %1402
    %v1406 = vsel %vm175, %v869, 0
    %1408 = vmatprep.subr.mxu0 0.0
    %1409 = vmatpush1.msra.mxu0 0.0
    %1410 = vmatprep.subr.mxu0 0.0
    %1411 = vmatpush1.msra.mxu0 0.0
    %1412 = vmatprep.subr.mxu0 0.0
    %1413 = vmatpush1.msra.mxu0 0.0
    %1414 = vmatprep.subr.mxu0 0.0
    %1415 = vmatpush1.msra.mxu0 0.0
    %1416 = vmatprep.subr.mxu0 0.0
    %1417 = vmatpush1.msra.mxu0 0.0
    %1418 = vmatprep.subr.mxu0 0.0
    %1419 = vmatpush1.msra.mxu0 0.0
    %1420 = vmatprep.subr.mxu0 0.0
    %1421 = vmatpush1.msra.mxu0 0.0
    %1422 = vmatprep.subr.mxu0 0.0
    %1423 = vmatpush1.msra.mxu0 0.0
    %1424 = vmatprep.subr.mxu0 0.0
    %1425 = vmatpush1.msra.mxu0 0.0
    %1426 = vmatprep.subr.mxu0 0.0
    %1427 = vmatpush1.msra.mxu0 0.0
    %1428 = vmatprep.subr.mxu0 0.0
    %1429 = vmatpush1.msra.mxu0 0.0
    %1430 = vmatprep.subr.mxu0 0.0
    %1431 = vmatpush1.msra.mxu0 0.0
    %1432 = vmatprep.subr.mxu0 0.0
    %1433 = vmatpush1.msra.mxu0 0.0
    %1434 = vmatprep.subr.mxu0 0.0
    %1435 = vmatpush1.msra.mxu0 0.0
    %1436 = vmatprep.subr.mxu0 0.0
    %1437 = vmatpush1.msra.mxu0 0.0
    %1438 = vmatprep.subr.mxu0 0.0
    %1439 = vmatpush1.msra.mxu0 %v1403
    %1440 = vmatprep.subr.mxu0 0.0
    %1441 = vmatpush2.msra.mxu0 0.0
    %1442 = vmatprep.subr.mxu0 0.0
    %1443 = vmatpush2.msra.mxu0 0.0
    %1444 = vmatprep.subr.mxu0 0.0
    %1445 = vmatpush2.msra.mxu0 0.0
    %1446 = vmatprep.subr.mxu0 0.0
    %1447 = vmatpush2.msra.mxu0 0.0
    %1448 = vmatprep.subr.mxu0 0.0
    %1449 = vmatpush2.msra.mxu0 0.0
    %1450 = vmatprep.subr.mxu0 0.0
    %1451 = vmatpush2.msra.mxu0 0.0
    %1452 = vmatprep.subr.mxu0 0.0
    %1453 = vmatpush2.msra.mxu0 0.0
    %1454 = vmatprep.subr.mxu0 0.0
    %1455 = vmatpush2.msra.mxu0 0.0
    %1456 = vmatprep.subr.mxu0 0.0
    %1457 = vmatpush2.msra.mxu0 0.0
    %1458 = vmatprep.subr.mxu0 0.0
    %1459 = vmatpush2.msra.mxu0 0.0
    %1460 = vmatprep.subr.mxu0 0.0
    %1461 = vmatpush2.msra.mxu0 0.0
    %1462 = vmatprep.subr.mxu0 0.0
    %1463 = vmatpush2.msra.mxu0 0.0
    %1464 = vmatprep.subr.mxu0 0.0
    %1465 = vmatpush2.msra.mxu0 0.0
    %1466 = vmatprep.subr.mxu0 0.0
    %1467 = vmatpush2.msra.mxu0 0.0
    %1468 = vmatprep.subr.mxu0 0.0
    %1469 = vmatpush2.msra.mxu0 0.0
    %1470 = vmatprep.subr.mxu0 0.0
    %1471 = vmatpush2.msra.mxu0 0.0
    %1472 = vmatprep.mubr.f32.mxu0 0.0
    %1473 = vmatmul.mubr.f32.gmra.mxu0 %v1406
    %v1474 = vpop.f32.mrf.mxu0
    %v1475 = vadd.f32 0.0, %v1474
    %v1476 = vpop.f32.mrf.mxu0
    %1477 = vdwg.mxu0
    %v1479 = vsel %vm175, %v1095, 0
    %v1482 = vsel %vm175, %v1171, 0
    %1484 = vmatprep.subr.mxu0 0.0
    %1485 = vmatpush1.msra.mxu0 0.0
    %1486 = vmatprep.subr.mxu0 0.0
    %1487 = vmatpush1.msra.mxu0 0.0
    %1488 = vmatprep.subr.mxu0 0.0
    %1489 = vmatpush1.msra.mxu0 0.0
    %1490 = vmatprep.subr.mxu0 0.0
    %1491 = vmatpush1.msra.mxu0 0.0
    %1492 = vmatprep.subr.mxu0 0.0
    %1493 = vmatpush1.msra.mxu0 0.0
    %1494 = vmatprep.subr.mxu0 0.0
    %1495 = vmatpush1.msra.mxu0 0.0
    %1496 = vmatprep.subr.mxu0 0.0
    %1497 = vmatpush1.msra.mxu0 0.0
    %1498 = vmatprep.subr.mxu0 0.0
    %1499 = vmatpush1.msra.mxu0 0.0
    %1500 = vmatprep.subr.mxu0 0.0
    %1501 = vmatpush1.msra.mxu0 0.0
    %1502 = vmatprep.subr.mxu0 0.0
    %1503 = vmatpush1.msra.mxu0 0.0
    %1504 = vmatprep.subr.mxu0 0.0
    %1505 = vmatpush1.msra.mxu0 0.0
    %1506 = vmatprep.subr.mxu0 0.0
    %1507 = vmatpush1.msra.mxu0 0.0
    %1508 = vmatprep.subr.mxu0 0.0
    %1509 = vmatpush1.msra.mxu0 0.0
    %1510 = vmatprep.subr.mxu0 0.0
    %1511 = vmatpush1.msra.mxu0 0.0
    %1512 = vmatprep.subr.mxu0 0.0
    %1513 = vmatpush1.msra.mxu0 0.0
    %1514 = vmatprep.subr.mxu0 0.0
    %1515 = vmatpush1.msra.mxu0 %v62
    %1516 = vmatprep.subr.mxu0 0.0
    %1517 = vmatpush2.msra.mxu0 0.0
    %1518 = vmatprep.subr.mxu0 0.0
    %1519 = vmatpush2.msra.mxu0 0.0
    %1520 = vmatprep.subr.mxu0 0.0
    %1521 = vmatpush2.msra.mxu0 0.0
    %1522 = vmatprep.subr.mxu0 0.0
    %1523 = vmatpush2.msra.mxu0 0.0
    %1524 = vmatprep.subr.mxu0 0.0
    %1525 = vmatpush2.msra.mxu0 0.0
    %1526 = vmatprep.subr.mxu0 0.0
    %1527 = vmatpush2.msra.mxu0 0.0
    %1528 = vmatprep.subr.mxu0 0.0
    %1529 = vmatpush2.msra.mxu0 0.0
    %1530 = vmatprep.subr.mxu0 0.0
    %1531 = vmatpush2.msra.mxu0 0.0
    %1532 = vmatprep.subr.mxu0 0.0
    %1533 = vmatpush2.msra.mxu0 0.0
    %1534 = vmatprep.subr.mxu0 0.0
    %1535 = vmatpush2.msra.mxu0 0.0
    %1536 = vmatprep.subr.mxu0 0.0
    %1537 = vmatpush2.msra.mxu0 0.0
    %1538 = vmatprep.subr.mxu0 0.0
    %1539 = vmatpush2.msra.mxu0 0.0
    %1540 = vmatprep.subr.mxu0 0.0
    %1541 = vmatpush2.msra.mxu0 0.0
    %1542 = vmatprep.subr.mxu0 0.0
    %1543 = vmatpush2.msra.mxu0 0.0
    %1544 = vmatprep.subr.mxu0 0.0
    %1545 = vmatpush2.msra.mxu0 0.0
    %1546 = vmatprep.subr.mxu0 0.0
    %1547 = vmatpush2.msra.mxu0 0.0
    %1548 = vmatprep.mubr.f32.mxu0 0.0
    %1549 = vmatmul.mubr.f32.gmra.mxu0 %v1479
    %v1550 = vpop.f32.mrf.mxu0
    %v1551 = vadd.f32 0.0, %v1550
    %v1552 = vpop.f32.mrf.mxu0
    %1553 = vmatprep.mubr.f32.mxu0 0.0
    %1554 = vmatmul.mubr.f32.gmra.mxu0 %v1482
    %v1555 = vpop.f32.mrf.mxu0
    %v1556 = vadd.f32 0.0, %v1555
    %v1557 = vpop.f32.mrf.mxu0
    %1558 = vdwg.mxu0
    %v1560 = vsel %vm175, %v943, 0
    %v1563 = vsel %vm175, %v1019, 0
    %1565 = vmatprep.subr.mxu0 0.0
    %1566 = vmatpush1.msra.mxu0 0.0
    %1567 = vmatprep.subr.mxu0 0.0
    %1568 = vmatpush1.msra.mxu0 0.0
    %1569 = vmatprep.subr.mxu0 0.0
    %1570 = vmatpush1.msra.mxu0 0.0
    %1571 = vmatprep.subr.mxu0 0.0
    %1572 = vmatpush1.msra.mxu0 0.0
    %1573 = vmatprep.subr.mxu0 0.0
    %1574 = vmatpush1.msra.mxu0 0.0
    %1575 = vmatprep.subr.mxu0 0.0
    %1576 = vmatpush1.msra.mxu0 0.0
    %1577 = vmatprep.subr.mxu0 0.0
    %1578 = vmatpush1.msra.mxu0 0.0
    %1579 = vmatprep.subr.mxu0 0.0
    %1580 = vmatpush1.msra.mxu0 0.0
    %1581 = vmatprep.subr.mxu0 0.0
    %1582 = vmatpush1.msra.mxu0 0.0
    %1583 = vmatprep.subr.mxu0 0.0
    %1584 = vmatpush1.msra.mxu0 0.0
    %1585 = vmatprep.subr.mxu0 0.0
    %1586 = vmatpush1.msra.mxu0 0.0
    %1587 = vmatprep.subr.mxu0 0.0
    %1588 = vmatpush1.msra.mxu0 0.0
    %1589 = vmatprep.subr.mxu0 0.0
    %1590 = vmatpush1.msra.mxu0 0.0
    %1591 = vmatprep.subr.mxu0 0.0
    %1592 = vmatpush1.msra.mxu0 0.0
    %1593 = vmatprep.subr.mxu0 0.0
    %1594 = vmatpush1.msra.mxu0 0.0
    %1595 = vmatprep.subr.mxu0 0.0
    %1596 = vmatpush1.msra.mxu0 %v61
    %1597 = vmatprep.subr.mxu0 0.0
    %1598 = vmatpush2.msra.mxu0 0.0
    %1599 = vmatprep.subr.mxu0 0.0
    %1600 = vmatpush2.msra.mxu0 0.0
    %1601 = vmatprep.subr.mxu0 0.0
    %1602 = vmatpush2.msra.mxu0 0.0
    %1603 = vmatprep.subr.mxu0 0.0
    %1604 = vmatpush2.msra.mxu0 0.0
    %1605 = vmatprep.subr.mxu0 0.0
    %1606 = vmatpush2.msra.mxu0 0.0
    %1607 = vmatprep.subr.mxu0 0.0
    %1608 = vmatpush2.msra.mxu0 0.0
    %1609 = vmatprep.subr.mxu0 0.0
    %1610 = vmatpush2.msra.mxu0 0.0
    %1611 = vmatprep.subr.mxu0 0.0
    %1612 = vmatpush2.msra.mxu0 0.0
    %1613 = vmatprep.subr.mxu0 0.0
    %1614 = vmatpush2.msra.mxu0 0.0
    %1615 = vmatprep.subr.mxu0 0.0
    %1616 = vmatpush2.msra.mxu0 0.0
    %1617 = vmatprep.subr.mxu0 0.0
    %1618 = vmatpush2.msra.mxu0 0.0
    %1619 = vmatprep.subr.mxu0 0.0
    %1620 = vmatpush2.msra.mxu0 0.0
    %1621 = vmatprep.subr.mxu0 0.0
    %1622 = vmatpush2.msra.mxu0 0.0
    %1623 = vmatprep.subr.mxu0 0.0
    %1624 = vmatpush2.msra.mxu0 0.0
    %1625 = vmatprep.subr.mxu0 0.0
    %1626 = vmatpush2.msra.mxu0 0.0
    %1627 = vmatprep.subr.mxu0 0.0
    %1628 = vmatpush2.msra.mxu0 0.0
    %1629 = vmatprep.mubr.f32.mxu0 0.0
    %1630 = vmatmul.mubr.f32.gmra.mxu0 %v1560
    %v1631 = vpop.f32.mrf.mxu0
    %v1632 = vadd.f32 %v1551, %v1631
    %v1633 = vpop.f32.mrf.mxu0
    %1634 = vmatprep.mubr.f32.mxu0 0.0
    %1635 = vmatmul.mubr.f32.gmra.mxu0 %v1563
    %v1636 = vpop.f32.mrf.mxu0
    %v1637 = vadd.f32 %v1556, %v1636
    %v1638 = vpop.f32.mrf.mxu0
    %1639 = vdwg.mxu0
    %v1641 = vsel %vm175, %v1247, 0
    %v1644 = vsel %vm175, %v1323, 0
    %1646 = vmatprep.subr.mxu0 0.0
    %1647 = vmatpush1.msra.mxu0 0.0
    %1648 = vmatprep.subr.mxu0 0.0
    %1649 = vmatpush1.msra.mxu0 0.0
    %1650 = vmatprep.subr.mxu0 0.0
    %1651 = vmatpush1.msra.mxu0 0.0
    %1652 = vmatprep.subr.mxu0 0.0
    %1653 = vmatpush1.msra.mxu0 0.0
    %1654 = vmatprep.subr.mxu0 0.0
    %1655 = vmatpush1.msra.mxu0 0.0
    %1656 = vmatprep.subr.mxu0 0.0
    %1657 = vmatpush1.msra.mxu0 0.0
    %1658 = vmatprep.subr.mxu0 0.0
    %1659 = vmatpush1.msra.mxu0 0.0
    %1660 = vmatprep.subr.mxu0 0.0
    %1661 = vmatpush1.msra.mxu0 0.0
    %1662 = vmatprep.subr.mxu0 0.0
    %1663 = vmatpush1.msra.mxu0 0.0
    %1664 = vmatprep.subr.mxu0 0.0
    %1665 = vmatpush1.msra.mxu0 0.0
    %1666 = vmatprep.subr.mxu0 0.0
    %1667 = vmatpush1.msra.mxu0 0.0
    %1668 = vmatprep.subr.mxu0 0.0
    %1669 = vmatpush1.msra.mxu0 0.0
    %1670 = vmatprep.subr.mxu0 0.0
    %1671 = vmatpush1.msra.mxu0 0.0
    %1672 = vmatprep.subr.mxu0 0.0
    %1673 = vmatpush1.msra.mxu0 0.0
    %1674 = vmatprep.subr.mxu0 0.0
    %1675 = vmatpush1.msra.mxu0 0.0
    %1676 = vmatprep.subr.mxu0 0.0
    %1677 = vmatpush1.msra.mxu0 %v63
    %1678 = vmatprep.subr.mxu0 0.0
    %1679 = vmatpush2.msra.mxu0 0.0
    %1680 = vmatprep.subr.mxu0 0.0
    %1681 = vmatpush2.msra.mxu0 0.0
    %1682 = vmatprep.subr.mxu0 0.0
    %1683 = vmatpush2.msra.mxu0 0.0
    %1684 = vmatprep.subr.mxu0 0.0
    %1685 = vmatpush2.msra.mxu0 0.0
    %1686 = vmatprep.subr.mxu0 0.0
    %1687 = vmatpush2.msra.mxu0 0.0
    %1688 = vmatprep.subr.mxu0 0.0
    %1689 = vmatpush2.msra.mxu0 0.0
    %1690 = vmatprep.subr.mxu0 0.0
    %1691 = vmatpush2.msra.mxu0 0.0
    %1692 = vmatprep.subr.mxu0 0.0
    %1693 = vmatpush2.msra.mxu0 0.0
    %1694 = vmatprep.subr.mxu0 0.0
    %1695 = vmatpush2.msra.mxu0 0.0
    %1696 = vmatprep.subr.mxu0 0.0
    %1697 = vmatpush2.msra.mxu0 0.0
    %1698 = vmatprep.subr.mxu0 0.0
    %1699 = vmatpush2.msra.mxu0 0.0
    %1700 = vmatprep.subr.mxu0 0.0
    %1701 = vmatpush2.msra.mxu0 0.0
    %1702 = vmatprep.subr.mxu0 0.0
    %1703 = vmatpush2.msra.mxu0 0.0
    %1704 = vmatprep.subr.mxu0 0.0
    %1705 = vmatpush2.msra.mxu0 0.0
    %1706 = vmatprep.subr.mxu0 0.0
    %1707 = vmatpush2.msra.mxu0 0.0
    %1708 = vmatprep.subr.mxu0 0.0
    %1709 = vmatpush2.msra.mxu0 0.0
    %1710 = vmatprep.mubr.f32.mxu0 0.0
    %1711 = vmatmul.mubr.f32.gmra.mxu0 %v1641
    %v1712 = vpop.f32.mrf.mxu0
    %v1713 = vadd.f32 0.0, %v1712
    %v1714 = vpop.f32.mrf.mxu0
    %1715 = vmatprep.mubr.f32.mxu0 0.0
    %1716 = vmatmul.mubr.f32.gmra.mxu0 %v1644
    %v1717 = vpop.f32.mrf.mxu0
    %v1718 = vadd.f32 0.0, %v1717
    %v1719 = vpop.f32.mrf.mxu0
    %1720 = vdwg.mxu0
    %v1721 = vadd.f32 %v1632, %v1713
    %v1722 = vadd.f32 %v1637, %v1718
    %v1724 = vsel %vm175, %v1399, 0
    %v1727 = vsel %vm175, %v1475, 0
    %1729 = vmatprep.subr.mxu0 0.0
    %1730 = vmatpush1.msra.mxu0 0.0
    %1731 = vmatprep.subr.mxu0 0.0
    %1732 = vmatpush1.msra.mxu0 0.0
    %1733 = vmatprep.subr.mxu0 0.0
    %1734 = vmatpush1.msra.mxu0 0.0
    %1735 = vmatprep.subr.mxu0 0.0
    %1736 = vmatpush1.msra.mxu0 0.0
    %1737 = vmatprep.subr.mxu0 0.0
    %1738 = vmatpush1.msra.mxu0 0.0
    %1739 = vmatprep.subr.mxu0 0.0
    %1740 = vmatpush1.msra.mxu0 0.0
    %1741 = vmatprep.subr.mxu0 0.0
    %1742 = vmatpush1.msra.mxu0 0.0
    %1743 = vmatprep.subr.mxu0 0.0
    %1744 = vmatpush1.msra.mxu0 0.0
    %1745 = vmatprep.subr.mxu0 0.0
    %1746 = vmatpush1.msra.mxu0 0.0
    %1747 = vmatprep.subr.mxu0 0.0
    %1748 = vmatpush1.msra.mxu0 0.0
    %1749 = vmatprep.subr.mxu0 0.0
    %1750 = vmatpush1.msra.mxu0 0.0
    %1751 = vmatprep.subr.mxu0 0.0
    %1752 = vmatpush1.msra.mxu0 0.0
    %1753 = vmatprep.subr.mxu0 0.0
    %1754 = vmatpush1.msra.mxu0 0.0
    %1755 = vmatprep.subr.mxu0 0.0
    %1756 = vmatpush1.msra.mxu0 0.0
    %1757 = vmatprep.subr.mxu0 0.0
    %1758 = vmatpush1.msra.mxu0 0.0
    %1759 = vmatprep.subr.mxu0 0.0
    %1760 = vmatpush1.msra.mxu0 %v64
    %1761 = vmatprep.subr.mxu0 0.0
    %1762 = vmatpush2.msra.mxu0 0.0
    %1763 = vmatprep.subr.mxu0 0.0
    %1764 = vmatpush2.msra.mxu0 0.0
    %1765 = vmatprep.subr.mxu0 0.0
    %1766 = vmatpush2.msra.mxu0 0.0
    %1767 = vmatprep.subr.mxu0 0.0
    %1768 = vmatpush2.msra.mxu0 0.0
    %1769 = vmatprep.subr.mxu0 0.0
    %1770 = vmatpush2.msra.mxu0 0.0
    %1771 = vmatprep.subr.mxu0 0.0
    %1772 = vmatpush2.msra.mxu0 0.0
    %1773 = vmatprep.subr.mxu0 0.0
    %1774 = vmatpush2.msra.mxu0 0.0
    %1775 = vmatprep.subr.mxu0 0.0
    %1776 = vmatpush2.msra.mxu0 0.0
    %1777 = vmatprep.subr.mxu0 0.0
    %1778 = vmatpush2.msra.mxu0 0.0
    %1779 = vmatprep.subr.mxu0 0.0
    %1780 = vmatpush2.msra.mxu0 0.0
    %1781 = vmatprep.subr.mxu0 0.0
    %1782 = vmatpush2.msra.mxu0 0.0
    %1783 = vmatprep.subr.mxu0 0.0
    %1784 = vmatpush2.msra.mxu0 0.0
    %1785 = vmatprep.subr.mxu0 0.0
    %1786 = vmatpush2.msra.mxu0 0.0
    %1787 = vmatprep.subr.mxu0 0.0
    %1788 = vmatpush2.msra.mxu0 0.0
    %1789 = vmatprep.subr.mxu0 0.0
    %1790 = vmatpush2.msra.mxu0 0.0
    %1791 = vmatprep.subr.mxu0 0.0
    %1792 = vmatpush2.msra.mxu0 0.0
    %1793 = vmatprep.mubr.f32.mxu0 0.0
    %1794 = vmatmul.mubr.f32.gmra.mxu0 %v1724
    %v1795 = vpop.f32.mrf.mxu0
    %v1796 = vadd.f32 0.0, %v1795
    %v1797 = vpop.f32.mrf.mxu0
    %1798 = vmatprep.mubr.f32.mxu0 0.0
    %1799 = vmatmul.mubr.f32.gmra.mxu0 %v1727
    %v1800 = vpop.f32.mrf.mxu0
    %v1801 = vadd.f32 0.0, %v1800
    %v1802 = vpop.f32.mrf.mxu0
    %1803 = vdwg.mxu0
    %v1804 = vadd.f32 %v1721, %v1796
    %v1805 = vadd.f32 %v1722, %v1801
    %v1806 = vadd.f32 %v1804, %v54
    %v1807 = vadd.f32 %v1805, %v55
    %v1808 = vsel %vm77, %v1806, 0.0
    %1809 = vadd.xlane.f32.xlu0 %v1808
    %v1810 = vpop.xlane.xlu0 %1809
    %v1811 = vsel %vm77, %v1807, 0.0
    %1812 = vadd.xlane.f32.xlu0 %v1811
    %v1813 = vpop.xlane.xlu0 %1812
    %v1814 = vrcp.pop 32.0
    %v1815 = vmul.f32 %v1810, %v1814
    %v1816 = vmul.f32 %v1813, %v1814
    %v1817 = vmul.f32 %v1806, %v1806
    %v1818 = vmul.f32 %v1807, %v1807
    %v1819 = vsel %vm77, %v1817, 0.0
    %1820 = vadd.xlane.f32.xlu0 %v1819
    %v1821 = vpop.xlane.xlu0 %1820
    %v1822 = vsel %vm77, %v1818, 0.0
    %1823 = vadd.xlane.f32.xlu0 %v1822
    %v1824 = vpop.xlane.xlu0 %1823
    %v1825 = vmul.f32 %v1821, %v1814
    %v1826 = vmul.f32 %v1824, %v1814
    %v1827 = vmul.f32 %v1815, %v1815
    %v1828 = vmul.f32 %v1816, %v1816
    %v1829 = vsub.f32 %v1825, %v1827
    %v1830 = vsub.f32 %v1826, %v1828
    %v1831 = vmax.f32 %v1829, 0.0
    %v1832 = vmax.f32 %v1830, 0.0
    %v1833 = vsub.f32 %v1806, %v1815
    %v1834 = vsub.f32 %v1807, %v1816
    %v1835 = vadd.f32 %v1831, 1e-06
    %v1836 = vadd.f32 %v1832, 1e-06
    %v1837 = vrsqrt.pop %v1835
    %v1838 = vrsqrt.pop %v1836
    %v1839 = vmul.f32 %v1833, %v1837
    %v1840 = vmul.f32 %v1834, %v1838
    %v1841 = vlaneseq
    %v1842 = vshrl.u32 %v1841, 7
    %v1843 = vsub.s32 0, %v1842
    %v1844 = vrot.slane %v56, %v1843
    %v1845 = vmul.f32 %v1839, %v1844
    %v1846 = vmul.f32 %v1840, %v1844
    %v1847 = vlaneseq
    %v1848 = vshrl.u32 %v1847, 7
    %v1849 = vsub.s32 1, %v1848
    %v1850 = vrot.slane %v56, %v1849
    %v1851 = vadd.f32 %v1845, %v1850
    %v1852 = vadd.f32 %v1846, %v1850
    %v1854 = vsel %vm77, %v1851, 0
    %v1857 = vsel %vm77, %v1852, 0
    %1859 = vmatprep.subr.mxu0 0.0
    %1860 = vmatpush1.msra.mxu0 0.0
    %1861 = vmatprep.subr.mxu0 0.0
    %1862 = vmatpush1.msra.mxu0 0.0
    %1863 = vmatprep.subr.mxu0 0.0
    %1864 = vmatpush1.msra.mxu0 0.0
    %1865 = vmatprep.subr.mxu0 0.0
    %1866 = vmatpush1.msra.mxu0 0.0
    %1867 = vmatprep.subr.mxu0 0.0
    %1868 = vmatpush1.msra.mxu0 0.0
    %1869 = vmatprep.subr.mxu0 0.0
    %1870 = vmatpush1.msra.mxu0 0.0
    %1871 = vmatprep.subr.mxu0 0.0
    %1872 = vmatpush1.msra.mxu0 0.0
    %1873 = vmatprep.subr.mxu0 0.0
    %1874 = vmatpush1.msra.mxu0 0.0
    %1875 = vmatprep.subr.mxu0 0.0
    %1876 = vmatpush1.msra.mxu0 0.0
    %1877 = vmatprep.subr.mxu0 0.0
    %1878 = vmatpush1.msra.mxu0 0.0
    %1879 = vmatprep.subr.mxu0 0.0
    %1880 = vmatpush1.msra.mxu0 0.0
    %1881 = vmatprep.subr.mxu0 0.0
    %1882 = vmatpush1.msra.mxu0 0.0
    %1883 = vmatprep.subr.mxu0 0.0
    %1884 = vmatpush1.msra.mxu0 %v68
    %1885 = vmatprep.subr.mxu0 0.0
    %1886 = vmatpush1.msra.mxu0 %v67
    %1887 = vmatprep.subr.mxu0 0.0
    %1888 = vmatpush1.msra.mxu0 %v66
    %1889 = vmatprep.subr.mxu0 0.0
    %1890 = vmatpush1.msra.mxu0 %v65
    %1891 = vmatprep.subr.mxu0 0.0
    %1892 = vmatpush2.msra.mxu0 0.0
    %1893 = vmatprep.subr.mxu0 0.0
    %1894 = vmatpush2.msra.mxu0 0.0
    %1895 = vmatprep.subr.mxu0 0.0
    %1896 = vmatpush2.msra.mxu0 0.0
    %1897 = vmatprep.subr.mxu0 0.0
    %1898 = vmatpush2.msra.mxu0 0.0
    %1899 = vmatprep.subr.mxu0 0.0
    %1900 = vmatpush2.msra.mxu0 0.0
    %1901 = vmatprep.subr.mxu0 0.0
    %1902 = vmatpush2.msra.mxu0 0.0
    %1903 = vmatprep.subr.mxu0 0.0
    %1904 = vmatpush2.msra.mxu0 0.0
    %1905 = vmatprep.subr.mxu0 0.0
    %1906 = vmatpush2.msra.mxu0 0.0
    %1907 = vmatprep.subr.mxu0 0.0
    %1908 = vmatpush2.msra.mxu0 0.0
    %1909 = vmatprep.subr.mxu0 0.0
    %1910 = vmatpush2.msra.mxu0 0.0
    %1911 = vmatprep.subr.mxu0 0.0
    %1912 = vmatpush2.msra.mxu0 0.0
    %1913 = vmatprep.subr.mxu0 0.0
    %1914 = vmatpush2.msra.mxu0 0.0
    %1915 = vmatprep.subr.mxu0 0.0
    %1916 = vmatpush2.msra.mxu0 0.0
    %1917 = vmatprep.subr.mxu0 0.0
    %1918 = vmatpush2.msra.mxu0 0.0
    %1919 = vmatprep.subr.mxu0 0.0
    %1920 = vmatpush2.msra.mxu0 0.0
    %1921 = vmatprep.subr.mxu0 0.0
    %1922 = vmatpush2.msra.mxu0 0.0
    %1923 = vmatprep.mubr.f32.mxu0 0.0
    %1924 = vmatmul.mubr.f32.gmra.mxu0 %v1854
    %v1925 = vpop.f32.mrf.mxu0
    %v1926 = vadd.f32 0.0, %v1925
    %v1927 = vpop.f32.mrf.mxu0
    %1928 = vmatprep.mubr.f32.mxu0 0.0
    %1929 = vmatmul.mubr.f32.gmra.mxu0 %v1857
    %v1930 = vpop.f32.mrf.mxu0
    %v1931 = vadd.f32 0.0, %v1930
    %v1932 = vpop.f32.mrf.mxu0
    %1933 = vdwg.mxu0
    %v1934 = vmax.f32 %v1926, 0.0
    %v1935 = vmax.f32 %v1931, 0.0
    %vm1936 = vcmask 523264
    %v1938 = vsel %vm1936, %v1934, 0
    %v1941 = vsel %vm1936, %v1935, 0
    %1943 = vmatprep.subr.mxu0 0.0
    %1944 = vmatpush1.msra.mxu0 0.0
    %1945 = vmatprep.subr.mxu0 0.0
    %1946 = vmatpush1.msra.mxu0 0.0
    %1947 = vmatprep.subr.mxu0 0.0
    %1948 = vmatpush1.msra.mxu0 0.0
    %1949 = vmatprep.subr.mxu0 0.0
    %1950 = vmatpush1.msra.mxu0 0.0
    %1951 = vmatprep.subr.mxu0 0.0
    %1952 = vmatpush1.msra.mxu0 0.0
    %1953 = vmatprep.subr.mxu0 0.0
    %1954 = vmatpush1.msra.mxu0 0.0
    %1955 = vmatprep.subr.mxu0 0.0
    %1956 = vmatpush1.msra.mxu0 0.0
    %1957 = vmatprep.subr.mxu0 0.0
    %1958 = vmatpush1.msra.mxu0 0.0
    %1959 = vmatprep.subr.mxu0 0.0
    %1960 = vmatpush1.msra.mxu0 %v76
    %1961 = vmatprep.subr.mxu0 0.0
    %1962 = vmatpush1.msra.mxu0 %v75
    %1963 = vmatprep.subr.mxu0 0.0
    %1964 = vmatpush1.msra.mxu0 %v74
    %1965 = vmatprep.subr.mxu0 0.0
    %1966 = vmatpush1.msra.mxu0 %v73
    %1967 = vmatprep.subr.mxu0 0.0
    %1968 = vmatpush1.msra.mxu0 %v72
    %1969 = vmatprep.subr.mxu0 0.0
    %1970 = vmatpush1.msra.mxu0 %v71
    %1971 = vmatprep.subr.mxu0 0.0
    %1972 = vmatpush1.msra.mxu0 %v70
    %1973 = vmatprep.subr.mxu0 0.0
    %1974 = vmatpush1.msra.mxu0 %v69
    %1975 = vmatprep.subr.mxu0 0.0
    %1976 = vmatpush2.msra.mxu0 0.0
    %1977 = vmatprep.subr.mxu0 0.0
    %1978 = vmatpush2.msra.mxu0 0.0
    %1979 = vmatprep.subr.mxu0 0.0
    %1980 = vmatpush2.msra.mxu0 0.0
    %1981 = vmatprep.subr.mxu0 0.0
    %1982 = vmatpush2.msra.mxu0 0.0
    %1983 = vmatprep.subr.mxu0 0.0
    %1984 = vmatpush2.msra.mxu0 0.0
    %1985 = vmatprep.subr.mxu0 0.0
    %1986 = vmatpush2.msra.mxu0 0.0
    %1987 = vmatprep.subr.mxu0 0.0
    %1988 = vmatpush2.msra.mxu0 0.0
    %1989 = vmatprep.subr.mxu0 0.0
    %1990 = vmatpush2.msra.mxu0 0.0
    %1991 = vmatprep.subr.mxu0 0.0
    %1992 = vmatpush2.msra.mxu0 0.0
    %1993 = vmatprep.subr.mxu0 0.0
    %1994 = vmatpush2.msra.mxu0 0.0
    %1995 = vmatprep.subr.mxu0 0.0
    %1996 = vmatpush2.msra.mxu0 0.0
    %1997 = vmatprep.subr.mxu0 0.0
    %1998 = vmatpush2.msra.mxu0 0.0
    %1999 = vmatprep.subr.mxu0 0.0
    %2000 = vmatpush2.msra.mxu0 0.0
    %2001 = vmatprep.subr.mxu0 0.0
    %2002 = vmatpush2.msra.mxu0 0.0
    %2003 = vmatprep.subr.mxu0 0.0
    %2004 = vmatpush2.msra.mxu0 0.0
    %2005 = vmatprep.subr.mxu0 0.0
    %2006 = vmatpush2.msra.mxu0 0.0
    %2007 = vmatprep.mubr.f32.mxu0 0.0
    %2008 = vmatmul.mubr.f32.gmra.mxu0 %v1938
    %v2009 = vpop.f32.mrf.mxu0
    %v2010 = vadd.f32 %v1851, %v2009
    %v2011 = vpop.f32.mrf.mxu0
    %2012 = vmatprep.mubr.f32.mxu0 0.0
    %2013 = vmatmul.mubr.f32.gmra.mxu0 %v1941
    %v2014 = vpop.f32.mrf.mxu0
    %v2015 = vadd.f32 %v1852, %v2014
    %v2016 = vpop.f32.mrf.mxu0
    %2017 = vdwg.mxu0
    %v2018 = vsel %vm77, %v2010, 0.0
    %2019 = vadd.xlane.f32.xlu0 %v2018
    %v2020 = vpop.xlane.xlu0 %2019
    %v2021 = vsel %vm77, %v2015, 0.0
    %2022 = vadd.xlane.f32.xlu0 %v2021
    %v2023 = vpop.xlane.xlu0 %2022
    %v2024 = vmul.f32 %v2020, %v1814
    %v2025 = vmul.f32 %v2023, %v1814
    %v2026 = vmul.f32 %v2010, %v2010
    %v2027 = vmul.f32 %v2015, %v2015
    %v2028 = vsel %vm77, %v2026, 0.0
    %2029 = vadd.xlane.f32.xlu0 %v2028
    %v2030 = vpop.xlane.xlu0 %2029
    %v2031 = vsel %vm77, %v2027, 0.0
    %2032 = vadd.xlane.f32.xlu0 %v2031
    %v2033 = vpop.xlane.xlu0 %2032
    %v2034 = vmul.f32 %v2030, %v1814
    %v2035 = vmul.f32 %v2033, %v1814
    %v2036 = vmul.f32 %v2024, %v2024
    %v2037 = vmul.f32 %v2025, %v2025
    %v2038 = vsub.f32 %v2034, %v2036
    %v2039 = vsub.f32 %v2035, %v2037
    %v2040 = vmax.f32 %v2038, 0.0
    %v2041 = vmax.f32 %v2039, 0.0
    %v2042 = vsub.f32 %v2010, %v2024
    %v2043 = vsub.f32 %v2015, %v2025
    %v2044 = vadd.f32 %v2040, 1e-06
    %v2045 = vadd.f32 %v2041, 1e-06
    %v2046 = vrsqrt.pop %v2044
    %v2047 = vrsqrt.pop %v2045
    %v2048 = vmul.f32 %v2042, %v2046
    %v2049 = vmul.f32 %v2043, %v2047
    %v2050 = vlaneseq
    %v2051 = vshrl.u32 %v2050, 7
    %v2052 = vsub.s32 2, %v2051
    %v2053 = vrot.slane %v56, %v2052
    %v2054 = vmul.f32 %v2048, %v2053
    %v2055 = vmul.f32 %v2049, %v2053
    %v2056 = vlaneseq
    %v2057 = vshrl.u32 %v2056, 7
    %v2058 = vsub.s32 3, %v2057
    %v2059 = vrot.slane %v56, %v2058
    %v2060 = vadd.f32 %v2054, %v2059
    %v2061 = vadd.f32 %v2055, %v2059
    %v2062 = vld [vmem:[#allocation5 + $0xa0] sm:$0xff]
    %v2063 = vld [vmem:[#allocation5 + $0xa8] sm:$0xff]
    %v2064 = vld [vmem:[#allocation5 + $0xb0] sm:$0xff]
    %v2065 = vld [vmem:[#allocation5 + $0xb8] sm:$0xff]
    %v2066 = vld [vmem:[#allocation5 + $0xc0] sm:$0xff]
    %v2067 = vld [vmem:[#allocation5 + $0xc8] sm:$0xff]
    %v2068 = vld [vmem:[#allocation5 + $0xd0] sm:$0xff]
    %v2069 = vld [vmem:[#allocation5 + $0xd8] sm:$0xff]
    %v2070 = vld [vmem:[#allocation5 + $0xe0] sm:$0xff]
    %v2071 = vld [vmem:[#allocation5 + $0xe8] sm:$0xff]
    %v2072 = vld [vmem:[#allocation5 + $0xf0] sm:$0xff]
    %v2073 = vld [vmem:[#allocation5 + $0xf8] sm:$0xff]
    %v2074 = vld [vmem:[#allocation5 + $0x100] sm:$0xff]
    %v2075 = vld [vmem:[#allocation5 + $0x108] sm:$0xff]
    %v2076 = vld [vmem:[#allocation5 + $0x110] sm:$0xff]
    %v2077 = vld [vmem:[#allocation5 + $0x118] sm:$0xff]
    %v2078 = vld [vmem:[#allocation5 + $0x120] sm:$0xff]
    %v2079 = vld [vmem:[#allocation5 + $0x128] sm:$0xff]
    %v2080 = vld [vmem:[#allocation5 + $0x130] sm:$0xff]
    %v2081 = vld [vmem:[#allocation5 + $0x138] sm:$0xff]
    %v2083 = vsel %vm77, %v2060, 0
    %v2086 = vsel %vm77, %v2061, 0
    %2088 = vmatprep.subr.mxu0 0.0
    %2089 = vmatpush1.msra.mxu0 0.0
    %2090 = vmatprep.subr.mxu0 0.0
    %2091 = vmatpush1.msra.mxu0 0.0
    %2092 = vmatprep.subr.mxu0 0.0
    %2093 = vmatpush1.msra.mxu0 0.0
    %2094 = vmatprep.subr.mxu0 0.0
    %2095 = vmatpush1.msra.mxu0 0.0
    %2096 = vmatprep.subr.mxu0 0.0
    %2097 = vmatpush1.msra.mxu0 0.0
    %2098 = vmatprep.subr.mxu0 0.0
    %2099 = vmatpush1.msra.mxu0 0.0
    %2100 = vmatprep.subr.mxu0 0.0
    %2101 = vmatpush1.msra.mxu0 0.0
    %2102 = vmatprep.subr.mxu0 0.0
    %2103 = vmatpush1.msra.mxu0 0.0
    %2104 = vmatprep.subr.mxu0 0.0
    %2105 = vmatpush1.msra.mxu0 0.0
    %2106 = vmatprep.subr.mxu0 0.0
    %2107 = vmatpush1.msra.mxu0 0.0
    %2108 = vmatprep.subr.mxu0 0.0
    %2109 = vmatpush1.msra.mxu0 0.0
    %2110 = vmatprep.subr.mxu0 0.0
    %2111 = vmatpush1.msra.mxu0 0.0
    %2112 = vmatprep.subr.mxu0 0.0
    %2113 = vmatpush1.msra.mxu0 %v2065
    %2114 = vmatprep.subr.mxu0 0.0
    %2115 = vmatpush1.msra.mxu0 %v2064
    %2116 = vmatprep.subr.mxu0 0.0
    %2117 = vmatpush1.msra.mxu0 %v2063
    %2118 = vmatprep.subr.mxu0 0.0
    %2119 = vmatpush1.msra.mxu0 %v2062
    %2120 = vmatprep.subr.mxu0 0.0
    %2121 = vmatpush2.msra.mxu0 0.0
    %2122 = vmatprep.subr.mxu0 0.0
    %2123 = vmatpush2.msra.mxu0 0.0
    %2124 = vmatprep.subr.mxu0 0.0
    %2125 = vmatpush2.msra.mxu0 0.0
    %2126 = vmatprep.subr.mxu0 0.0
    %2127 = vmatpush2.msra.mxu0 0.0
    %2128 = vmatprep.subr.mxu0 0.0
    %2129 = vmatpush2.msra.mxu0 0.0
    %2130 = vmatprep.subr.mxu0 0.0
    %2131 = vmatpush2.msra.mxu0 0.0
    %2132 = vmatprep.subr.mxu0 0.0
    %2133 = vmatpush2.msra.mxu0 0.0
    %2134 = vmatprep.subr.mxu0 0.0
    %2135 = vmatpush2.msra.mxu0 0.0
    %2136 = vmatprep.subr.mxu0 0.0
    %2137 = vmatpush2.msra.mxu0 0.0
    %2138 = vmatprep.subr.mxu0 0.0
    %2139 = vmatpush2.msra.mxu0 0.0
    %2140 = vmatprep.subr.mxu0 0.0
    %2141 = vmatpush2.msra.mxu0 0.0
    %2142 = vmatprep.subr.mxu0 0.0
    %2143 = vmatpush2.msra.mxu0 0.0
    %2144 = vmatprep.subr.mxu0 0.0
    %2145 = vmatpush2.msra.mxu0 0.0
    %2146 = vmatprep.subr.mxu0 0.0
    %2147 = vmatpush2.msra.mxu0 0.0
    %2148 = vmatprep.subr.mxu0 0.0
    %2149 = vmatpush2.msra.mxu0 0.0
    %2150 = vmatprep.subr.mxu0 0.0
    %2151 = vmatpush2.msra.mxu0 0.0
    %2152 = vmatprep.mubr.f32.mxu0 0.0
    %2153 = vmatmul.mubr.f32.gmra.mxu0 %v2083
    %v2154 = vpop.f32.mrf.mxu0
    %v2155 = vadd.f32 0.0, %v2154
    %v2156 = vpop.f32.mrf.mxu0
    %2157 = vmatprep.mubr.f32.mxu0 0.0
    %2158 = vmatmul.mubr.f32.gmra.mxu0 %v2086
    %v2159 = vpop.f32.mrf.mxu0
    %v2160 = vadd.f32 0.0, %v2159
    %v2161 = vpop.f32.mrf.mxu0
    %2162 = vdwg.mxu0
    %2165 = vrot.lane.b32.xlu0 %v2155, 120
    %v2166 = vpop.permute.xlu0 %2165
    %2167 = vrot.lane.b32.xlu0 %v2160, 120
    %v2168 = vpop.permute.xlu0 %2167
    %2169 = vrot.lane.b32.xlu0 %v2155, 112
    %v2170 = vpop.permute.xlu0 %2169
    %2171 = vrot.lane.b32.xlu0 %v2160, 112
    %v2172 = vpop.permute.xlu0 %2171
    %2173 = vrot.lane.b32.xlu0 %v2155, 104
    %v2174 = vpop.permute.xlu0 %2173
    %2175 = vrot.lane.b32.xlu0 %v2160, 104
    %v2176 = vpop.permute.xlu0 %2175
    %2177 = vrot.lane.b32.xlu0 %v2155, 96
    %v2178 = vpop.permute.xlu0 %2177
    %v2179 = vsel %vm175, %v2155, 0
    %v2181 = vsel %vm175, %v2178, 0
    %2183 = vmatprep.subr.mxu0 0.0
    %2184 = vmatpush1.xpose.msra.mxu0 0.0
    %2185 = vmatprep.subr.mxu0 0.0
    %2186 = vmatpush1.xpose.msra.mxu0 0.0
    %2187 = vmatprep.subr.mxu0 0.0
    %2188 = vmatpush1.xpose.msra.mxu0 0.0
    %2189 = vmatprep.subr.mxu0 0.0
    %2190 = vmatpush1.xpose.msra.mxu0 0.0
    %2191 = vmatprep.subr.mxu0 0.0
    %2192 = vmatpush1.xpose.msra.mxu0 0.0
    %2193 = vmatprep.subr.mxu0 0.0
    %2194 = vmatpush1.xpose.msra.mxu0 0.0
    %2195 = vmatprep.subr.mxu0 0.0
    %2196 = vmatpush1.xpose.msra.mxu0 0.0
    %2197 = vmatprep.subr.mxu0 0.0
    %2198 = vmatpush1.xpose.msra.mxu0 0.0
    %2199 = vmatprep.subr.mxu0 0.0
    %2200 = vmatpush1.xpose.msra.mxu0 0.0
    %2201 = vmatprep.subr.mxu0 0.0
    %2202 = vmatpush1.xpose.msra.mxu0 0.0
    %2203 = vmatprep.subr.mxu0 0.0
    %2204 = vmatpush1.xpose.msra.mxu0 0.0
    %2205 = vmatprep.subr.mxu0 0.0
    %2206 = vmatpush1.xpose.msra.mxu0 0.0
    %2207 = vmatprep.subr.mxu0 0.0
    %2208 = vmatpush1.xpose.msra.mxu0 0.0
    %2209 = vmatprep.subr.mxu0 0.0
    %2210 = vmatpush1.xpose.msra.mxu0 0.0
    %2211 = vmatprep.subr.mxu0 0.0
    %2212 = vmatpush1.xpose.msra.mxu0 0.0
    %2213 = vmatprep.subr.mxu0 0.0
    %2214 = vmatpush1.xpose.msra.mxu0 %v2181
    %2215 = vmatprep.subr.mxu0 0.0
    %2216 = vmatpush2.xpose.msra.mxu0 0.0
    %2217 = vmatprep.subr.mxu0 0.0
    %2218 = vmatpush2.xpose.msra.mxu0 0.0
    %2219 = vmatprep.subr.mxu0 0.0
    %2220 = vmatpush2.xpose.msra.mxu0 0.0
    %2221 = vmatprep.subr.mxu0 0.0
    %2222 = vmatpush2.xpose.msra.mxu0 0.0
    %2223 = vmatprep.subr.mxu0 0.0
    %2224 = vmatpush2.xpose.msra.mxu0 0.0
    %2225 = vmatprep.subr.mxu0 0.0
    %2226 = vmatpush2.xpose.msra.mxu0 0.0
    %2227 = vmatprep.subr.mxu0 0.0
    %2228 = vmatpush2.xpose.msra.mxu0 0.0
    %2229 = vmatprep.subr.mxu0 0.0
    %2230 = vmatpush2.xpose.msra.mxu0 0.0
    %2231 = vmatprep.subr.mxu0 0.0
    %2232 = vmatpush2.xpose.msra.mxu0 0.0
    %2233 = vmatprep.subr.mxu0 0.0
    %2234 = vmatpush2.xpose.msra.mxu0 0.0
    %2235 = vmatprep.subr.mxu0 0.0
    %2236 = vmatpush2.xpose.msra.mxu0 0.0
    %2237 = vmatprep.subr.mxu0 0.0
    %2238 = vmatpush2.xpose.msra.mxu0 0.0
    %2239 = vmatprep.subr.mxu0 0.0
    %2240 = vmatpush2.xpose.msra.mxu0 0.0
    %2241 = vmatprep.subr.mxu0 0.0
    %2242 = vmatpush2.xpose.msra.mxu0 0.0
    %2243 = vmatprep.subr.mxu0 0.0
    %2244 = vmatpush2.xpose.msra.mxu0 0.0
    %2245 = vmatprep.subr.mxu0 0.0
    %2246 = vmatpush2.xpose.msra.mxu0 0.0
    %2247 = vmatprep.mubr.f32.mxu0 0.0
    %2248 = vmatmul.mubr.f32.gmra.mxu0 %v2179
    %v2249 = vpop.f32.mrf.mxu0
    %v2250 = vadd.f32 0.0, %v2249
    %v2251 = vpop.f32.mrf.mxu0
    %2252 = vdwg.mxu0
    %2253 = vrot.lane.b32.xlu0 %v2160, 96
    %v2254 = vpop.permute.xlu0 %2253
    %v2255 = vsel %vm175, %v2160, 0
    %v2257 = vsel %vm175, %v2254, 0
    %2259 = vmatprep.subr.mxu0 0.0
    %2260 = vmatpush1.xpose.msra.mxu0 0.0
    %2261 = vmatprep.subr.mxu0 0.0
    %2262 = vmatpush1.xpose.msra.mxu0 0.0
    %2263 = vmatprep.subr.mxu0 0.0
    %2264 = vmatpush1.xpose.msra.mxu0 0.0
    %2265 = vmatprep.subr.mxu0 0.0
    %2266 = vmatpush1.xpose.msra.mxu0 0.0
    %2267 = vmatprep.subr.mxu0 0.0
    %2268 = vmatpush1.xpose.msra.mxu0 0.0
    %2269 = vmatprep.subr.mxu0 0.0
    %2270 = vmatpush1.xpose.msra.mxu0 0.0
    %2271 = vmatprep.subr.mxu0 0.0
    %2272 = vmatpush1.xpose.msra.mxu0 0.0
    %2273 = vmatprep.subr.mxu0 0.0
    %2274 = vmatpush1.xpose.msra.mxu0 0.0
    %2275 = vmatprep.subr.mxu0 0.0
    %2276 = vmatpush1.xpose.msra.mxu0 0.0
    %2277 = vmatprep.subr.mxu0 0.0
    %2278 = vmatpush1.xpose.msra.mxu0 0.0
    %2279 = vmatprep.subr.mxu0 0.0
    %2280 = vmatpush1.xpose.msra.mxu0 0.0
    %2281 = vmatprep.subr.mxu0 0.0
    %2282 = vmatpush1.xpose.msra.mxu0 0.0
    %2283 = vmatprep.subr.mxu0 0.0
    %2284 = vmatpush1.xpose.msra.mxu0 0.0
    %2285 = vmatprep.subr.mxu0 0.0
    %2286 = vmatpush1.xpose.msra.mxu0 0.0
    %2287 = vmatprep.subr.mxu0 0.0
    %2288 = vmatpush1.xpose.msra.mxu0 0.0
    %2289 = vmatprep.subr.mxu0 0.0
    %2290 = vmatpush1.xpose.msra.mxu0 %v2257
    %2291 = vmatprep.subr.mxu0 0.0
    %2292 = vmatpush2.xpose.msra.mxu0 0.0
    %2293 = vmatprep.subr.mxu0 0.0
    %2294 = vmatpush2.xpose.msra.mxu0 0.0
    %2295 = vmatprep.subr.mxu0 0.0
    %2296 = vmatpush2.xpose.msra.mxu0 0.0
    %2297 = vmatprep.subr.mxu0 0.0
    %2298 = vmatpush2.xpose.msra.mxu0 0.0
    %2299 = vmatprep.subr.mxu0 0.0
    %2300 = vmatpush2.xpose.msra.mxu0 0.0
    %2301 = vmatprep.subr.mxu0 0.0
    %2302 = vmatpush2.xpose.msra.mxu0 0.0
    %2303 = vmatprep.subr.mxu0 0.0
    %2304 = vmatpush2.xpose.msra.mxu0 0.0
    %2305 = vmatprep.subr.mxu0 0.0
    %2306 = vmatpush2.xpose.msra.mxu0 0.0
    %2307 = vmatprep.subr.mxu0 0.0
    %2308 = vmatpush2.xpose.msra.mxu0 0.0
    %2309 = vmatprep.subr.mxu0 0.0
    %2310 = vmatpush2.xpose.msra.mxu0 0.0
    %2311 = vmatprep.subr.mxu0 0.0
    %2312 = vmatpush2.xpose.msra.mxu0 0.0
    %2313 = vmatprep.subr.mxu0 0.0
    %2314 = vmatpush2.xpose.msra.mxu0 0.0
    %2315 = vmatprep.subr.mxu0 0.0
    %2316 = vmatpush2.xpose.msra.mxu0 0.0
    %2317 = vmatprep.subr.mxu0 0.0
    %2318 = vmatpush2.xpose.msra.mxu0 0.0
    %2319 = vmatprep.subr.mxu0 0.0
    %2320 = vmatpush2.xpose.msra.mxu0 0.0
    %2321 = vmatprep.subr.mxu0 0.0
    %2322 = vmatpush2.xpose.msra.mxu0 0.0
    %2323 = vmatprep.mubr.f32.mxu0 0.0
    %2324 = vmatmul.mubr.f32.gmra.mxu0 %v2255
    %v2325 = vpop.f32.mrf.mxu0
    %v2326 = vadd.f32 0.0, %v2325
    %v2327 = vpop.f32.mrf.mxu0
    %2328 = vdwg.mxu0
    %2329 = vrot.lane.b32.xlu0 %v2166, 96
    %v2330 = vpop.permute.xlu0 %2329
    %v2331 = vsel %vm175, %v2166, 0
    %v2333 = vsel %vm175, %v2330, 0
    %2335 = vmatprep.subr.mxu0 0.0
    %2336 = vmatpush1.xpose.msra.mxu0 0.0
    %2337 = vmatprep.subr.mxu0 0.0
    %2338 = vmatpush1.xpose.msra.mxu0 0.0
    %2339 = vmatprep.subr.mxu0 0.0
    %2340 = vmatpush1.xpose.msra.mxu0 0.0
    %2341 = vmatprep.subr.mxu0 0.0
    %2342 = vmatpush1.xpose.msra.mxu0 0.0
    %2343 = vmatprep.subr.mxu0 0.0
    %2344 = vmatpush1.xpose.msra.mxu0 0.0
    %2345 = vmatprep.subr.mxu0 0.0
    %2346 = vmatpush1.xpose.msra.mxu0 0.0
    %2347 = vmatprep.subr.mxu0 0.0
    %2348 = vmatpush1.xpose.msra.mxu0 0.0
    %2349 = vmatprep.subr.mxu0 0.0
    %2350 = vmatpush1.xpose.msra.mxu0 0.0
    %2351 = vmatprep.subr.mxu0 0.0
    %2352 = vmatpush1.xpose.msra.mxu0 0.0
    %2353 = vmatprep.subr.mxu0 0.0
    %2354 = vmatpush1.xpose.msra.mxu0 0.0
    %2355 = vmatprep.subr.mxu0 0.0
    %2356 = vmatpush1.xpose.msra.mxu0 0.0
    %2357 = vmatprep.subr.mxu0 0.0
    %2358 = vmatpush1.xpose.msra.mxu0 0.0
    %2359 = vmatprep.subr.mxu0 0.0
    %2360 = vmatpush1.xpose.msra.mxu0 0.0
    %2361 = vmatprep.subr.mxu0 0.0
    %2362 = vmatpush1.xpose.msra.mxu0 0.0
    %2363 = vmatprep.subr.mxu0 0.0
    %2364 = vmatpush1.xpose.msra.mxu0 0.0
    %2365 = vmatprep.subr.mxu0 0.0
    %2366 = vmatpush1.xpose.msra.mxu0 %v2333
    %2367 = vmatprep.subr.mxu0 0.0
    %2368 = vmatpush2.xpose.msra.mxu0 0.0
    %2369 = vmatprep.subr.mxu0 0.0
    %2370 = vmatpush2.xpose.msra.mxu0 0.0
    %2371 = vmatprep.subr.mxu0 0.0
    %2372 = vmatpush2.xpose.msra.mxu0 0.0
    %2373 = vmatprep.subr.mxu0 0.0
    %2374 = vmatpush2.xpose.msra.mxu0 0.0
    %2375 = vmatprep.subr.mxu0 0.0
    %2376 = vmatpush2.xpose.msra.mxu0 0.0
    %2377 = vmatprep.subr.mxu0 0.0
    %2378 = vmatpush2.xpose.msra.mxu0 0.0
    %2379 = vmatprep.subr.mxu0 0.0
    %2380 = vmatpush2.xpose.msra.mxu0 0.0
    %2381 = vmatprep.subr.mxu0 0.0
    %2382 = vmatpush2.xpose.msra.mxu0 0.0
    %2383 = vmatprep.subr.mxu0 0.0
    %2384 = vmatpush2.xpose.msra.mxu0 0.0
    %2385 = vmatprep.subr.mxu0 0.0
    %2386 = vmatpush2.xpose.msra.mxu0 0.0
    %2387 = vmatprep.subr.mxu0 0.0
    %2388 = vmatpush2.xpose.msra.mxu0 0.0
    %2389 = vmatprep.subr.mxu0 0.0
    %2390 = vmatpush2.xpose.msra.mxu0 0.0
    %2391 = vmatprep.subr.mxu0 0.0
    %2392 = vmatpush2.xpose.msra.mxu0 0.0
    %2393 = vmatprep.subr.mxu0 0.0
    %2394 = vmatpush2.xpose.msra.mxu0 0.0
    %2395 = vmatprep.subr.mxu0 0.0
    %2396 = vmatpush2.xpose.msra.mxu0 0.0
    %2397 = vmatprep.subr.mxu0 0.0
    %2398 = vmatpush2.xpose.msra.mxu0 0.0
    %2399 = vmatprep.mubr.f32.mxu0 0.0
    %2400 = vmatmul.mubr.f32.gmra.mxu0 %v2331
    %v2401 = vpop.f32.mrf.mxu0
    %v2402 = vadd.f32 0.0, %v2401
    %v2403 = vpop.f32.mrf.mxu0
    %2404 = vdwg.mxu0
    %2405 = vrot.lane.b32.xlu0 %v2168, 96
    %v2406 = vpop.permute.xlu0 %2405
    %v2407 = vsel %vm175, %v2168, 0
    %v2409 = vsel %vm175, %v2406, 0
    %2411 = vmatprep.subr.mxu0 0.0
    %2412 = vmatpush1.xpose.msra.mxu0 0.0
    %2413 = vmatprep.subr.mxu0 0.0
    %2414 = vmatpush1.xpose.msra.mxu0 0.0
    %2415 = vmatprep.subr.mxu0 0.0
    %2416 = vmatpush1.xpose.msra.mxu0 0.0
    %2417 = vmatprep.subr.mxu0 0.0
    %2418 = vmatpush1.xpose.msra.mxu0 0.0
    %2419 = vmatprep.subr.mxu0 0.0
    %2420 = vmatpush1.xpose.msra.mxu0 0.0
    %2421 = vmatprep.subr.mxu0 0.0
    %2422 = vmatpush1.xpose.msra.mxu0 0.0
    %2423 = vmatprep.subr.mxu0 0.0
    %2424 = vmatpush1.xpose.msra.mxu0 0.0
    %2425 = vmatprep.subr.mxu0 0.0
    %2426 = vmatpush1.xpose.msra.mxu0 0.0
    %2427 = vmatprep.subr.mxu0 0.0
    %2428 = vmatpush1.xpose.msra.mxu0 0.0
    %2429 = vmatprep.subr.mxu0 0.0
    %2430 = vmatpush1.xpose.msra.mxu0 0.0
    %2431 = vmatprep.subr.mxu0 0.0
    %2432 = vmatpush1.xpose.msra.mxu0 0.0
    %2433 = vmatprep.subr.mxu0 0.0
    %2434 = vmatpush1.xpose.msra.mxu0 0.0
    %2435 = vmatprep.subr.mxu0 0.0
    %2436 = vmatpush1.xpose.msra.mxu0 0.0
    %2437 = vmatprep.subr.mxu0 0.0
    %2438 = vmatpush1.xpose.msra.mxu0 0.0
    %2439 = vmatprep.subr.mxu0 0.0
    %2440 = vmatpush1.xpose.msra.mxu0 0.0
    %2441 = vmatprep.subr.mxu0 0.0
    %2442 = vmatpush1.xpose.msra.mxu0 %v2409
    %2443 = vmatprep.subr.mxu0 0.0
    %2444 = vmatpush2.xpose.msra.mxu0 0.0
    %2445 = vmatprep.subr.mxu0 0.0
    %2446 = vmatpush2.xpose.msra.mxu0 0.0
    %2447 = vmatprep.subr.mxu0 0.0
    %2448 = vmatpush2.xpose.msra.mxu0 0.0
    %2449 = vmatprep.subr.mxu0 0.0
    %2450 = vmatpush2.xpose.msra.mxu0 0.0
    %2451 = vmatprep.subr.mxu0 0.0
    %2452 = vmatpush2.xpose.msra.mxu0 0.0
    %2453 = vmatprep.subr.mxu0 0.0
    %2454 = vmatpush2.xpose.msra.mxu0 0.0
    %2455 = vmatprep.subr.mxu0 0.0
    %2456 = vmatpush2.xpose.msra.mxu0 0.0
    %2457 = vmatprep.subr.mxu0 0.0
    %2458 = vmatpush2.xpose.msra.mxu0 0.0
    %2459 = vmatprep.subr.mxu0 0.0
    %2460 = vmatpush2.xpose.msra.mxu0 0.0
    %2461 = vmatprep.subr.mxu0 0.0
    %2462 = vmatpush2.xpose.msra.mxu0 0.0
    %2463 = vmatprep.subr.mxu0 0.0
    %2464 = vmatpush2.xpose.msra.mxu0 0.0
    %2465 = vmatprep.subr.mxu0 0.0
    %2466 = vmatpush2.xpose.msra.mxu0 0.0
    %2467 = vmatprep.subr.mxu0 0.0
    %2468 = vmatpush2.xpose.msra.mxu0 0.0
    %2469 = vmatprep.subr.mxu0 0.0
    %2470 = vmatpush2.xpose.msra.mxu0 0.0
    %2471 = vmatprep.subr.mxu0 0.0
    %2472 = vmatpush2.xpose.msra.mxu0 0.0
    %2473 = vmatprep.subr.mxu0 0.0
    %2474 = vmatpush2.xpose.msra.mxu0 0.0
    %2475 = vmatprep.mubr.f32.mxu0 0.0
    %2476 = vmatmul.mubr.f32.gmra.mxu0 %v2407
    %v2477 = vpop.f32.mrf.mxu0
    %v2478 = vadd.f32 0.0, %v2477
    %v2479 = vpop.f32.mrf.mxu0
    %2480 = vdwg.mxu0
    %2481 = vrot.lane.b32.xlu0 %v2170, 96
    %v2482 = vpop.permute.xlu0 %2481
    %v2483 = vsel %vm175, %v2170, 0
    %v2485 = vsel %vm175, %v2482, 0
    %2487 = vmatprep.subr.mxu0 0.0
    %2488 = vmatpush1.xpose.msra.mxu0 0.0
    %2489 = vmatprep.subr.mxu0 0.0
    %2490 = vmatpush1.xpose.msra.mxu0 0.0
    %2491 = vmatprep.subr.mxu0 0.0
    %2492 = vmatpush1.xpose.msra.mxu0 0.0
    %2493 = vmatprep.subr.mxu0 0.0
    %2494 = vmatpush1.xpose.msra.mxu0 0.0
    %2495 = vmatprep.subr.mxu0 0.0
    %2496 = vmatpush1.xpose.msra.mxu0 0.0
    %2497 = vmatprep.subr.mxu0 0.0
    %2498 = vmatpush1.xpose.msra.mxu0 0.0
    %2499 = vmatprep.subr.mxu0 0.0
    %2500 = vmatpush1.xpose.msra.mxu0 0.0
    %2501 = vmatprep.subr.mxu0 0.0
    %2502 = vmatpush1.xpose.msra.mxu0 0.0
    %2503 = vmatprep.subr.mxu0 0.0
    %2504 = vmatpush1.xpose.msra.mxu0 0.0
    %2505 = vmatprep.subr.mxu0 0.0
    %2506 = vmatpush1.xpose.msra.mxu0 0.0
    %2507 = vmatprep.subr.mxu0 0.0
    %2508 = vmatpush1.xpose.msra.mxu0 0.0
    %2509 = vmatprep.subr.mxu0 0.0
    %2510 = vmatpush1.xpose.msra.mxu0 0.0
    %2511 = vmatprep.subr.mxu0 0.0
    %2512 = vmatpush1.xpose.msra.mxu0 0.0
    %2513 = vmatprep.subr.mxu0 0.0
    %2514 = vmatpush1.xpose.msra.mxu0 0.0
    %2515 = vmatprep.subr.mxu0 0.0
    %2516 = vmatpush1.xpose.msra.mxu0 0.0
    %2517 = vmatprep.subr.mxu0 0.0
    %2518 = vmatpush1.xpose.msra.mxu0 %v2485
    %2519 = vmatprep.subr.mxu0 0.0
    %2520 = vmatpush2.xpose.msra.mxu0 0.0
    %2521 = vmatprep.subr.mxu0 0.0
    %2522 = vmatpush2.xpose.msra.mxu0 0.0
    %2523 = vmatprep.subr.mxu0 0.0
    %2524 = vmatpush2.xpose.msra.mxu0 0.0
    %2525 = vmatprep.subr.mxu0 0.0
    %2526 = vmatpush2.xpose.msra.mxu0 0.0
    %2527 = vmatprep.subr.mxu0 0.0
    %2528 = vmatpush2.xpose.msra.mxu0 0.0
    %2529 = vmatprep.subr.mxu0 0.0
    %2530 = vmatpush2.xpose.msra.mxu0 0.0
    %2531 = vmatprep.subr.mxu0 0.0
    %2532 = vmatpush2.xpose.msra.mxu0 0.0
    %2533 = vmatprep.subr.mxu0 0.0
    %2534 = vmatpush2.xpose.msra.mxu0 0.0
    %2535 = vmatprep.subr.mxu0 0.0
    %2536 = vmatpush2.xpose.msra.mxu0 0.0
    %2537 = vmatprep.subr.mxu0 0.0
    %2538 = vmatpush2.xpose.msra.mxu0 0.0
    %2539 = vmatprep.subr.mxu0 0.0
    %2540 = vmatpush2.xpose.msra.mxu0 0.0
    %2541 = vmatprep.subr.mxu0 0.0
    %2542 = vmatpush2.xpose.msra.mxu0 0.0
    %2543 = vmatprep.subr.mxu0 0.0
    %2544 = vmatpush2.xpose.msra.mxu0 0.0
    %2545 = vmatprep.subr.mxu0 0.0
    %2546 = vmatpush2.xpose.msra.mxu0 0.0
    %2547 = vmatprep.subr.mxu0 0.0
    %2548 = vmatpush2.xpose.msra.mxu0 0.0
    %2549 = vmatprep.subr.mxu0 0.0
    %2550 = vmatpush2.xpose.msra.mxu0 0.0
    %2551 = vmatprep.mubr.f32.mxu0 0.0
    %2552 = vmatmul.mubr.f32.gmra.mxu0 %v2483
    %v2553 = vpop.f32.mrf.mxu0
    %v2554 = vadd.f32 0.0, %v2553
    %v2555 = vpop.f32.mrf.mxu0
    %2556 = vdwg.mxu0
    %2557 = vrot.lane.b32.xlu0 %v2172, 96
    %v2558 = vpop.permute.xlu0 %2557
    %v2559 = vsel %vm175, %v2172, 0
    %v2561 = vsel %vm175, %v2558, 0
    %2563 = vmatprep.subr.mxu0 0.0
    %2564 = vmatpush1.xpose.msra.mxu0 0.0
    %2565 = vmatprep.subr.mxu0 0.0
    %2566 = vmatpush1.xpose.msra.mxu0 0.0
    %2567 = vmatprep.subr.mxu0 0.0
    %2568 = vmatpush1.xpose.msra.mxu0 0.0
    %2569 = vmatprep.subr.mxu0 0.0
    %2570 = vmatpush1.xpose.msra.mxu0 0.0
    %2571 = vmatprep.subr.mxu0 0.0
    %2572 = vmatpush1.xpose.msra.mxu0 0.0
    %2573 = vmatprep.subr.mxu0 0.0
    %2574 = vmatpush1.xpose.msra.mxu0 0.0
    %2575 = vmatprep.subr.mxu0 0.0
    %2576 = vmatpush1.xpose.msra.mxu0 0.0
    %2577 = vmatprep.subr.mxu0 0.0
    %2578 = vmatpush1.xpose.msra.mxu0 0.0
    %2579 = vmatprep.subr.mxu0 0.0
    %2580 = vmatpush1.xpose.msra.mxu0 0.0
    %2581 = vmatprep.subr.mxu0 0.0
    %2582 = vmatpush1.xpose.msra.mxu0 0.0
    %2583 = vmatprep.subr.mxu0 0.0
    %2584 = vmatpush1.xpose.msra.mxu0 0.0
    %2585 = vmatprep.subr.mxu0 0.0
    %2586 = vmatpush1.xpose.msra.mxu0 0.0
    %2587 = vmatprep.subr.mxu0 0.0
    %2588 = vmatpush1.xpose.msra.mxu0 0.0
    %2589 = vmatprep.subr.mxu0 0.0
    %2590 = vmatpush1.xpose.msra.mxu0 0.0
    %2591 = vmatprep.subr.mxu0 0.0
    %2592 = vmatpush1.xpose.msra.mxu0 0.0
    %2593 = vmatprep.subr.mxu0 0.0
    %2594 = vmatpush1.xpose.msra.mxu0 %v2561
    %2595 = vmatprep.subr.mxu0 0.0
    %2596 = vmatpush2.xpose.msra.mxu0 0.0
    %2597 = vmatprep.subr.mxu0 0.0
    %2598 = vmatpush2.xpose.msra.mxu0 0.0
    %2599 = vmatprep.subr.mxu0 0.0
    %2600 = vmatpush2.xpose.msra.mxu0 0.0
    %2601 = vmatprep.subr.mxu0 0.0
    %2602 = vmatpush2.xpose.msra.mxu0 0.0
    %2603 = vmatprep.subr.mxu0 0.0
    %2604 = vmatpush2.xpose.msra.mxu0 0.0
    %2605 = vmatprep.subr.mxu0 0.0
    %2606 = vmatpush2.xpose.msra.mxu0 0.0
    %2607 = vmatprep.subr.mxu0 0.0
    %2608 = vmatpush2.xpose.msra.mxu0 0.0
    %2609 = vmatprep.subr.mxu0 0.0
    %2610 = vmatpush2.xpose.msra.mxu0 0.0
    %2611 = vmatprep.subr.mxu0 0.0
    %2612 = vmatpush2.xpose.msra.mxu0 0.0
    %2613 = vmatprep.subr.mxu0 0.0
    %2614 = vmatpush2.xpose.msra.mxu0 0.0
    %2615 = vmatprep.subr.mxu0 0.0
    %2616 = vmatpush2.xpose.msra.mxu0 0.0
    %2617 = vmatprep.subr.mxu0 0.0
    %2618 = vmatpush2.xpose.msra.mxu0 0.0
    %2619 = vmatprep.subr.mxu0 0.0
    %2620 = vmatpush2.xpose.msra.mxu0 0.0
    %2621 = vmatprep.subr.mxu0 0.0
    %2622 = vmatpush2.xpose.msra.mxu0 0.0
    %2623 = vmatprep.subr.mxu0 0.0
    %2624 = vmatpush2.xpose.msra.mxu0 0.0
    %2625 = vmatprep.subr.mxu0 0.0
    %2626 = vmatpush2.xpose.msra.mxu0 0.0
    %2627 = vmatprep.mubr.f32.mxu0 0.0
    %2628 = vmatmul.mubr.f32.gmra.mxu0 %v2559
    %v2629 = vpop.f32.mrf.mxu0
    %v2630 = vadd.f32 0.0, %v2629
    %v2631 = vpop.f32.mrf.mxu0
    %2632 = vdwg.mxu0
    %2633 = vrot.lane.b32.xlu0 %v2174, 96
    %v2634 = vpop.permute.xlu0 %2633
    %v2635 = vsel %vm175, %v2174, 0
    %v2637 = vsel %vm175, %v2634, 0
    %2639 = vmatprep.subr.mxu0 0.0
    %2640 = vmatpush1.xpose.msra.mxu0 0.0
    %2641 = vmatprep.subr.mxu0 0.0
    %2642 = vmatpush1.xpose.msra.mxu0 0.0
    %2643 = vmatprep.subr.mxu0 0.0
    %2644 = vmatpush1.xpose.msra.mxu0 0.0
    %2645 = vmatprep.subr.mxu0 0.0
    %2646 = vmatpush1.xpose.msra.mxu0 0.0
    %2647 = vmatprep.subr.mxu0 0.0
    %2648 = vmatpush1.xpose.msra.mxu0 0.0
    %2649 = vmatprep.subr.mxu0 0.0
    %2650 = vmatpush1.xpose.msra.mxu0 0.0
    %2651 = vmatprep.subr.mxu0 0.0
    %2652 = vmatpush1.xpose.msra.mxu0 0.0
    %2653 = vmatprep.subr.mxu0 0.0
    %2654 = vmatpush1.xpose.msra.mxu0 0.0
    %2655 = vmatprep.subr.mxu0 0.0
    %2656 = vmatpush1.xpose.msra.mxu0 0.0
    %2657 = vmatprep.subr.mxu0 0.0
    %2658 = vmatpush1.xpose.msra.mxu0 0.0
    %2659 = vmatprep.subr.mxu0 0.0
    %2660 = vmatpush1.xpose.msra.mxu0 0.0
    %2661 = vmatprep.subr.mxu0 0.0
    %2662 = vmatpush1.xpose.msra.mxu0 0.0
    %2663 = vmatprep.subr.mxu0 0.0
    %2664 = vmatpush1.xpose.msra.mxu0 0.0
    %2665 = vmatprep.subr.mxu0 0.0
    %2666 = vmatpush1.xpose.msra.mxu0 0.0
    %2667 = vmatprep.subr.mxu0 0.0
    %2668 = vmatpush1.xpose.msra.mxu0 0.0
    %2669 = vmatprep.subr.mxu0 0.0
    %2670 = vmatpush1.xpose.msra.mxu0 %v2637
    %2671 = vmatprep.subr.mxu0 0.0
    %2672 = vmatpush2.xpose.msra.mxu0 0.0
    %2673 = vmatprep.subr.mxu0 0.0
    %2674 = vmatpush2.xpose.msra.mxu0 0.0
    %2675 = vmatprep.subr.mxu0 0.0
    %2676 = vmatpush2.xpose.msra.mxu0 0.0
    %2677 = vmatprep.subr.mxu0 0.0
    %2678 = vmatpush2.xpose.msra.mxu0 0.0
    %2679 = vmatprep.subr.mxu0 0.0
    %2680 = vmatpush2.xpose.msra.mxu0 0.0
    %2681 = vmatprep.subr.mxu0 0.0
    %2682 = vmatpush2.xpose.msra.mxu0 0.0
    %2683 = vmatprep.subr.mxu0 0.0
    %2684 = vmatpush2.xpose.msra.mxu0 0.0
    %2685 = vmatprep.subr.mxu0 0.0
    %2686 = vmatpush2.xpose.msra.mxu0 0.0
    %2687 = vmatprep.subr.mxu0 0.0
    %2688 = vmatpush2.xpose.msra.mxu0 0.0
    %2689 = vmatprep.subr.mxu0 0.0
    %2690 = vmatpush2.xpose.msra.mxu0 0.0
    %2691 = vmatprep.subr.mxu0 0.0
    %2692 = vmatpush2.xpose.msra.mxu0 0.0
    %2693 = vmatprep.subr.mxu0 0.0
    %2694 = vmatpush2.xpose.msra.mxu0 0.0
    %2695 = vmatprep.subr.mxu0 0.0
    %2696 = vmatpush2.xpose.msra.mxu0 0.0
    %2697 = vmatprep.subr.mxu0 0.0
    %2698 = vmatpush2.xpose.msra.mxu0 0.0
    %2699 = vmatprep.subr.mxu0 0.0
    %2700 = vmatpush2.xpose.msra.mxu0 0.0
    %2701 = vmatprep.subr.mxu0 0.0
    %2702 = vmatpush2.xpose.msra.mxu0 0.0
    %2703 = vmatprep.mubr.f32.mxu0 0.0
    %2704 = vmatmul.mubr.f32.gmra.mxu0 %v2635
    %v2705 = vpop.f32.mrf.mxu0
    %v2706 = vadd.f32 0.0, %v2705
    %v2707 = vpop.f32.mrf.mxu0
    %2708 = vdwg.mxu0
    %2709 = vrot.lane.b32.xlu0 %v2176, 96
    %v2710 = vpop.permute.xlu0 %2709
    %v2711 = vsel %vm175, %v2176, 0
    %v2713 = vsel %vm175, %v2710, 0
    %2715 = vmatprep.subr.mxu0 0.0
    %2716 = vmatpush1.xpose.msra.mxu0 0.0
    %2717 = vmatprep.subr.mxu0 0.0
    %2718 = vmatpush1.xpose.msra.mxu0 0.0
    %2719 = vmatprep.subr.mxu0 0.0
    %2720 = vmatpush1.xpose.msra.mxu0 0.0
    %2721 = vmatprep.subr.mxu0 0.0
    %2722 = vmatpush1.xpose.msra.mxu0 0.0
    %2723 = vmatprep.subr.mxu0 0.0
    %2724 = vmatpush1.xpose.msra.mxu0 0.0
    %2725 = vmatprep.subr.mxu0 0.0
    %2726 = vmatpush1.xpose.msra.mxu0 0.0
    %2727 = vmatprep.subr.mxu0 0.0
    %2728 = vmatpush1.xpose.msra.mxu0 0.0
    %2729 = vmatprep.subr.mxu0 0.0
    %2730 = vmatpush1.xpose.msra.mxu0 0.0
    %2731 = vmatprep.subr.mxu0 0.0
    %2732 = vmatpush1.xpose.msra.mxu0 0.0
    %2733 = vmatprep.subr.mxu0 0.0
    %2734 = vmatpush1.xpose.msra.mxu0 0.0
    %2735 = vmatprep.subr.mxu0 0.0
    %2736 = vmatpush1.xpose.msra.mxu0 0.0
    %2737 = vmatprep.subr.mxu0 0.0
    %2738 = vmatpush1.xpose.msra.mxu0 0.0
    %2739 = vmatprep.subr.mxu0 0.0
    %2740 = vmatpush1.xpose.msra.mxu0 0.0
    %2741 = vmatprep.subr.mxu0 0.0
    %2742 = vmatpush1.xpose.msra.mxu0 0.0
    %2743 = vmatprep.subr.mxu0 0.0
    %2744 = vmatpush1.xpose.msra.mxu0 0.0
    %2745 = vmatprep.subr.mxu0 0.0
    %2746 = vmatpush1.xpose.msra.mxu0 %v2713
    %2747 = vmatprep.subr.mxu0 0.0
    %2748 = vmatpush2.xpose.msra.mxu0 0.0
    %2749 = vmatprep.subr.mxu0 0.0
    %2750 = vmatpush2.xpose.msra.mxu0 0.0
    %2751 = vmatprep.subr.mxu0 0.0
    %2752 = vmatpush2.xpose.msra.mxu0 0.0
    %2753 = vmatprep.subr.mxu0 0.0
    %2754 = vmatpush2.xpose.msra.mxu0 0.0
    %2755 = vmatprep.subr.mxu0 0.0
    %2756 = vmatpush2.xpose.msra.mxu0 0.0
    %2757 = vmatprep.subr.mxu0 0.0
    %2758 = vmatpush2.xpose.msra.mxu0 0.0
    %2759 = vmatprep.subr.mxu0 0.0
    %2760 = vmatpush2.xpose.msra.mxu0 0.0
    %2761 = vmatprep.subr.mxu0 0.0
    %2762 = vmatpush2.xpose.msra.mxu0 0.0
    %2763 = vmatprep.subr.mxu0 0.0
    %2764 = vmatpush2.xpose.msra.mxu0 0.0
    %2765 = vmatprep.subr.mxu0 0.0
    %2766 = vmatpush2.xpose.msra.mxu0 0.0
    %2767 = vmatprep.subr.mxu0 0.0
    %2768 = vmatpush2.xpose.msra.mxu0 0.0
    %2769 = vmatprep.subr.mxu0 0.0
    %2770 = vmatpush2.xpose.msra.mxu0 0.0
    %2771 = vmatprep.subr.mxu0 0.0
    %2772 = vmatpush2.xpose.msra.mxu0 0.0
    %2773 = vmatprep.subr.mxu0 0.0
    %2774 = vmatpush2.xpose.msra.mxu0 0.0
    %2775 = vmatprep.subr.mxu0 0.0
    %2776 = vmatpush2.xpose.msra.mxu0 0.0
    %2777 = vmatprep.subr.mxu0 0.0
    %2778 = vmatpush2.xpose.msra.mxu0 0.0
    %2779 = vmatprep.mubr.f32.mxu0 0.0
    %2780 = vmatmul.mubr.f32.gmra.mxu0 %v2711
    %v2781 = vpop.f32.mrf.mxu0
    %v2782 = vadd.f32 0.0, %v2781
    %v2783 = vpop.f32.mrf.mxu0
    %2784 = vdwg.mxu0
    %v2785 = vsel %vm175, %v2250, -inf
    %2786 = vmax.xlane.f32.xlu0 %v2785
    %v2787 = vpop.xlane.xlu0 %2786
    %v2788 = vsel %vm175, %v2326, -inf
    %2789 = vmax.xlane.f32.xlu0 %v2788
    %v2790 = vpop.xlane.xlu0 %2789
    %v2791 = vsel %vm175, %v2402, -inf
    %2792 = vmax.xlane.f32.xlu0 %v2791
    %v2793 = vpop.xlane.xlu0 %2792
    %v2794 = vsel %vm175, %v2478, -inf
    %2795 = vmax.xlane.f32.xlu0 %v2794
    %v2796 = vpop.xlane.xlu0 %2795
    %v2797 = vsel %vm175, %v2554, -inf
    %2798 = vmax.xlane.f32.xlu0 %v2797
    %v2799 = vpop.xlane.xlu0 %2798
    %v2800 = vsel %vm175, %v2630, -inf
    %2801 = vmax.xlane.f32.xlu0 %v2800
    %v2802 = vpop.xlane.xlu0 %2801
    %v2803 = vsel %vm175, %v2706, -inf
    %2804 = vmax.xlane.f32.xlu0 %v2803
    %v2805 = vpop.xlane.xlu0 %2804
    %v2806 = vsel %vm175, %v2782, -inf
    %2807 = vmax.xlane.f32.xlu0 %v2806
    %v2808 = vpop.xlane.xlu0 %2807
    %v2809 = vsub.f32 %v2250, %v2787
    %v2810 = vsub.f32 %v2326, %v2790
    %v2811 = vsub.f32 %v2402, %v2793
    %v2812 = vsub.f32 %v2478, %v2796
    %v2813 = vsub.f32 %v2554, %v2799
    %v2814 = vsub.f32 %v2630, %v2802
    %v2815 = vsub.f32 %v2706, %v2805
    %v2816 = vsub.f32 %v2782, %v2808
    %v2817 = vmul.f32 %v2809, 1.442695
    %v2818 = vpow.pop %v2817
    %v2819 = vmul.f32 %v2810, 1.442695
    %v2820 = vpow.pop %v2819
    %v2821 = vmul.f32 %v2811, 1.442695
    %v2822 = vpow.pop %v2821
    %v2823 = vmul.f32 %v2812, 1.442695
    %v2824 = vpow.pop %v2823
    %v2825 = vmul.f32 %v2813, 1.442695
    %v2826 = vpow.pop %v2825
    %v2827 = vmul.f32 %v2814, 1.442695
    %v2828 = vpow.pop %v2827
    %v2829 = vmul.f32 %v2815, 1.442695
    %v2830 = vpow.pop %v2829
    %v2831 = vmul.f32 %v2816, 1.442695
    %v2832 = vpow.pop %v2831
    %v2833 = vsel %vm175, %v2818, 0.0
    %2834 = vadd.xlane.f32.xlu0 %v2833
    %v2835 = vpop.xlane.xlu0 %2834
    %v2836 = vsel %vm175, %v2820, 0.0
    %2837 = vadd.xlane.f32.xlu0 %v2836
    %v2838 = vpop.xlane.xlu0 %2837
    %v2839 = vsel %vm175, %v2822, 0.0
    %2840 = vadd.xlane.f32.xlu0 %v2839
    %v2841 = vpop.xlane.xlu0 %2840
    %v2842 = vsel %vm175, %v2824, 0.0
    %2843 = vadd.xlane.f32.xlu0 %v2842
    %v2844 = vpop.xlane.xlu0 %2843
    %v2845 = vsel %vm175, %v2826, 0.0
    %2846 = vadd.xlane.f32.xlu0 %v2845
    %v2847 = vpop.xlane.xlu0 %2846
    %v2848 = vsel %vm175, %v2828, 0.0
    %2849 = vadd.xlane.f32.xlu0 %v2848
    %v2850 = vpop.xlane.xlu0 %2849
    %v2851 = vsel %vm175, %v2830, 0.0
    %2852 = vadd.xlane.f32.xlu0 %v2851
    %v2853 = vpop.xlane.xlu0 %2852
    %v2854 = vsel %vm175, %v2832, 0.0
    %2855 = vadd.xlane.f32.xlu0 %v2854
    %v2856 = vpop.xlane.xlu0 %2855
    %v2857 = vrcp.pop %v2835
    %v2858 = vmul.f32 %v2818, %v2857
    %v2859 = vrcp.pop %v2838
    %v2860 = vmul.f32 %v2820, %v2859
    %v2861 = vrcp.pop %v2841
    %v2862 = vmul.f32 %v2822, %v2861
    %v2863 = vrcp.pop %v2844
    %v2864 = vmul.f32 %v2824, %v2863
    %v2865 = vrcp.pop %v2847
    %v2866 = vmul.f32 %v2826, %v2865
    %v2867 = vrcp.pop %v2850
    %v2868 = vmul.f32 %v2828, %v2867
    %v2869 = vrcp.pop %v2853
    %v2870 = vmul.f32 %v2830, %v2869
    %v2871 = vrcp.pop %v2856
    %v2872 = vmul.f32 %v2832, %v2871
    %2873 = vrot.lane.b32.xlu0 %v2155, 64
    %v2874 = vpop.permute.xlu0 %2873
    %v2877 = vsel %vm175, %v2858, 0
    %2879 = vmatprep.subr.mxu0 0.0
    %2880 = vmatpush1.msra.mxu0 0.0
    %2881 = vmatprep.subr.mxu0 0.0
    %2882 = vmatpush1.msra.mxu0 0.0
    %2883 = vmatprep.subr.mxu0 0.0
    %2884 = vmatpush1.msra.mxu0 0.0
    %2885 = vmatprep.subr.mxu0 0.0
    %2886 = vmatpush1.msra.mxu0 0.0
    %2887 = vmatprep.subr.mxu0 0.0
    %2888 = vmatpush1.msra.mxu0 0.0
    %2889 = vmatprep.subr.mxu0 0.0
    %2890 = vmatpush1.msra.mxu0 0.0
    %2891 = vmatprep.subr.mxu0 0.0
    %2892 = vmatpush1.msra.mxu0 0.0
    %2893 = vmatprep.subr.mxu0 0.0
    %2894 = vmatpush1.msra.mxu0 0.0
    %2895 = vmatprep.subr.mxu0 0.0
    %2896 = vmatpush1.msra.mxu0 0.0
    %2897 = vmatprep.subr.mxu0 0.0
    %2898 = vmatpush1.msra.mxu0 0.0
    %2899 = vmatprep.subr.mxu0 0.0
    %2900 = vmatpush1.msra.mxu0 0.0
    %2901 = vmatprep.subr.mxu0 0.0
    %2902 = vmatpush1.msra.mxu0 0.0
    %2903 = vmatprep.subr.mxu0 0.0
    %2904 = vmatpush1.msra.mxu0 0.0
    %2905 = vmatprep.subr.mxu0 0.0
    %2906 = vmatpush1.msra.mxu0 0.0
    %2907 = vmatprep.subr.mxu0 0.0
    %2908 = vmatpush1.msra.mxu0 0.0
    %2909 = vmatprep.subr.mxu0 0.0
    %2910 = vmatpush1.msra.mxu0 %v2874
    %2911 = vmatprep.subr.mxu0 0.0
    %2912 = vmatpush2.msra.mxu0 0.0
    %2913 = vmatprep.subr.mxu0 0.0
    %2914 = vmatpush2.msra.mxu0 0.0
    %2915 = vmatprep.subr.mxu0 0.0
    %2916 = vmatpush2.msra.mxu0 0.0
    %2917 = vmatprep.subr.mxu0 0.0
    %2918 = vmatpush2.msra.mxu0 0.0
    %2919 = vmatprep.subr.mxu0 0.0
    %2920 = vmatpush2.msra.mxu0 0.0
    %2921 = vmatprep.subr.mxu0 0.0
    %2922 = vmatpush2.msra.mxu0 0.0
    %2923 = vmatprep.subr.mxu0 0.0
    %2924 = vmatpush2.msra.mxu0 0.0
    %2925 = vmatprep.subr.mxu0 0.0
    %2926 = vmatpush2.msra.mxu0 0.0
    %2927 = vmatprep.subr.mxu0 0.0
    %2928 = vmatpush2.msra.mxu0 0.0
    %2929 = vmatprep.subr.mxu0 0.0
    %2930 = vmatpush2.msra.mxu0 0.0
    %2931 = vmatprep.subr.mxu0 0.0
    %2932 = vmatpush2.msra.mxu0 0.0
    %2933 = vmatprep.subr.mxu0 0.0
    %2934 = vmatpush2.msra.mxu0 0.0
    %2935 = vmatprep.subr.mxu0 0.0
    %2936 = vmatpush2.msra.mxu0 0.0
    %2937 = vmatprep.subr.mxu0 0.0
    %2938 = vmatpush2.msra.mxu0 0.0
    %2939 = vmatprep.subr.mxu0 0.0
    %2940 = vmatpush2.msra.mxu0 0.0
    %2941 = vmatprep.subr.mxu0 0.0
    %2942 = vmatpush2.msra.mxu0 0.0
    %2943 = vmatprep.mubr.f32.mxu0 0.0
    %2944 = vmatmul.mubr.f32.gmra.mxu0 %v2877
    %v2945 = vpop.f32.mrf.mxu0
    %v2946 = vadd.f32 0.0, %v2945
    %v2947 = vpop.f32.mrf.mxu0
    %2948 = vdwg.mxu0
    %2949 = vrot.lane.b32.xlu0 %v2160, 64
    %v2950 = vpop.permute.xlu0 %2949
    %v2953 = vsel %vm175, %v2860, 0
    %2955 = vmatprep.subr.mxu0 0.0
    %2956 = vmatpush1.msra.mxu0 0.0
    %2957 = vmatprep.subr.mxu0 0.0
    %2958 = vmatpush1.msra.mxu0 0.0
    %2959 = vmatprep.subr.mxu0 0.0
    %2960 = vmatpush1.msra.mxu0 0.0
    %2961 = vmatprep.subr.mxu0 0.0
    %2962 = vmatpush1.msra.mxu0 0.0
    %2963 = vmatprep.subr.mxu0 0.0
    %2964 = vmatpush1.msra.mxu0 0.0
    %2965 = vmatprep.subr.mxu0 0.0
    %2966 = vmatpush1.msra.mxu0 0.0
    %2967 = vmatprep.subr.mxu0 0.0
    %2968 = vmatpush1.msra.mxu0 0.0
    %2969 = vmatprep.subr.mxu0 0.0
    %2970 = vmatpush1.msra.mxu0 0.0
    %2971 = vmatprep.subr.mxu0 0.0
    %2972 = vmatpush1.msra.mxu0 0.0
    %2973 = vmatprep.subr.mxu0 0.0
    %2974 = vmatpush1.msra.mxu0 0.0
    %2975 = vmatprep.subr.mxu0 0.0
    %2976 = vmatpush1.msra.mxu0 0.0
    %2977 = vmatprep.subr.mxu0 0.0
    %2978 = vmatpush1.msra.mxu0 0.0
    %2979 = vmatprep.subr.mxu0 0.0
    %2980 = vmatpush1.msra.mxu0 0.0
    %2981 = vmatprep.subr.mxu0 0.0
    %2982 = vmatpush1.msra.mxu0 0.0
    %2983 = vmatprep.subr.mxu0 0.0
    %2984 = vmatpush1.msra.mxu0 0.0
    %2985 = vmatprep.subr.mxu0 0.0
    %2986 = vmatpush1.msra.mxu0 %v2950
    %2987 = vmatprep.subr.mxu0 0.0
    %2988 = vmatpush2.msra.mxu0 0.0
    %2989 = vmatprep.subr.mxu0 0.0
    %2990 = vmatpush2.msra.mxu0 0.0
    %2991 = vmatprep.subr.mxu0 0.0
    %2992 = vmatpush2.msra.mxu0 0.0
    %2993 = vmatprep.subr.mxu0 0.0
    %2994 = vmatpush2.msra.mxu0 0.0
    %2995 = vmatprep.subr.mxu0 0.0
    %2996 = vmatpush2.msra.mxu0 0.0
    %2997 = vmatprep.subr.mxu0 0.0
    %2998 = vmatpush2.msra.mxu0 0.0
    %2999 = vmatprep.subr.mxu0 0.0
    %3000 = vmatpush2.msra.mxu0 0.0
    %3001 = vmatprep.subr.mxu0 0.0
    %3002 = vmatpush2.msra.mxu0 0.0
    %3003 = vmatprep.subr.mxu0 0.0
    %3004 = vmatpush2.msra.mxu0 0.0
    %3005 = vmatprep.subr.mxu0 0.0
    %3006 = vmatpush2.msra.mxu0 0.0
    %3007 = vmatprep.subr.mxu0 0.0
    %3008 = vmatpush2.msra.mxu0 0.0
    %3009 = vmatprep.subr.mxu0 0.0
    %3010 = vmatpush2.msra.mxu0 0.0
    %3011 = vmatprep.subr.mxu0 0.0
    %3012 = vmatpush2.msra.mxu0 0.0
    %3013 = vmatprep.subr.mxu0 0.0
    %3014 = vmatpush2.msra.mxu0 0.0
    %3015 = vmatprep.subr.mxu0 0.0
    %3016 = vmatpush2.msra.mxu0 0.0
    %3017 = vmatprep.subr.mxu0 0.0
    %3018 = vmatpush2.msra.mxu0 0.0
    %3019 = vmatprep.mubr.f32.mxu0 0.0
    %3020 = vmatmul.mubr.f32.gmra.mxu0 %v2953
    %v3021 = vpop.f32.mrf.mxu0
    %v3022 = vadd.f32 0.0, %v3021
    %v3023 = vpop.f32.mrf.mxu0
    %3024 = vdwg.mxu0
    %3025 = vrot.lane.b32.xlu0 %v2166, 64
    %v3026 = vpop.permute.xlu0 %3025
    %v3029 = vsel %vm175, %v2862, 0
    %3031 = vmatprep.subr.mxu0 0.0
    %3032 = vmatpush1.msra.mxu0 0.0
    %3033 = vmatprep.subr.mxu0 0.0
    %3034 = vmatpush1.msra.mxu0 0.0
    %3035 = vmatprep.subr.mxu0 0.0
    %3036 = vmatpush1.msra.mxu0 0.0
    %3037 = vmatprep.subr.mxu0 0.0
    %3038 = vmatpush1.msra.mxu0 0.0
    %3039 = vmatprep.subr.mxu0 0.0
    %3040 = vmatpush1.msra.mxu0 0.0
    %3041 = vmatprep.subr.mxu0 0.0
    %3042 = vmatpush1.msra.mxu0 0.0
    %3043 = vmatprep.subr.mxu0 0.0
    %3044 = vmatpush1.msra.mxu0 0.0
    %3045 = vmatprep.subr.mxu0 0.0
    %3046 = vmatpush1.msra.mxu0 0.0
    %3047 = vmatprep.subr.mxu0 0.0
    %3048 = vmatpush1.msra.mxu0 0.0
    %3049 = vmatprep.subr.mxu0 0.0
    %3050 = vmatpush1.msra.mxu0 0.0
    %3051 = vmatprep.subr.mxu0 0.0
    %3052 = vmatpush1.msra.mxu0 0.0
    %3053 = vmatprep.subr.mxu0 0.0
    %3054 = vmatpush1.msra.mxu0 0.0
    %3055 = vmatprep.subr.mxu0 0.0
    %3056 = vmatpush1.msra.mxu0 0.0
    %3057 = vmatprep.subr.mxu0 0.0
    %3058 = vmatpush1.msra.mxu0 0.0
    %3059 = vmatprep.subr.mxu0 0.0
    %3060 = vmatpush1.msra.mxu0 0.0
    %3061 = vmatprep.subr.mxu0 0.0
    %3062 = vmatpush1.msra.mxu0 %v3026
    %3063 = vmatprep.subr.mxu0 0.0
    %3064 = vmatpush2.msra.mxu0 0.0
    %3065 = vmatprep.subr.mxu0 0.0
    %3066 = vmatpush2.msra.mxu0 0.0
    %3067 = vmatprep.subr.mxu0 0.0
    %3068 = vmatpush2.msra.mxu0 0.0
    %3069 = vmatprep.subr.mxu0 0.0
    %3070 = vmatpush2.msra.mxu0 0.0
    %3071 = vmatprep.subr.mxu0 0.0
    %3072 = vmatpush2.msra.mxu0 0.0
    %3073 = vmatprep.subr.mxu0 0.0
    %3074 = vmatpush2.msra.mxu0 0.0
    %3075 = vmatprep.subr.mxu0 0.0
    %3076 = vmatpush2.msra.mxu0 0.0
    %3077 = vmatprep.subr.mxu0 0.0
    %3078 = vmatpush2.msra.mxu0 0.0
    %3079 = vmatprep.subr.mxu0 0.0
    %3080 = vmatpush2.msra.mxu0 0.0
    %3081 = vmatprep.subr.mxu0 0.0
    %3082 = vmatpush2.msra.mxu0 0.0
    %3083 = vmatprep.subr.mxu0 0.0
    %3084 = vmatpush2.msra.mxu0 0.0
    %3085 = vmatprep.subr.mxu0 0.0
    %3086 = vmatpush2.msra.mxu0 0.0
    %3087 = vmatprep.subr.mxu0 0.0
    %3088 = vmatpush2.msra.mxu0 0.0
    %3089 = vmatprep.subr.mxu0 0.0
    %3090 = vmatpush2.msra.mxu0 0.0
    %3091 = vmatprep.subr.mxu0 0.0
    %3092 = vmatpush2.msra.mxu0 0.0
    %3093 = vmatprep.subr.mxu0 0.0
    %3094 = vmatpush2.msra.mxu0 0.0
    %3095 = vmatprep.mubr.f32.mxu0 0.0
    %3096 = vmatmul.mubr.f32.gmra.mxu0 %v3029
    %v3097 = vpop.f32.mrf.mxu0
    %v3098 = vadd.f32 0.0, %v3097
    %v3099 = vpop.f32.mrf.mxu0
    %3100 = vdwg.mxu0
    %3101 = vrot.lane.b32.xlu0 %v2168, 64
    %v3102 = vpop.permute.xlu0 %3101
    %v3105 = vsel %vm175, %v2864, 0
    %3107 = vmatprep.subr.mxu0 0.0
    %3108 = vmatpush1.msra.mxu0 0.0
    %3109 = vmatprep.subr.mxu0 0.0
    %3110 = vmatpush1.msra.mxu0 0.0
    %3111 = vmatprep.subr.mxu0 0.0
    %3112 = vmatpush1.msra.mxu0 0.0
    %3113 = vmatprep.subr.mxu0 0.0
    %3114 = vmatpush1.msra.mxu0 0.0
    %3115 = vmatprep.subr.mxu0 0.0
    %3116 = vmatpush1.msra.mxu0 0.0
    %3117 = vmatprep.subr.mxu0 0.0
    %3118 = vmatpush1.msra.mxu0 0.0
    %3119 = vmatprep.subr.mxu0 0.0
    %3120 = vmatpush1.msra.mxu0 0.0
    %3121 = vmatprep.subr.mxu0 0.0
    %3122 = vmatpush1.msra.mxu0 0.0
    %3123 = vmatprep.subr.mxu0 0.0
    %3124 = vmatpush1.msra.mxu0 0.0
    %3125 = vmatprep.subr.mxu0 0.0
    %3126 = vmatpush1.msra.mxu0 0.0
    %3127 = vmatprep.subr.mxu0 0.0
    %3128 = vmatpush1.msra.mxu0 0.0
    %3129 = vmatprep.subr.mxu0 0.0
    %3130 = vmatpush1.msra.mxu0 0.0
    %3131 = vmatprep.subr.mxu0 0.0
    %3132 = vmatpush1.msra.mxu0 0.0
    %3133 = vmatprep.subr.mxu0 0.0
    %3134 = vmatpush1.msra.mxu0 0.0
    %3135 = vmatprep.subr.mxu0 0.0
    %3136 = vmatpush1.msra.mxu0 0.0
    %3137 = vmatprep.subr.mxu0 0.0
    %3138 = vmatpush1.msra.mxu0 %v3102
    %3139 = vmatprep.subr.mxu0 0.0
    %3140 = vmatpush2.msra.mxu0 0.0
    %3141 = vmatprep.subr.mxu0 0.0
    %3142 = vmatpush2.msra.mxu0 0.0
    %3143 = vmatprep.subr.mxu0 0.0
    %3144 = vmatpush2.msra.mxu0 0.0
    %3145 = vmatprep.subr.mxu0 0.0
    %3146 = vmatpush2.msra.mxu0 0.0
    %3147 = vmatprep.subr.mxu0 0.0
    %3148 = vmatpush2.msra.mxu0 0.0
    %3149 = vmatprep.subr.mxu0 0.0
    %3150 = vmatpush2.msra.mxu0 0.0
    %3151 = vmatprep.subr.mxu0 0.0
    %3152 = vmatpush2.msra.mxu0 0.0
    %3153 = vmatprep.subr.mxu0 0.0
    %3154 = vmatpush2.msra.mxu0 0.0
    %3155 = vmatprep.subr.mxu0 0.0
    %3156 = vmatpush2.msra.mxu0 0.0
    %3157 = vmatprep.subr.mxu0 0.0
    %3158 = vmatpush2.msra.mxu0 0.0
    %3159 = vmatprep.subr.mxu0 0.0
    %3160 = vmatpush2.msra.mxu0 0.0
    %3161 = vmatprep.subr.mxu0 0.0
    %3162 = vmatpush2.msra.mxu0 0.0
    %3163 = vmatprep.subr.mxu0 0.0
    %3164 = vmatpush2.msra.mxu0 0.0
    %3165 = vmatprep.subr.mxu0 0.0
    %3166 = vmatpush2.msra.mxu0 0.0
    %3167 = vmatprep.subr.mxu0 0.0
    %3168 = vmatpush2.msra.mxu0 0.0
    %3169 = vmatprep.subr.mxu0 0.0
    %3170 = vmatpush2.msra.mxu0 0.0
    %3171 = vmatprep.mubr.f32.mxu0 0.0
    %3172 = vmatmul.mubr.f32.gmra.mxu0 %v3105
    %v3173 = vpop.f32.mrf.mxu0
    %v3174 = vadd.f32 0.0, %v3173
    %v3175 = vpop.f32.mrf.mxu0
    %3176 = vdwg.mxu0
    %3177 = vrot.lane.b32.xlu0 %v2170, 64
    %v3178 = vpop.permute.xlu0 %3177
    %v3181 = vsel %vm175, %v2866, 0
    %3183 = vmatprep.subr.mxu0 0.0
    %3184 = vmatpush1.msra.mxu0 0.0
    %3185 = vmatprep.subr.mxu0 0.0
    %3186 = vmatpush1.msra.mxu0 0.0
    %3187 = vmatprep.subr.mxu0 0.0
    %3188 = vmatpush1.msra.mxu0 0.0
    %3189 = vmatprep.subr.mxu0 0.0
    %3190 = vmatpush1.msra.mxu0 0.0
    %3191 = vmatprep.subr.mxu0 0.0
    %3192 = vmatpush1.msra.mxu0 0.0
    %3193 = vmatprep.subr.mxu0 0.0
    %3194 = vmatpush1.msra.mxu0 0.0
    %3195 = vmatprep.subr.mxu0 0.0
    %3196 = vmatpush1.msra.mxu0 0.0
    %3197 = vmatprep.subr.mxu0 0.0
    %3198 = vmatpush1.msra.mxu0 0.0
    %3199 = vmatprep.subr.mxu0 0.0
    %3200 = vmatpush1.msra.mxu0 0.0
    %3201 = vmatprep.subr.mxu0 0.0
    %3202 = vmatpush1.msra.mxu0 0.0
    %3203 = vmatprep.subr.mxu0 0.0
    %3204 = vmatpush1.msra.mxu0 0.0
    %3205 = vmatprep.subr.mxu0 0.0
    %3206 = vmatpush1.msra.mxu0 0.0
    %3207 = vmatprep.subr.mxu0 0.0
    %3208 = vmatpush1.msra.mxu0 0.0
    %3209 = vmatprep.subr.mxu0 0.0
    %3210 = vmatpush1.msra.mxu0 0.0
    %3211 = vmatprep.subr.mxu0 0.0
    %3212 = vmatpush1.msra.mxu0 0.0
    %3213 = vmatprep.subr.mxu0 0.0
    %3214 = vmatpush1.msra.mxu0 %v3178
    %3215 = vmatprep.subr.mxu0 0.0
    %3216 = vmatpush2.msra.mxu0 0.0
    %3217 = vmatprep.subr.mxu0 0.0
    %3218 = vmatpush2.msra.mxu0 0.0
    %3219 = vmatprep.subr.mxu0 0.0
    %3220 = vmatpush2.msra.mxu0 0.0
    %3221 = vmatprep.subr.mxu0 0.0
    %3222 = vmatpush2.msra.mxu0 0.0
    %3223 = vmatprep.subr.mxu0 0.0
    %3224 = vmatpush2.msra.mxu0 0.0
    %3225 = vmatprep.subr.mxu0 0.0
    %3226 = vmatpush2.msra.mxu0 0.0
    %3227 = vmatprep.subr.mxu0 0.0
    %3228 = vmatpush2.msra.mxu0 0.0
    %3229 = vmatprep.subr.mxu0 0.0
    %3230 = vmatpush2.msra.mxu0 0.0
    %3231 = vmatprep.subr.mxu0 0.0
    %3232 = vmatpush2.msra.mxu0 0.0
    %3233 = vmatprep.subr.mxu0 0.0
    %3234 = vmatpush2.msra.mxu0 0.0
    %3235 = vmatprep.subr.mxu0 0.0
    %3236 = vmatpush2.msra.mxu0 0.0
    %3237 = vmatprep.subr.mxu0 0.0
    %3238 = vmatpush2.msra.mxu0 0.0
    %3239 = vmatprep.subr.mxu0 0.0
    %3240 = vmatpush2.msra.mxu0 0.0
    %3241 = vmatprep.subr.mxu0 0.0
    %3242 = vmatpush2.msra.mxu0 0.0
    %3243 = vmatprep.subr.mxu0 0.0
    %3244 = vmatpush2.msra.mxu0 0.0
    %3245 = vmatprep.subr.mxu0 0.0
    %3246 = vmatpush2.msra.mxu0 0.0
    %3247 = vmatprep.mubr.f32.mxu0 0.0
    %3248 = vmatmul.mubr.f32.gmra.mxu0 %v3181
    %v3249 = vpop.f32.mrf.mxu0
    %v3250 = vadd.f32 0.0, %v3249
    %v3251 = vpop.f32.mrf.mxu0
    %3252 = vdwg.mxu0
    %3253 = vrot.lane.b32.xlu0 %v2172, 64
    %v3254 = vpop.permute.xlu0 %3253
    %v3257 = vsel %vm175, %v2868, 0
    %3259 = vmatprep.subr.mxu0 0.0
    %3260 = vmatpush1.msra.mxu0 0.0
    %3261 = vmatprep.subr.mxu0 0.0
    %3262 = vmatpush1.msra.mxu0 0.0
    %3263 = vmatprep.subr.mxu0 0.0
    %3264 = vmatpush1.msra.mxu0 0.0
    %3265 = vmatprep.subr.mxu0 0.0
    %3266 = vmatpush1.msra.mxu0 0.0
    %3267 = vmatprep.subr.mxu0 0.0
    %3268 = vmatpush1.msra.mxu0 0.0
    %3269 = vmatprep.subr.mxu0 0.0
    %3270 = vmatpush1.msra.mxu0 0.0
    %3271 = vmatprep.subr.mxu0 0.0
    %3272 = vmatpush1.msra.mxu0 0.0
    %3273 = vmatprep.subr.mxu0 0.0
    %3274 = vmatpush1.msra.mxu0 0.0
    %3275 = vmatprep.subr.mxu0 0.0
    %3276 = vmatpush1.msra.mxu0 0.0
    %3277 = vmatprep.subr.mxu0 0.0
    %3278 = vmatpush1.msra.mxu0 0.0
    %3279 = vmatprep.subr.mxu0 0.0
    %3280 = vmatpush1.msra.mxu0 0.0
    %3281 = vmatprep.subr.mxu0 0.0
    %3282 = vmatpush1.msra.mxu0 0.0
    %3283 = vmatprep.subr.mxu0 0.0
    %3284 = vmatpush1.msra.mxu0 0.0
    %3285 = vmatprep.subr.mxu0 0.0
    %3286 = vmatpush1.msra.mxu0 0.0
    %3287 = vmatprep.subr.mxu0 0.0
    %3288 = vmatpush1.msra.mxu0 0.0
    %3289 = vmatprep.subr.mxu0 0.0
    %3290 = vmatpush1.msra.mxu0 %v3254
    %3291 = vmatprep.subr.mxu0 0.0
    %3292 = vmatpush2.msra.mxu0 0.0
    %3293 = vmatprep.subr.mxu0 0.0
    %3294 = vmatpush2.msra.mxu0 0.0
    %3295 = vmatprep.subr.mxu0 0.0
    %3296 = vmatpush2.msra.mxu0 0.0
    %3297 = vmatprep.subr.mxu0 0.0
    %3298 = vmatpush2.msra.mxu0 0.0
    %3299 = vmatprep.subr.mxu0 0.0
    %3300 = vmatpush2.msra.mxu0 0.0
    %3301 = vmatprep.subr.mxu0 0.0
    %3302 = vmatpush2.msra.mxu0 0.0
    %3303 = vmatprep.subr.mxu0 0.0
    %3304 = vmatpush2.msra.mxu0 0.0
    %3305 = vmatprep.subr.mxu0 0.0
    %3306 = vmatpush2.msra.mxu0 0.0
    %3307 = vmatprep.subr.mxu0 0.0
    %3308 = vmatpush2.msra.mxu0 0.0
    %3309 = vmatprep.subr.mxu0 0.0
    %3310 = vmatpush2.msra.mxu0 0.0
    %3311 = vmatprep.subr.mxu0 0.0
    %3312 = vmatpush2.msra.mxu0 0.0
    %3313 = vmatprep.subr.mxu0 0.0
    %3314 = vmatpush2.msra.mxu0 0.0
    %3315 = vmatprep.subr.mxu0 0.0
    %3316 = vmatpush2.msra.mxu0 0.0
    %3317 = vmatprep.subr.mxu0 0.0
    %3318 = vmatpush2.msra.mxu0 0.0
    %3319 = vmatprep.subr.mxu0 0.0
    %3320 = vmatpush2.msra.mxu0 0.0
    %3321 = vmatprep.subr.mxu0 0.0
    %3322 = vmatpush2.msra.mxu0 0.0
    %3323 = vmatprep.mubr.f32.mxu0 0.0
    %3324 = vmatmul.mubr.f32.gmra.mxu0 %v3257
    %v3325 = vpop.f32.mrf.mxu0
    %v3326 = vadd.f32 0.0, %v3325
    %v3327 = vpop.f32.mrf.mxu0
    %3328 = vdwg.mxu0
    %3329 = vrot.lane.b32.xlu0 %v2174, 64
    %v3330 = vpop.permute.xlu0 %3329
    %v3333 = vsel %vm175, %v2870, 0
    %3335 = vmatprep.subr.mxu0 0.0
    %3336 = vmatpush1.msra.mxu0 0.0
    %3337 = vmatprep.subr.mxu0 0.0
    %3338 = vmatpush1.msra.mxu0 0.0
    %3339 = vmatprep.subr.mxu0 0.0
    %3340 = vmatpush1.msra.mxu0 0.0
    %3341 = vmatprep.subr.mxu0 0.0
    %3342 = vmatpush1.msra.mxu0 0.0
    %3343 = vmatprep.subr.mxu0 0.0
    %3344 = vmatpush1.msra.mxu0 0.0
    %3345 = vmatprep.subr.mxu0 0.0
    %3346 = vmatpush1.msra.mxu0 0.0
    %3347 = vmatprep.subr.mxu0 0.0
    %3348 = vmatpush1.msra.mxu0 0.0
    %3349 = vmatprep.subr.mxu0 0.0
    %3350 = vmatpush1.msra.mxu0 0.0
    %3351 = vmatprep.subr.mxu0 0.0
    %3352 = vmatpush1.msra.mxu0 0.0
    %3353 = vmatprep.subr.mxu0 0.0
    %3354 = vmatpush1.msra.mxu0 0.0
    %3355 = vmatprep.subr.mxu0 0.0
    %3356 = vmatpush1.msra.mxu0 0.0
    %3357 = vmatprep.subr.mxu0 0.0
    %3358 = vmatpush1.msra.mxu0 0.0
    %3359 = vmatprep.subr.mxu0 0.0
    %3360 = vmatpush1.msra.mxu0 0.0
    %3361 = vmatprep.subr.mxu0 0.0
    %3362 = vmatpush1.msra.mxu0 0.0
    %3363 = vmatprep.subr.mxu0 0.0
    %3364 = vmatpush1.msra.mxu0 0.0
    %3365 = vmatprep.subr.mxu0 0.0
    %3366 = vmatpush1.msra.mxu0 %v3330
    %3367 = vmatprep.subr.mxu0 0.0
    %3368 = vmatpush2.msra.mxu0 0.0
    %3369 = vmatprep.subr.mxu0 0.0
    %3370 = vmatpush2.msra.mxu0 0.0
    %3371 = vmatprep.subr.mxu0 0.0
    %3372 = vmatpush2.msra.mxu0 0.0
    %3373 = vmatprep.subr.mxu0 0.0
    %3374 = vmatpush2.msra.mxu0 0.0
    %3375 = vmatprep.subr.mxu0 0.0
    %3376 = vmatpush2.msra.mxu0 0.0
    %3377 = vmatprep.subr.mxu0 0.0
    %3378 = vmatpush2.msra.mxu0 0.0
    %3379 = vmatprep.subr.mxu0 0.0
    %3380 = vmatpush2.msra.mxu0 0.0
    %3381 = vmatprep.subr.mxu0 0.0
    %3382 = vmatpush2.msra.mxu0 0.0
    %3383 = vmatprep.subr.mxu0 0.0
    %3384 = vmatpush2.msra.mxu0 0.0
    %3385 = vmatprep.subr.mxu0 0.0
    %3386 = vmatpush2.msra.mxu0 0.0
    %3387 = vmatprep.subr.mxu0 0.0
    %3388 = vmatpush2.msra.mxu0 0.0
    %3389 = vmatprep.subr.mxu0 0.0
    %3390 = vmatpush2.msra.mxu0 0.0
    %3391 = vmatprep.subr.mxu0 0.0
    %3392 = vmatpush2.msra.mxu0 0.0
    %3393 = vmatprep.subr.mxu0 0.0
    %3394 = vmatpush2.msra.mxu0 0.0
    %3395 = vmatprep.subr.mxu0 0.0
    %3396 = vmatpush2.msra.mxu0 0.0
    %3397 = vmatprep.subr.mxu0 0.0
    %3398 = vmatpush2.msra.mxu0 0.0
    %3399 = vmatprep.mubr.f32.mxu0 0.0
    %3400 = vmatmul.mubr.f32.gmra.mxu0 %v3333
    %v3401 = vpop.f32.mrf.mxu0
    %v3402 = vadd.f32 0.0, %v3401
    %v3403 = vpop.f32.mrf.mxu0
    %3404 = vdwg.mxu0
    %3405 = vrot.lane.b32.xlu0 %v2176, 64
    %v3406 = vpop.permute.xlu0 %3405
    %v3409 = vsel %vm175, %v2872, 0
    %3411 = vmatprep.subr.mxu0 0.0
    %3412 = vmatpush1.msra.mxu0 0.0
    %3413 = vmatprep.subr.mxu0 0.0
    %3414 = vmatpush1.msra.mxu0 0.0
    %3415 = vmatprep.subr.mxu0 0.0
    %3416 = vmatpush1.msra.mxu0 0.0
    %3417 = vmatprep.subr.mxu0 0.0
    %3418 = vmatpush1.msra.mxu0 0.0
    %3419 = vmatprep.subr.mxu0 0.0
    %3420 = vmatpush1.msra.mxu0 0.0
    %3421 = vmatprep.subr.mxu0 0.0
    %3422 = vmatpush1.msra.mxu0 0.0
    %3423 = vmatprep.subr.mxu0 0.0
    %3424 = vmatpush1.msra.mxu0 0.0
    %3425 = vmatprep.subr.mxu0 0.0
    %3426 = vmatpush1.msra.mxu0 0.0
    %3427 = vmatprep.subr.mxu0 0.0
    %3428 = vmatpush1.msra.mxu0 0.0
    %3429 = vmatprep.subr.mxu0 0.0
    %3430 = vmatpush1.msra.mxu0 0.0
    %3431 = vmatprep.subr.mxu0 0.0
    %3432 = vmatpush1.msra.mxu0 0.0
    %3433 = vmatprep.subr.mxu0 0.0
    %3434 = vmatpush1.msra.mxu0 0.0
    %3435 = vmatprep.subr.mxu0 0.0
    %3436 = vmatpush1.msra.mxu0 0.0
    %3437 = vmatprep.subr.mxu0 0.0
    %3438 = vmatpush1.msra.mxu0 0.0
    %3439 = vmatprep.subr.mxu0 0.0
    %3440 = vmatpush1.msra.mxu0 0.0
    %3441 = vmatprep.subr.mxu0 0.0
    %3442 = vmatpush1.msra.mxu0 %v3406
    %3443 = vmatprep.subr.mxu0 0.0
    %3444 = vmatpush2.msra.mxu0 0.0
    %3445 = vmatprep.subr.mxu0 0.0
    %3446 = vmatpush2.msra.mxu0 0.0
    %3447 = vmatprep.subr.mxu0 0.0
    %3448 = vmatpush2.msra.mxu0 0.0
    %3449 = vmatprep.subr.mxu0 0.0
    %3450 = vmatpush2.msra.mxu0 0.0
    %3451 = vmatprep.subr.mxu0 0.0
    %3452 = vmatpush2.msra.mxu0 0.0
    %3453 = vmatprep.subr.mxu0 0.0
    %3454 = vmatpush2.msra.mxu0 0.0
    %3455 = vmatprep.subr.mxu0 0.0
    %3456 = vmatpush2.msra.mxu0 0.0
    %3457 = vmatprep.subr.mxu0 0.0
    %3458 = vmatpush2.msra.mxu0 0.0
    %3459 = vmatprep.subr.mxu0 0.0
    %3460 = vmatpush2.msra.mxu0 0.0
    %3461 = vmatprep.subr.mxu0 0.0
    %3462 = vmatpush2.msra.mxu0 0.0
    %3463 = vmatprep.subr.mxu0 0.0
    %3464 = vmatpush2.msra.mxu0 0.0
    %3465 = vmatprep.subr.mxu0 0.0
    %3466 = vmatpush2.msra.mxu0 0.0
    %3467 = vmatprep.subr.mxu0 0.0
    %3468 = vmatpush2.msra.mxu0 0.0
    %3469 = vmatprep.subr.mxu0 0.0
    %3470 = vmatpush2.msra.mxu0 0.0
    %3471 = vmatprep.subr.mxu0 0.0
    %3472 = vmatpush2.msra.mxu0 0.0
    %3473 = vmatprep.subr.mxu0 0.0
    %3474 = vmatpush2.msra.mxu0 0.0
    %3475 = vmatprep.mubr.f32.mxu0 0.0
    %3476 = vmatmul.mubr.f32.gmra.mxu0 %v3409
    %v3477 = vpop.f32.mrf.mxu0
    %v3478 = vadd.f32 0.0, %v3477
    %v3479 = vpop.f32.mrf.mxu0
    %3480 = vdwg.mxu0
    %v3482 = vsel %vm175, %v3098, 0
    %v3485 = vsel %vm175, %v3174, 0
    %3487 = vmatprep.subr.mxu0 0.0
    %3488 = vmatpush1.msra.mxu0 0.0
    %3489 = vmatprep.subr.mxu0 0.0
    %3490 = vmatpush1.msra.mxu0 0.0
    %3491 = vmatprep.subr.mxu0 0.0
    %3492 = vmatpush1.msra.mxu0 0.0
    %3493 = vmatprep.subr.mxu0 0.0
    %3494 = vmatpush1.msra.mxu0 0.0
    %3495 = vmatprep.subr.mxu0 0.0
    %3496 = vmatpush1.msra.mxu0 0.0
    %3497 = vmatprep.subr.mxu0 0.0
    %3498 = vmatpush1.msra.mxu0 0.0
    %3499 = vmatprep.subr.mxu0 0.0
    %3500 = vmatpush1.msra.mxu0 0.0
    %3501 = vmatprep.subr.mxu0 0.0
    %3502 = vmatpush1.msra.mxu0 0.0
    %3503 = vmatprep.subr.mxu0 0.0
    %3504 = vmatpush1.msra.mxu0 0.0
    %3505 = vmatprep.subr.mxu0 0.0
    %3506 = vmatpush1.msra.mxu0 0.0
    %3507 = vmatprep.subr.mxu0 0.0
    %3508 = vmatpush1.msra.mxu0 0.0
    %3509 = vmatprep.subr.mxu0 0.0
    %3510 = vmatpush1.msra.mxu0 0.0
    %3511 = vmatprep.subr.mxu0 0.0
    %3512 = vmatpush1.msra.mxu0 0.0
    %3513 = vmatprep.subr.mxu0 0.0
    %3514 = vmatpush1.msra.mxu0 0.0
    %3515 = vmatprep.subr.mxu0 0.0
    %3516 = vmatpush1.msra.mxu0 0.0
    %3517 = vmatprep.subr.mxu0 0.0
    %3518 = vmatpush1.msra.mxu0 %v2067
    %3519 = vmatprep.subr.mxu0 0.0
    %3520 = vmatpush2.msra.mxu0 0.0
    %3521 = vmatprep.subr.mxu0 0.0
    %3522 = vmatpush2.msra.mxu0 0.0
    %3523 = vmatprep.subr.mxu0 0.0
    %3524 = vmatpush2.msra.mxu0 0.0
    %3525 = vmatprep.subr.mxu0 0.0
    %3526 = vmatpush2.msra.mxu0 0.0
    %3527 = vmatprep.subr.mxu0 0.0
    %3528 = vmatpush2.msra.mxu0 0.0
    %3529 = vmatprep.subr.mxu0 0.0
    %3530 = vmatpush2.msra.mxu0 0.0
    %3531 = vmatprep.subr.mxu0 0.0
    %3532 = vmatpush2.msra.mxu0 0.0
    %3533 = vmatprep.subr.mxu0 0.0
    %3534 = vmatpush2.msra.mxu0 0.0
    %3535 = vmatprep.subr.mxu0 0.0
    %3536 = vmatpush2.msra.mxu0 0.0
    %3537 = vmatprep.subr.mxu0 0.0
    %3538 = vmatpush2.msra.mxu0 0.0
    %3539 = vmatprep.subr.mxu0 0.0
    %3540 = vmatpush2.msra.mxu0 0.0
    %3541 = vmatprep.subr.mxu0 0.0
    %3542 = vmatpush2.msra.mxu0 0.0
    %3543 = vmatprep.subr.mxu0 0.0
    %3544 = vmatpush2.msra.mxu0 0.0
    %3545 = vmatprep.subr.mxu0 0.0
    %3546 = vmatpush2.msra.mxu0 0.0
    %3547 = vmatprep.subr.mxu0 0.0
    %3548 = vmatpush2.msra.mxu0 0.0
    %3549 = vmatprep.subr.mxu0 0.0
    %3550 = vmatpush2.msra.mxu0 0.0
    %3551 = vmatprep.mubr.f32.mxu0 0.0
    %3552 = vmatmul.mubr.f32.gmra.mxu0 %v3482
    %v3553 = vpop.f32.mrf.mxu0
    %v3554 = vadd.f32 0.0, %v3553
    %v3555 = vpop.f32.mrf.mxu0
    %3556 = vmatprep.mubr.f32.mxu0 0.0
    %3557 = vmatmul.mubr.f32.gmra.mxu0 %v3485
    %v3558 = vpop.f32.mrf.mxu0
    %v3559 = vadd.f32 0.0, %v3558
    %v3560 = vpop.f32.mrf.mxu0
    %3561 = vdwg.mxu0
    %v3563 = vsel %vm175, %v2946, 0
    %v3566 = vsel %vm175, %v3022, 0
    %3568 = vmatprep.subr.mxu0 0.0
    %3569 = vmatpush1.msra.mxu0 0.0
    %3570 = vmatprep.subr.mxu0 0.0
    %3571 = vmatpush1.msra.mxu0 0.0
    %3572 = vmatprep.subr.mxu0 0.0
    %3573 = vmatpush1.msra.mxu0 0.0
    %3574 = vmatprep.subr.mxu0 0.0
    %3575 = vmatpush1.msra.mxu0 0.0
    %3576 = vmatprep.subr.mxu0 0.0
    %3577 = vmatpush1.msra.mxu0 0.0
    %3578 = vmatprep.subr.mxu0 0.0
    %3579 = vmatpush1.msra.mxu0 0.0
    %3580 = vmatprep.subr.mxu0 0.0
    %3581 = vmatpush1.msra.mxu0 0.0
    %3582 = vmatprep.subr.mxu0 0.0
    %3583 = vmatpush1.msra.mxu0 0.0
    %3584 = vmatprep.subr.mxu0 0.0
    %3585 = vmatpush1.msra.mxu0 0.0
    %3586 = vmatprep.subr.mxu0 0.0
    %3587 = vmatpush1.msra.mxu0 0.0
    %3588 = vmatprep.subr.mxu0 0.0
    %3589 = vmatpush1.msra.mxu0 0.0
    %3590 = vmatprep.subr.mxu0 0.0
    %3591 = vmatpush1.msra.mxu0 0.0
    %3592 = vmatprep.subr.mxu0 0.0
    %3593 = vmatpush1.msra.mxu0 0.0
    %3594 = vmatprep.subr.mxu0 0.0
    %3595 = vmatpush1.msra.mxu0 0.0
    %3596 = vmatprep.subr.mxu0 0.0
    %3597 = vmatpush1.msra.mxu0 0.0
    %3598 = vmatprep.subr.mxu0 0.0
    %3599 = vmatpush1.msra.mxu0 %v2066
    %3600 = vmatprep.subr.mxu0 0.0
    %3601 = vmatpush2.msra.mxu0 0.0
    %3602 = vmatprep.subr.mxu0 0.0
    %3603 = vmatpush2.msra.mxu0 0.0
    %3604 = vmatprep.subr.mxu0 0.0
    %3605 = vmatpush2.msra.mxu0 0.0
    %3606 = vmatprep.subr.mxu0 0.0
    %3607 = vmatpush2.msra.mxu0 0.0
    %3608 = vmatprep.subr.mxu0 0.0
    %3609 = vmatpush2.msra.mxu0 0.0
    %3610 = vmatprep.subr.mxu0 0.0
    %3611 = vmatpush2.msra.mxu0 0.0
    %3612 = vmatprep.subr.mxu0 0.0
    %3613 = vmatpush2.msra.mxu0 0.0
    %3614 = vmatprep.subr.mxu0 0.0
    %3615 = vmatpush2.msra.mxu0 0.0
    %3616 = vmatprep.subr.mxu0 0.0
    %3617 = vmatpush2.msra.mxu0 0.0
    %3618 = vmatprep.subr.mxu0 0.0
    %3619 = vmatpush2.msra.mxu0 0.0
    %3620 = vmatprep.subr.mxu0 0.0
    %3621 = vmatpush2.msra.mxu0 0.0
    %3622 = vmatprep.subr.mxu0 0.0
    %3623 = vmatpush2.msra.mxu0 0.0
    %3624 = vmatprep.subr.mxu0 0.0
    %3625 = vmatpush2.msra.mxu0 0.0
    %3626 = vmatprep.subr.mxu0 0.0
    %3627 = vmatpush2.msra.mxu0 0.0
    %3628 = vmatprep.subr.mxu0 0.0
    %3629 = vmatpush2.msra.mxu0 0.0
    %3630 = vmatprep.subr.mxu0 0.0
    %3631 = vmatpush2.msra.mxu0 0.0
    %3632 = vmatprep.mubr.f32.mxu0 0.0
    %3633 = vmatmul.mubr.f32.gmra.mxu0 %v3563
    %v3634 = vpop.f32.mrf.mxu0
    %v3635 = vadd.f32 %v3554, %v3634
    %v3636 = vpop.f32.mrf.mxu0
    %3637 = vmatprep.mubr.f32.mxu0 0.0
    %3638 = vmatmul.mubr.f32.gmra.mxu0 %v3566
    %v3639 = vpop.f32.mrf.mxu0
    %v3640 = vadd.f32 %v3559, %v3639
    %v3641 = vpop.f32.mrf.mxu0
    %3642 = vdwg.mxu0
    %v3644 = vsel %vm175, %v3250, 0
    %v3647 = vsel %vm175, %v3326, 0
    %3649 = vmatprep.subr.mxu0 0.0
    %3650 = vmatpush1.msra.mxu0 0.0
    %3651 = vmatprep.subr.mxu0 0.0
    %3652 = vmatpush1.msra.mxu0 0.0
    %3653 = vmatprep.subr.mxu0 0.0
    %3654 = vmatpush1.msra.mxu0 0.0
    %3655 = vmatprep.subr.mxu0 0.0
    %3656 = vmatpush1.msra.mxu0 0.0
    %3657 = vmatprep.subr.mxu0 0.0
    %3658 = vmatpush1.msra.mxu0 0.0
    %3659 = vmatprep.subr.mxu0 0.0
    %3660 = vmatpush1.msra.mxu0 0.0
    %3661 = vmatprep.subr.mxu0 0.0
    %3662 = vmatpush1.msra.mxu0 0.0
    %3663 = vmatprep.subr.mxu0 0.0
    %3664 = vmatpush1.msra.mxu0 0.0
    %3665 = vmatprep.subr.mxu0 0.0
    %3666 = vmatpush1.msra.mxu0 0.0
    %3667 = vmatprep.subr.mxu0 0.0
    %3668 = vmatpush1.msra.mxu0 0.0
    %3669 = vmatprep.subr.mxu0 0.0
    %3670 = vmatpush1.msra.mxu0 0.0
    %3671 = vmatprep.subr.mxu0 0.0
    %3672 = vmatpush1.msra.mxu0 0.0
    %3673 = vmatprep.subr.mxu0 0.0
    %3674 = vmatpush1.msra.mxu0 0.0
    %3675 = vmatprep.subr.mxu0 0.0
    %3676 = vmatpush1.msra.mxu0 0.0
    %3677 = vmatprep.subr.mxu0 0.0
    %3678 = vmatpush1.msra.mxu0 0.0
    %3679 = vmatprep.subr.mxu0 0.0
    %3680 = vmatpush1.msra.mxu0 %v2068
    %3681 = vmatprep.subr.mxu0 0.0
    %3682 = vmatpush2.msra.mxu0 0.0
    %3683 = vmatprep.subr.mxu0 0.0
    %3684 = vmatpush2.msra.mxu0 0.0
    %3685 = vmatprep.subr.mxu0 0.0
    %3686 = vmatpush2.msra.mxu0 0.0
    %3687 = vmatprep.subr.mxu0 0.0
    %3688 = vmatpush2.msra.mxu0 0.0
    %3689 = vmatprep.subr.mxu0 0.0
    %3690 = vmatpush2.msra.mxu0 0.0
    %3691 = vmatprep.subr.mxu0 0.0
    %3692 = vmatpush2.msra.mxu0 0.0
    %3693 = vmatprep.subr.mxu0 0.0
    %3694 = vmatpush2.msra.mxu0 0.0
    %3695 = vmatprep.subr.mxu0 0.0
    %3696 = vmatpush2.msra.mxu0 0.0
    %3697 = vmatprep.subr.mxu0 0.0
    %3698 = vmatpush2.msra.mxu0 0.0
    %3699 = vmatprep.subr.mxu0 0.0
    %3700 = vmatpush2.msra.mxu0 0.0
    %3701 = vmatprep.subr.mxu0 0.0
    %3702 = vmatpush2.msra.mxu0 0.0
    %3703 = vmatprep.subr.mxu0 0.0
    %3704 = vmatpush2.msra.mxu0 0.0
    %3705 = vmatprep.subr.mxu0 0.0
    %3706 = vmatpush2.msra.mxu0 0.0
    %3707 = vmatprep.subr.mxu0 0.0
    %3708 = vmatpush2.msra.mxu0 0.0
    %3709 = vmatprep.subr.mxu0 0.0
    %3710 = vmatpush2.msra.mxu0 0.0
    %3711 = vmatprep.subr.mxu0 0.0
    %3712 = vmatpush2.msra.mxu0 0.0
    %3713 = vmatprep.mubr.f32.mxu0 0.0
    %3714 = vmatmul.mubr.f32.gmra.mxu0 %v3644
    %v3715 = vpop.f32.mrf.mxu0
    %v3716 = vadd.f32 0.0, %v3715
    %v3717 = vpop.f32.mrf.mxu0
    %3718 = vmatprep.mubr.f32.mxu0 0.0
    %3719 = vmatmul.mubr.f32.gmra.mxu0 %v3647
    %v3720 = vpop.f32.mrf.mxu0
    %v3721 = vadd.f32 0.0, %v3720
    %v3722 = vpop.f32.mrf.mxu0
    %3723 = vdwg.mxu0
    %v3724 = vadd.f32 %v3635, %v3716
    %v3725 = vadd.f32 %v3640, %v3721
    %v3727 = vsel %vm175, %v3402, 0
    %v3730 = vsel %vm175, %v3478, 0
    %3732 = vmatprep.subr.mxu0 0.0
    %3733 = vmatpush1.msra.mxu0 0.0
    %3734 = vmatprep.subr.mxu0 0.0
    %3735 = vmatpush1.msra.mxu0 0.0
    %3736 = vmatprep.subr.mxu0 0.0
    %3737 = vmatpush1.msra.mxu0 0.0
    %3738 = vmatprep.subr.mxu0 0.0
    %3739 = vmatpush1.msra.mxu0 0.0
    %3740 = vmatprep.subr.mxu0 0.0
    %3741 = vmatpush1.msra.mxu0 0.0
    %3742 = vmatprep.subr.mxu0 0.0
    %3743 = vmatpush1.msra.mxu0 0.0
    %3744 = vmatprep.subr.mxu0 0.0
    %3745 = vmatpush1.msra.mxu0 0.0
    %3746 = vmatprep.subr.mxu0 0.0
    %3747 = vmatpush1.msra.mxu0 0.0
    %3748 = vmatprep.subr.mxu0 0.0
    %3749 = vmatpush1.msra.mxu0 0.0
    %3750 = vmatprep.subr.mxu0 0.0
    %3751 = vmatpush1.msra.mxu0 0.0
    %3752 = vmatprep.subr.mxu0 0.0
    %3753 = vmatpush1.msra.mxu0 0.0
    %3754 = vmatprep.subr.mxu0 0.0
    %3755 = vmatpush1.msra.mxu0 0.0
    %3756 = vmatprep.subr.mxu0 0.0
    %3757 = vmatpush1.msra.mxu0 0.0
    %3758 = vmatprep.subr.mxu0 0.0
    %3759 = vmatpush1.msra.mxu0 0.0
    %3760 = vmatprep.subr.mxu0 0.0
    %3761 = vmatpush1.msra.mxu0 0.0
    %3762 = vmatprep.subr.mxu0 0.0
    %3763 = vmatpush1.msra.mxu0 %v2069
    %3764 = vmatprep.subr.mxu0 0.0
    %3765 = vmatpush2.msra.mxu0 0.0
    %3766 = vmatprep.subr.mxu0 0.0
    %3767 = vmatpush2.msra.mxu0 0.0
    %3768 = vmatprep.subr.mxu0 0.0
    %3769 = vmatpush2.msra.mxu0 0.0
    %3770 = vmatprep.subr.mxu0 0.0
    %3771 = vmatpush2.msra.mxu0 0.0
    %3772 = vmatprep.subr.mxu0 0.0
    %3773 = vmatpush2.msra.mxu0 0.0
    %3774 = vmatprep.subr.mxu0 0.0
    %3775 = vmatpush2.msra.mxu0 0.0
    %3776 = vmatprep.subr.mxu0 0.0
    %3777 = vmatpush2.msra.mxu0 0.0
    %3778 = vmatprep.subr.mxu0 0.0
    %3779 = vmatpush2.msra.mxu0 0.0
    %3780 = vmatprep.subr.mxu0 0.0
    %3781 = vmatpush2.msra.mxu0 0.0
    %3782 = vmatprep.subr.mxu0 0.0
    %3783 = vmatpush2.msra.mxu0 0.0
    %3784 = vmatprep.subr.mxu0 0.0
    %3785 = vmatpush2.msra.mxu0 0.0
    %3786 = vmatprep.subr.mxu0 0.0
    %3787 = vmatpush2.msra.mxu0 0.0
    %3788 = vmatprep.subr.mxu0 0.0
    %3789 = vmatpush2.msra.mxu0 0.0
    %3790 = vmatprep.subr.mxu0 0.0
    %3791 = vmatpush2.msra.mxu0 0.0
    %3792 = vmatprep.subr.mxu0 0.0
    %3793 = vmatpush2.msra.mxu0 0.0
    %3794 = vmatprep.subr.mxu0 0.0
    %3795 = vmatpush2.msra.mxu0 0.0
    %3796 = vmatprep.mubr.f32.mxu0 0.0
    %3797 = vmatmul.mubr.f32.gmra.mxu0 %v3727
    %v3798 = vpop.f32.mrf.mxu0
    %v3799 = vadd.f32 0.0, %v3798
    %v3800 = vpop.f32.mrf.mxu0
    %3801 = vmatprep.mubr.f32.mxu0 0.0
    %3802 = vmatmul.mubr.f32.gmra.mxu0 %v3730
    %v3803 = vpop.f32.mrf.mxu0
    %v3804 = vadd.f32 0.0, %v3803
    %v3805 = vpop.f32.mrf.mxu0
    %3806 = vdwg.mxu0
    %v3807 = vadd.f32 %v3724, %v3799
    %v3808 = vadd.f32 %v3725, %v3804
    %v3809 = vadd.f32 %v3807, %v2060
    %v3810 = vadd.f32 %v3808, %v2061
    %v3811 = vsel %vm77, %v3809, 0.0
    %3812 = vadd.xlane.f32.xlu0 %v3811
    %v3813 = vpop.xlane.xlu0 %3812
    %v3814 = vsel %vm77, %v3810, 0.0
    %3815 = vadd.xlane.f32.xlu0 %v3814
    %v3816 = vpop.xlane.xlu0 %3815
    %v3817 = vmul.f32 %v3813, %v1814
    %v3818 = vmul.f32 %v3816, %v1814
    %v3819 = vmul.f32 %v3809, %v3809
    %v3820 = vmul.f32 %v3810, %v3810
    %v3821 = vsel %vm77, %v3819, 0.0
    %3822 = vadd.xlane.f32.xlu0 %v3821
    %v3823 = vpop.xlane.xlu0 %3822
    %v3824 = vsel %vm77, %v3820, 0.0
    %3825 = vadd.xlane.f32.xlu0 %v3824
    %v3826 = vpop.xlane.xlu0 %3825
    %v3827 = vmul.f32 %v3823, %v1814
    %v3828 = vmul.f32 %v3826, %v1814
    %v3829 = vmul.f32 %v3817, %v3817
    %v3830 = vmul.f32 %v3818, %v3818
    %v3831 = vsub.f32 %v3827, %v3829
    %v3832 = vsub.f32 %v3828, %v3830
    %v3833 = vmax.f32 %v3831, 0.0
    %v3834 = vmax.f32 %v3832, 0.0
    %v3835 = vsub.f32 %v3809, %v3817
    %v3836 = vsub.f32 %v3810, %v3818
    %v3837 = vadd.f32 %v3833, 1e-06
    %v3838 = vadd.f32 %v3834, 1e-06
    %v3839 = vrsqrt.pop %v3837
    %v3840 = vrsqrt.pop %v3838
    %v3841 = vmul.f32 %v3835, %v3839
    %v3842 = vmul.f32 %v3836, %v3840
    %v3843 = vlaneseq
    %v3844 = vshrl.u32 %v3843, 7
    %v3845 = vsub.s32 4, %v3844
    %v3846 = vrot.slane %v56, %v3845
    %v3847 = vmul.f32 %v3841, %v3846
    %v3848 = vmul.f32 %v3842, %v3846
    %v3849 = vlaneseq
    %v3850 = vshrl.u32 %v3849, 7
    %v3851 = vsub.s32 5, %v3850
    %v3852 = vrot.slane %v56, %v3851
    %v3853 = vadd.f32 %v3847, %v3852
    %v3854 = vadd.f32 %v3848, %v3852
    %v3856 = vsel %vm77, %v3853, 0
    %v3859 = vsel %vm77, %v3854, 0
    %3861 = vmatprep.subr.mxu0 0.0
    %3862 = vmatpush1.msra.mxu0 0.0
    %3863 = vmatprep.subr.mxu0 0.0
    %3864 = vmatpush1.msra.mxu0 0.0
    %3865 = vmatprep.subr.mxu0 0.0
    %3866 = vmatpush1.msra.mxu0 0.0
    %3867 = vmatprep.subr.mxu0 0.0
    %3868 = vmatpush1.msra.mxu0 0.0
    %3869 = vmatprep.subr.mxu0 0.0
    %3870 = vmatpush1.msra.mxu0 0.0
    %3871 = vmatprep.subr.mxu0 0.0
    %3872 = vmatpush1.msra.mxu0 0.0
    %3873 = vmatprep.subr.mxu0 0.0
    %3874 = vmatpush1.msra.mxu0 0.0
    %3875 = vmatprep.subr.mxu0 0.0
    %3876 = vmatpush1.msra.mxu0 0.0
    %3877 = vmatprep.subr.mxu0 0.0
    %3878 = vmatpush1.msra.mxu0 0.0
    %3879 = vmatprep.subr.mxu0 0.0
    %3880 = vmatpush1.msra.mxu0 0.0
    %3881 = vmatprep.subr.mxu0 0.0
    %3882 = vmatpush1.msra.mxu0 0.0
    %3883 = vmatprep.subr.mxu0 0.0
    %3884 = vmatpush1.msra.mxu0 0.0
    %3885 = vmatprep.subr.mxu0 0.0
    %3886 = vmatpush1.msra.mxu0 %v2073
    %3887 = vmatprep.subr.mxu0 0.0
    %3888 = vmatpush1.msra.mxu0 %v2072
    %3889 = vmatprep.subr.mxu0 0.0
    %3890 = vmatpush1.msra.mxu0 %v2071
    %3891 = vmatprep.subr.mxu0 0.0
    %3892 = vmatpush1.msra.mxu0 %v2070
    %3893 = vmatprep.subr.mxu0 0.0
    %3894 = vmatpush2.msra.mxu0 0.0
    %3895 = vmatprep.subr.mxu0 0.0
    %3896 = vmatpush2.msra.mxu0 0.0
    %3897 = vmatprep.subr.mxu0 0.0
    %3898 = vmatpush2.msra.mxu0 0.0
    %3899 = vmatprep.subr.mxu0 0.0
    %3900 = vmatpush2.msra.mxu0 0.0
    %3901 = vmatprep.subr.mxu0 0.0
    %3902 = vmatpush2.msra.mxu0 0.0
    %3903 = vmatprep.subr.mxu0 0.0
    %3904 = vmatpush2.msra.mxu0 0.0
    %3905 = vmatprep.subr.mxu0 0.0
    %3906 = vmatpush2.msra.mxu0 0.0
    %3907 = vmatprep.subr.mxu0 0.0
    %3908 = vmatpush2.msra.mxu0 0.0
    %3909 = vmatprep.subr.mxu0 0.0
    %3910 = vmatpush2.msra.mxu0 0.0
    %3911 = vmatprep.subr.mxu0 0.0
    %3912 = vmatpush2.msra.mxu0 0.0
    %3913 = vmatprep.subr.mxu0 0.0
    %3914 = vmatpush2.msra.mxu0 0.0
    %3915 = vmatprep.subr.mxu0 0.0
    %3916 = vmatpush2.msra.mxu0 0.0
    %3917 = vmatprep.subr.mxu0 0.0
    %3918 = vmatpush2.msra.mxu0 0.0
    %3919 = vmatprep.subr.mxu0 0.0
    %3920 = vmatpush2.msra.mxu0 0.0
    %3921 = vmatprep.subr.mxu0 0.0
    %3922 = vmatpush2.msra.mxu0 0.0
    %3923 = vmatprep.subr.mxu0 0.0
    %3924 = vmatpush2.msra.mxu0 0.0
    %3925 = vmatprep.mubr.f32.mxu0 0.0
    %3926 = vmatmul.mubr.f32.gmra.mxu0 %v3856
    %v3927 = vpop.f32.mrf.mxu0
    %v3928 = vadd.f32 0.0, %v3927
    %v3929 = vpop.f32.mrf.mxu0
    %3930 = vmatprep.mubr.f32.mxu0 0.0
    %3931 = vmatmul.mubr.f32.gmra.mxu0 %v3859
    %v3932 = vpop.f32.mrf.mxu0
    %v3933 = vadd.f32 0.0, %v3932
    %v3934 = vpop.f32.mrf.mxu0
    %3935 = vdwg.mxu0
    %v3936 = vtanh.pop %v3928
    %v3937 = vtanh.pop %v3933
    %v3939 = vsel %vm1936, %v3936, 0
    %v3942 = vsel %vm1936, %v3937, 0
    %3944 = vmatprep.subr.mxu0 0.0
    %3945 = vmatpush1.msra.mxu0 0.0
    %3946 = vmatprep.subr.mxu0 0.0
    %3947 = vmatpush1.msra.mxu0 0.0
    %3948 = vmatprep.subr.mxu0 0.0
    %3949 = vmatpush1.msra.mxu0 0.0
    %3950 = vmatprep.subr.mxu0 0.0
    %3951 = vmatpush1.msra.mxu0 0.0
    %3952 = vmatprep.subr.mxu0 0.0
    %3953 = vmatpush1.msra.mxu0 0.0
    %3954 = vmatprep.subr.mxu0 0.0
    %3955 = vmatpush1.msra.mxu0 0.0
    %3956 = vmatprep.subr.mxu0 0.0
    %3957 = vmatpush1.msra.mxu0 0.0
    %3958 = vmatprep.subr.mxu0 0.0
    %3959 = vmatpush1.msra.mxu0 0.0
    %3960 = vmatprep.subr.mxu0 0.0
    %3961 = vmatpush1.msra.mxu0 %v2081
    %3962 = vmatprep.subr.mxu0 0.0
    %3963 = vmatpush1.msra.mxu0 %v2080
    %3964 = vmatprep.subr.mxu0 0.0
    %3965 = vmatpush1.msra.mxu0 %v2079
    %3966 = vmatprep.subr.mxu0 0.0
    %3967 = vmatpush1.msra.mxu0 %v2078
    %3968 = vmatprep.subr.mxu0 0.0
    %3969 = vmatpush1.msra.mxu0 %v2077
    %3970 = vmatprep.subr.mxu0 0.0
    %3971 = vmatpush1.msra.mxu0 %v2076
    %3972 = vmatprep.subr.mxu0 0.0
    %3973 = vmatpush1.msra.mxu0 %v2075
    %3974 = vmatprep.subr.mxu0 0.0
    %3975 = vmatpush1.msra.mxu0 %v2074
    %3976 = vmatprep.subr.mxu0 0.0
    %3977 = vmatpush2.msra.mxu0 0.0
    %3978 = vmatprep.subr.mxu0 0.0
    %3979 = vmatpush2.msra.mxu0 0.0
    %3980 = vmatprep.subr.mxu0 0.0
    %3981 = vmatpush2.msra.mxu0 0.0
    %3982 = vmatprep.subr.mxu0 0.0
    %3983 = vmatpush2.msra.mxu0 0.0
    %3984 = vmatprep.subr.mxu0 0.0
    %3985 = vmatpush2.msra.mxu0 0.0
    %3986 = vmatprep.subr.mxu0 0.0
    %3987 = vmatpush2.msra.mxu0 0.0
    %3988 = vmatprep.subr.mxu0 0.0
    %3989 = vmatpush2.msra.mxu0 0.0
    %3990 = vmatprep.subr.mxu0 0.0
    %3991 = vmatpush2.msra.mxu0 0.0
    %3992 = vmatprep.subr.mxu0 0.0
    %3993 = vmatpush2.msra.mxu0 0.0
    %3994 = vmatprep.subr.mxu0 0.0
    %3995 = vmatpush2.msra.mxu0 0.0
    %3996 = vmatprep.subr.mxu0 0.0
    %3997 = vmatpush2.msra.mxu0 0.0
    %3998 = vmatprep.subr.mxu0 0.0
    %3999 = vmatpush2.msra.mxu0 0.0
    %4000 = vmatprep.subr.mxu0 0.0
    %4001 = vmatpush2.msra.mxu0 0.0
    %4002 = vmatprep.subr.mxu0 0.0
    %4003 = vmatpush2.msra.mxu0 0.0
    %4004 = vmatprep.subr.mxu0 0.0
    %4005 = vmatpush2.msra.mxu0 0.0
    %4006 = vmatprep.subr.mxu0 0.0
    %4007 = vmatpush2.msra.mxu0 0.0
    %4008 = vmatprep.mubr.f32.mxu0 0.0
    %4009 = vmatmul.mubr.f32.gmra.mxu0 %v3939
    %v4010 = vpop.f32.mrf.mxu0
    %v4011 = vadd.f32 %v3853, %v4010
    %v4012 = vpop.f32.mrf.mxu0
    %4013 = vmatprep.mubr.f32.mxu0 0.0
    %4014 = vmatmul.mubr.f32.gmra.mxu0 %v3942
    %v4015 = vpop.f32.mrf.mxu0
    %v4016 = vadd.f32 %v3854, %v4015
    %v4017 = vpop.f32.mrf.mxu0
    %4018 = vdwg.mxu0
    %v4019 = vsel %vm77, %v4011, 0.0
    %4020 = vadd.xlane.f32.xlu0 %v4019
    %v4021 = vpop.xlane.xlu0 %4020
    %v4022 = vsel %vm77, %v4016, 0.0
    %4023 = vadd.xlane.f32.xlu0 %v4022
    %v4024 = vpop.xlane.xlu0 %4023
    %v4025 = vmul.f32 %v4021, %v1814
    %v4026 = vmul.f32 %v4024, %v1814
    %v4027 = vmul.f32 %v4011, %v4011
    %v4028 = vmul.f32 %v4016, %v4016
    %v4029 = vsel %vm77, %v4027, 0.0
    %4030 = vadd.xlane.f32.xlu0 %v4029
    %v4031 = vpop.xlane.xlu0 %4030
    %v4032 = vsel %vm77, %v4028, 0.0
    %4033 = vadd.xlane.f32.xlu0 %v4032
    %v4034 = vpop.xlane.xlu0 %4033
    %v4035 = vmul.f32 %v4031, %v1814
    %v4036 = vmul.f32 %v4034, %v1814
    %v4037 = vmul.f32 %v4025, %v4025
    %v4038 = vmul.f32 %v4026, %v4026
    %v4039 = vsub.f32 %v4035, %v4037
    %v4040 = vsub.f32 %v4036, %v4038
    %v4041 = vmax.f32 %v4039, 0.0
    %v4042 = vmax.f32 %v4040, 0.0
    %v4043 = vsub.f32 %v4011, %v4025
    %v4044 = vsub.f32 %v4016, %v4026
    %v4045 = vadd.f32 %v4041, 1e-06
    %v4046 = vadd.f32 %v4042, 1e-06
    %v4047 = vrsqrt.pop %v4045
    %v4048 = vrsqrt.pop %v4046
    %v4049 = vmul.f32 %v4043, %v4047
    %v4050 = vmul.f32 %v4044, %v4048
    %v4051 = vlaneseq
    %v4052 = vshrl.u32 %v4051, 7
    %v4053 = vsub.s32 6, %v4052
    %v4054 = vrot.slane %v56, %v4053
    %v4055 = vmul.f32 %v4049, %v4054
    %v4056 = vmul.f32 %v4050, %v4054
    %v4057 = vlaneseq
    %v4058 = vshrl.u32 %v4057, 7
    %v4059 = vsub.s32 7, %v4058
    %v4060 = vrot.slane %v56, %v4059
    %v4061 = vadd.f32 %v4055, %v4060
    %v4062 = vadd.f32 %v4056, %v4060
    %4063 = vst.msk [vmem:[#allocation8] sm:$0xff] %vm77, %v4061
    %4064 = vst.msk [vmem:[#allocation8 + $0x8] sm:$0xff] %vm77, %v4062
    // Predicated region
    $region26: #{tpu_custom_call.1} parent=1 // pred_check
      _
    $region27: #{tpu_custom_call.1} parent=1 // pred_check_branch
      %4066 = sbr.rel (0) target = $region29
    $region28: #{tpu_custom_call.1} parent=1 // pred_region
      %s4068 = ssub.s32 256, 256
      %4069 = vsyncadd [#allocation4], %s4068
      %s4070 = sshll.u32 [#allocation8], 4
      %s4071 = int_to_ptr.vmem [resolvable:$true] %s4070
      %4076 = dma.vmem_to_hbm [thread:$0]  %s4071, 256, %s3, [#allocation4], 128, 128, 8
    $region29: #{tpu_custom_call.1} parent=1 // pred_fallthru
      _
    // Predicated region
    $region30: #{tpu_custom_call.1} parent=1 // pred_check
      _
    $region31: #{tpu_custom_call.1} parent=1 // pred_check_branch
      %4078 = sbr.rel (0) target = $region33
    $region32: #{tpu_custom_call.1} parent=1 // pred_region
      %4079 = dma.done [#allocation4], 256
    $region33: #{tpu_custom_call.1} parent=1 // pred_fallthru
      _
    %4080 = vsyncpa [#allocation3], 1
    %4081 = vsyncpa [#allocation6], 1
    %4082 = vsyncpa [#allocation4], 1

</llo_original>
